<compile_context>
chip_gen: v6e
topology: v6e:2x2x1
jax: 0.10.0
libtpu: 0.0.40
codegen_flags: <defaults>
</compile_context>

<pallas_src>
import functools

import jax
import jax.numpy as jnp
from jax.experimental import pallas as pl
from jax.experimental.pallas import tpu as pltpu


def _forward_kernel(nhid, block_dims, x_ref, w_ref, b_ref, wf_ref, bf_ref, out_ref):
    """Feature-major residual sin-MLP forward for one batch tile.

    x_ref  : (d0, tile_m)      raw input features, batch on lanes
    w_ref  : (2*nhid, H, H)    stacked hidden weights, (out, in) layout, zero-padded
    b_ref  : (2*nhid, H, 1)    stacked hidden biases (column vectors)
    wf_ref : (F8, H)           final weight, (out, in) layout, zero-padded
    bf_ref : (F8, 1)           final bias
    out_ref: (F8, tile_m)      lane-dense output slab
    """
    d0, tm = x_ref.shape
    H = w_ref.shape[-1]

    x = x_ref[...]
    if H > d0:
        # Zero-extend features d0 -> H inside VMEM (padded rows stay zero:
        # packed weights/biases are zero there and sin(0) == 0 -> bit-exact).
        x = jnp.concatenate([x, jnp.zeros((H - d0, tm), jnp.float32)], axis=0)

    # Sublane-index iota, hoisted out of the layer loop; only materialized if
    # some residual actually shrinks the width (d_in > d_out).
    need_mask = any(d_in > d_out for d_in, d_out in block_dims)
    row = jax.lax.broadcasted_iota(jnp.int32, (H, 1), 0) if need_mask else None

    for i in range(nhid):
        wa = w_ref[2 * i]
        ba = b_ref[2 * i]
        wb = w_ref[2 * i + 1]
        bb = b_ref[2 * i + 1]

        h = jnp.sin(jnp.dot(wa, x, preferred_element_type=jnp.float32) + ba)
        h = jnp.sin(jnp.dot(wb, h, preferred_element_type=jnp.float32) + bb)

        # Residual (x @ eye(d_in, d_out))^T == keep the first min(d_in, d_out)
        # feature rows of x; for non-decreasing widths it is just x.
        d_in, d_out = block_dims[i]
        res = x if d_in <= d_out else jnp.where(row < d_out, x, 0.0)
        x = h + res

    out_ref[...] = (
        jnp.dot(wf_ref[...], x, preferred_element_type=jnp.float32) + bf_ref[...]
    )


def make_params(layers, key):
    """Deterministic init mimicking torch.nn.Linear (uniform +-1/sqrt(fan_in)).

    Returns a flat list [W1a, b1a, W1b, b1b, ..., Wf, bf] with W in
    (in_features, out_features) layout and b as (1, out_features).
    """
    nhid = len(layers) - 2
    params = []

    def linear(key, fan_in, fan_out):
        kw, kb = jax.random.split(key)
        bound = 1.0 / jnp.sqrt(jnp.asarray(fan_in, jnp.float32))
        W = jax.random.uniform(kw, (fan_in, fan_out), jnp.float32, -bound, bound)
        b = jax.random.uniform(kb, (1, fan_out), jnp.float32, -bound, bound)
        return W, b

    keys = jax.random.split(key, 2 * nhid + 1)
    k = 0
    for i in range(nhid):
        W, b = linear(keys[k], layers[i], layers[i + 1]); k += 1
        params += [W, b]
        W, b = linear(keys[k], layers[i + 1], layers[i + 1]); k += 1
        params += [W, b]
    W, b = linear(keys[k], layers[-2], layers[-1])
    params += [W, b]
    return params


def _pack_params(params, layers):
    """Zero-pad every hidden layer to (H, H) in (out, in) layout and stack;
    pad the final layer to an 8-row (F8, H). Zero padding keeps numerics
    bit-identical (sin(0) = 0 keeps padded rows zero)."""
    nhid = len(layers) - 2
    H = int(max(layers[:-1]))
    F8 = max(8, ((int(layers[-1]) + 7) // 8) * 8)

    w_stack, b_stack = [], []
    idx = 0
    for i in range(nhid):
        for fan_in, fan_out in ((layers[i], layers[i + 1]),
                                (layers[i + 1], layers[i + 1])):
            W, b = params[idx], params[idx + 1]
            idx += 2
            w_stack.append(
                jnp.zeros((H, H), jnp.float32).at[:fan_out, :fan_in].set(W.T))
            b_stack.append(
                jnp.zeros((H, 1), jnp.float32).at[:fan_out, :].set(b.reshape(-1, 1)))
    Wf, bf = params[idx], params[idx + 1]
    f_in, f_out = layers[-2], layers[-1]
    wf_p = jnp.zeros((F8, H), jnp.float32).at[:f_out, :f_in].set(Wf.T)
    bf_p = jnp.zeros((F8, 1), jnp.float32).at[:f_out, :].set(bf.reshape(-1, 1))
    return jnp.stack(w_stack), jnp.stack(b_stack), wf_p, bf_p, H, F8


def net_forward(x, params, layers, *, tile_m=None, vmem_budget_bytes=32 << 20):
    N, d0 = x.shape
    assert d0 == layers[0]
    nhid = len(layers) - 2
    d_out = layers[-1]

    w_hid, b_hid, wf_p, bf_p, H, F8 = _pack_params(params, layers)
    param_bytes = 4 * (w_hid.size + b_hid.size + wf_p.size + bf_p.size)

    def vmem_estimate(tm):
        stream = 2 * (d0 + F8) * tm * 4            # double-buffered x / out tiles
        acts = (2 * nhid + 4) * H * tm * 4         # activation temporaries
        return 2 * param_bytes + stream + acts

    if tile_m is None:
        # Params are resident; only x (d0 rows) and out (F8 rows) are streamed,
        # so large tiles are cheap: fewer ~0.35us grid steps, longer MXU runs,
        # better DMA amortization. Lane axis => multiple of 128.
        tile_m = min(2048, max(128, pl.next_power_of_2(N)))
    else:
        tile_m = max(128, ((int(tile_m) + 127) // 128) * 128)
    while tile_m > 128 and vmem_estimate(tile_m) > vmem_budget_bytes:
        tile_m //= 2

    n_pad = ((N + tile_m - 1) // tile_m) * tile_m

    # Feature-major input: (d0, N); zero-pad only the batch axis to a tile
    # multiple (no H-wide padded copy of x in HBM).
    x_t = x.astype(jnp.float32).T
    if n_pad != N:
        x_t = jnp.zeros((d0, n_pad), jnp.float32).at[:, :N].set(x_t)

    block_dims = tuple((layers[i], layers[i + 1]) for i in range(nhid))
    kernel = functools.partial(_forward_kernel, nhid, block_dims)

    in_specs = [
        pl.BlockSpec((d0, tile_m), lambda i: (0, i)),     # streamed batch tile
        pl.BlockSpec(w_hid.shape, lambda i: (0, 0, 0)),   # resident hidden weights
        pl.BlockSpec(b_hid.shape, lambda i: (0, 0, 0)),   # resident hidden biases
        pl.BlockSpec(wf_p.shape, lambda i: (0, 0)),       # resident final weight
        pl.BlockSpec(bf_p.shape, lambda i: (0, 0)),       # resident final bias
    ]
    out_spec = pl.BlockSpec((F8, tile_m), lambda i: (0, i))

    vmem_limit = int(min(vmem_budget_bytes, max(8 << 20, 4 * vmem_estimate(tile_m))))

    out_t = pl.pallas_call(
        kernel,
        out_shape=jax.ShapeDtypeStruct((F8, n_pad), jnp.float32),
        grid_spec=pltpu.PrefetchScalarGridSpec(
            num_scalar_prefetch=0,
            grid=(n_pad // tile_m,),
            in_specs=in_specs,
            out_specs=out_spec,
        ),
        compiler_params=pltpu.CompilerParams(
            dimension_semantics=("parallel",),
            vmem_limit_bytes=vmem_limit,
        ),
    )(x_t, w_hid, b_hid, wf_p, bf_p)

    # Lane-dense (F8, n_pad) slab from the kernel; slice + transpose outside.
    return out_t[:d_out, :N].T


def net_forward_ref(x, params, layers):
    """Pure-JAX reference (unpadded, row-major params) for sanity checking."""
    nhid = len(layers) - 2
    idx = 0
    for i in range(nhid):
        Wa, ba, Wb, bb = params[idx], params[idx + 1], params[idx + 2], params[idx + 3]
        idx += 4
        h = jnp.sin(x @ Wa + ba)
        h = jnp.sin(h @ Wb + bb)
        eye = jnp.eye(x.shape[-1], layers[i + 1], dtype=x.dtype)
        x = h + x @ eye
    Wf, bf = params[idx], params[idx + 1]
    return x @ Wf + bf


if __name__ == "__main__":
    # Small Kolmogorov-flow-style net: inputs (x, y, t, nu) -> (u, v, p)
    layers = [4, 32, 32, 3]
    N = 256

    key = jax.random.PRNGKey(0)
    kx, kp = jax.random.split(key)
    x = jax.random.normal(kx, (N, layers[0]), jnp.float32)
    params = make_params(layers, kp)

    out = net_forward(x, params, layers)
    out = jax.block_until_ready(out)

    ref = net_forward_ref(x, params, layers)
    assert out.shape == (N, layers[-1])
    assert jnp.allclose(out, ref, atol=1e-5, rtol=1e-5), "mismatch vs reference"

    print("KERNEL_OK")
</pallas_src>

<mosaic_0001>
module attributes {stable_mosaic.version = 11 : i64} {
  func.func @_forward_kernel(%arg0: i32, %arg1: memref<4x256xf32, #tpu.memory_space<vmem>>, %arg2: memref<4x32x32xf32, #tpu.memory_space<vmem>>, %arg3: memref<4x32x1xf32, #tpu.memory_space<vmem>>, %arg4: memref<8x32xf32, #tpu.memory_space<vmem>>, %arg5: memref<8x1xf32, #tpu.memory_space<vmem>>, %arg6: memref<8x256xf32, #tpu.memory_space<vmem>>) attributes {dimension_semantics = [#tpu.dimension_semantics<parallel>], iteration_bounds = array<i64: 1>, scalar_prefetch = 0 : i64, scratch_operands = 0 : i64, tpu.core_type = #tpu.core_type<tc>, window_params = [{transform_indices = @transform_0, window_bounds = array<i64: 4, 256>}, {pipeline_mode = #tpu.pipeline_mode<synchronous>, transform_indices = @transform_1, window_bounds = array<i64: 4, 32, 32>}, {pipeline_mode = #tpu.pipeline_mode<synchronous>, transform_indices = @transform_2, window_bounds = array<i64: 4, 32, 1>}, {pipeline_mode = #tpu.pipeline_mode<synchronous>, transform_indices = @transform_3, window_bounds = array<i64: 8, 32>}, {pipeline_mode = #tpu.pipeline_mode<synchronous>, transform_indices = @transform_4, window_bounds = array<i64: 8, 1>}, {transform_indices = @transform_5, window_bounds = array<i64: 8, 256>}]} {
    %c0 = arith.constant 0 : index
    %c0_0 = arith.constant 0 : index
    %0 = vector.load %arg1[%c0, %c0_0] : memref<4x256xf32, #tpu.memory_space<vmem>>, vector<4x256xf32>
    %cst = arith.constant 0.000000e+00 : f32
    %1 = vector.broadcast %cst : f32 to vector<28x256xf32>
    %2 = tpu.concatenate %0, %1 in 0 : vector<4x256xf32>, vector<28x256xf32> -> vector<32x256xf32>
    %c0_1 = arith.constant 0 : index
    %c0_2 = arith.constant 0 : index
    %c0_3 = arith.constant 0 : index
    %3 = vector.load %arg2[%c0_1, %c0_2, %c0_3] : memref<4x32x32xf32, #tpu.memory_space<vmem>>, vector<1x32x32xf32>
    %4 = vector.shape_cast %3 : vector<1x32x32xf32> to vector<32x32xf32>
    %c0_4 = arith.constant 0 : index
    %c0_5 = arith.constant 0 : index
    %c0_6 = arith.constant 0 : index
    %5 = vector.load %arg3[%c0_4, %c0_5, %c0_6] : memref<4x32x1xf32, #tpu.memory_space<vmem>>, vector<1x32x1xf32>
    %6 = vector.shape_cast %5 : vector<1x32x1xf32> to vector<32x1xf32>
    %c1 = arith.constant 1 : index
    %c0_7 = arith.constant 0 : index
    %c0_8 = arith.constant 0 : index
    %7 = vector.load %arg2[%c1, %c0_7, %c0_8] : memref<4x32x32xf32, #tpu.memory_space<vmem>>, vector<1x32x32xf32>
    %8 = vector.shape_cast %7 : vector<1x32x32xf32> to vector<32x32xf32>
    %c1_9 = arith.constant 1 : index
    %c0_10 = arith.constant 0 : index
    %c0_11 = arith.constant 0 : index
    %9 = vector.load %arg3[%c1_9, %c0_10, %c0_11] : memref<4x32x1xf32, #tpu.memory_space<vmem>>, vector<1x32x1xf32>
    %10 = vector.shape_cast %9 : vector<1x32x1xf32> to vector<32x1xf32>
    %cst_12 = arith.constant dense<0.000000e+00> : vector<32x256xf32>
    %11 = tpu.matmul %4, %2, %cst_12 {dimension_numbers = #tpu.dot_dimension_numbers<[1], [0], [0], [1], [0, 0, 1, 1], [], []>} : vector<32x32xf32>, vector<32x256xf32>, vector<32x256xf32> -> vector<32x256xf32>
    %12 = vector.broadcast %6 : vector<32x1xf32> to vector<32x256xf32>
    %13 = arith.addf %11, %12 : vector<32x256xf32>
    %14 = math.sin %13 : vector<32x256xf32>
    %cst_13 = arith.constant dense<0.000000e+00> : vector<32x256xf32>
    %15 = tpu.matmul %8, %14, %cst_13 {dimension_numbers = #tpu.dot_dimension_numbers<[1], [0], [0], [1], [0, 0, 1, 1], [], []>} : vector<32x32xf32>, vector<32x256xf32>, vector<32x256xf32> -> vector<32x256xf32>
    %16 = vector.broadcast %10 : vector<32x1xf32> to vector<32x256xf32>
    %17 = arith.addf %15, %16 : vector<32x256xf32>
    %18 = math.sin %17 : vector<32x256xf32>
    %19 = arith.addf %18, %2 : vector<32x256xf32>
    %c2 = arith.constant 2 : index
    %c0_14 = arith.constant 0 : index
    %c0_15 = arith.constant 0 : index
    %20 = vector.load %arg2[%c2, %c0_14, %c0_15] : memref<4x32x32xf32, #tpu.memory_space<vmem>>, vector<1x32x32xf32>
    %21 = vector.shape_cast %20 : vector<1x32x32xf32> to vector<32x32xf32>
    %c2_16 = arith.constant 2 : index
    %c0_17 = arith.constant 0 : index
    %c0_18 = arith.constant 0 : index
    %22 = vector.load %arg3[%c2_16, %c0_17, %c0_18] : memref<4x32x1xf32, #tpu.memory_space<vmem>>, vector<1x32x1xf32>
    %23 = vector.shape_cast %22 : vector<1x32x1xf32> to vector<32x1xf32>
    %c3 = arith.constant 3 : index
    %c0_19 = arith.constant 0 : index
    %c0_20 = arith.constant 0 : index
    %24 = vector.load %arg2[%c3, %c0_19, %c0_20] : memref<4x32x32xf32, #tpu.memory_space<vmem>>, vector<1x32x32xf32>
    %25 = vector.shape_cast %24 : vector<1x32x32xf32> to vector<32x32xf32>
    %c3_21 = arith.constant 3 : index
    %c0_22 = arith.constant 0 : index
    %c0_23 = arith.constant 0 : index
    %26 = vector.load %arg3[%c3_21, %c0_22, %c0_23] : memref<4x32x1xf32, #tpu.memory_space<vmem>>, vector<1x32x1xf32>
    %27 = vector.shape_cast %26 : vector<1x32x1xf32> to vector<32x1xf32>
    %cst_24 = arith.constant dense<0.000000e+00> : vector<32x256xf32>
    %28 = tpu.matmul %21, %19, %cst_24 {dimension_numbers = #tpu.dot_dimension_numbers<[1], [0], [0], [1], [0, 0, 1, 1], [], []>} : vector<32x32xf32>, vector<32x256xf32>, vector<32x256xf32> -> vector<32x256xf32>
    %29 = vector.broadcast %23 : vector<32x1xf32> to vector<32x256xf32>
    %30 = arith.addf %28, %29 : vector<32x256xf32>
    %31 = math.sin %30 : vector<32x256xf32>
    %cst_25 = arith.constant dense<0.000000e+00> : vector<32x256xf32>
    %32 = tpu.matmul %25, %31, %cst_25 {dimension_numbers = #tpu.dot_dimension_numbers<[1], [0], [0], [1], [0, 0, 1, 1], [], []>} : vector<32x32xf32>, vector<32x256xf32>, vector<32x256xf32> -> vector<32x256xf32>
    %33 = vector.broadcast %27 : vector<32x1xf32> to vector<32x256xf32>
    %34 = arith.addf %32, %33 : vector<32x256xf32>
    %35 = math.sin %34 : vector<32x256xf32>
    %36 = arith.addf %35, %19 : vector<32x256xf32>
    %c0_26 = arith.constant 0 : index
    %c0_27 = arith.constant 0 : index
    %37 = vector.load %arg4[%c0_26, %c0_27] : memref<8x32xf32, #tpu.memory_space<vmem>>, vector<8x32xf32>
    %cst_28 = arith.constant dense<0.000000e+00> : vector<8x256xf32>
    %38 = tpu.matmul %37, %36, %cst_28 {dimension_numbers = #tpu.dot_dimension_numbers<[1], [0], [0], [1], [0, 0, 1, 1], [], []>} : vector<8x32xf32>, vector<32x256xf32>, vector<8x256xf32> -> vector<8x256xf32>
    %c0_29 = arith.constant 0 : index
    %c0_30 = arith.constant 0 : index
    %39 = vector.load %arg5[%c0_29, %c0_30] : memref<8x1xf32, #tpu.memory_space<vmem>>, vector<8x1xf32>
    %40 = vector.broadcast %39 : vector<8x1xf32> to vector<8x256xf32>
    %41 = arith.addf %38, %40 : vector<8x256xf32>
    %c0_31 = arith.constant 0 : index
    %c0_32 = arith.constant 0 : index
    %42 = vector.load %arg6[%c0_31, %c0_32] : memref<8x256xf32, #tpu.memory_space<vmem>>, vector<8x256xf32>
    tpu.vector_store %arg6[%c0_31, %c0_32], %41 {strides = array<i32>} : memref<8x256xf32, #tpu.memory_space<vmem>>, vector<8x256xf32>,
    return
  }
  func.func @transform_0(%arg0: i32) -> (i32, i32) {
    %c0_i32 = arith.constant 0 : i32
    %c0_i32_0 = arith.constant 0 : i32
    return %c0_i32, %arg0 : i32, i32
  }
  func.func @transform_1(%arg0: i32) -> (i32, i32, i32) {
    %c0_i32 = arith.constant 0 : i32
    %c0_i32_0 = arith.constant 0 : i32
    %c0_i32_1 = arith.constant 0 : i32
    %c0_i32_2 = arith.constant 0 : i32
    return %c0_i32, %c0_i32_0, %c0_i32_1 : i32, i32, i32
  }
  func.func @transform_2(%arg0: i32) -> (i32, i32, i32) {
    %c0_i32 = arith.constant 0 : i32
    %c0_i32_0 = arith.constant 0 : i32
    %c0_i32_1 = arith.constant 0 : i32
    %c0_i32_2 = arith.constant 0 : i32
    return %c0_i32, %c0_i32_0, %c0_i32_1 : i32, i32, i32
  }
  func.func @transform_3(%arg0: i32) -> (i32, i32) {
    %c0_i32 = arith.constant 0 : i32
    %c0_i32_0 = arith.constant 0 : i32
    %c0_i32_1 = arith.constant 0 : i32
    return %c0_i32, %c0_i32_0 : i32, i32
  }
  func.func @transform_4(%arg0: i32) -> (i32, i32) {
    %c0_i32 = arith.constant 0 : i32
    %c0_i32_0 = arith.constant 0 : i32
    %c0_i32_1 = arith.constant 0 : i32
    return %c0_i32, %c0_i32_0 : i32, i32
  }
  func.func @transform_5(%arg0: i32) -> (i32, i32) {
    %c0_i32 = arith.constant 0 : i32
    %c0_i32_0 = arith.constant 0 : i32
    return %c0_i32, %arg0 : i32, i32
  }
}

</mosaic_0001>

<llo_original>
// kernel: tpu_custom_call.1
$region0: #{tpu_custom_call.1}
  #allocation0 [shape = 'u32[]', space=smem, size = 0x4, offset = 0x4, fixed_abs, tag = 'smem constant byte address 0x4 - core index']
  #allocation1 [shape = 'u32[144,128]{1,0:T(1,128)}', space=vmem, size = 0x12000, scoped, tag = 'internal scratch']
  %s0 = inlined_call_operand.vmem [shape: f32[4,256], index: 0, kind: input, shape index: {}]
  %s1 = inlined_call_operand.vmem [shape: f32[4,32,32], index: 1, kind: input, shape index: {}]
  %s2 = inlined_call_operand.vmem [shape: f32[4,32,1], index: 2, kind: input, shape index: {}]
  %s3 = inlined_call_operand.vmem [shape: f32[8,32], index: 3, kind: input, shape index: {}]
  %s4 = inlined_call_operand.vmem [shape: f32[8,1], index: 4, kind: input, shape index: {}]
  %s5 = inlined_call_operand.hbm [shape: f32[8,256], index: 5, kind: output, shape index: {}]
  %s6 = sld [smem:[#allocation0]]
  $region30: #{tpu_custom_call.1} parent=0
    _
  %s8 = ssub.s32 1, %s6
  %s9 = scalar_select 0, %s8, %s6
  $region1: #{tpu_custom_call.1} parent=0
    #allocation2 [shape = 'u8[8192]{0}', space=vmem, size = 0x2000, scoped, tag = 'output window, operand 0, single buffered']
    #allocation3 [shape = 's32[1]{0}', space=sflag, size = 0x4, scoped, tag = 'scoped memory for tpu_custom_call.1']
    %10 = vsyncpa [#allocation3], 0
    // Predicated region
    $region2: #{tpu_custom_call.1} parent=1 // pred_check
      _
    $region3: #{tpu_custom_call.1} parent=1 // pred_check_branch
      %12 = sbr.rel (0) target = $region5
    $region4: #{tpu_custom_call.1} parent=1 // pred_region
      _
    $region5: #{tpu_custom_call.1} parent=1 // pred_fallthru
      _
    // Predicated region
    $region6: #{tpu_custom_call.1} parent=1 // pred_check
      _
    $region7: #{tpu_custom_call.1} parent=1 // pred_check_branch
      %14 = sbr.rel (0) target = $region9
    $region8: #{tpu_custom_call.1} parent=1 // pred_region
      _
    $region9: #{tpu_custom_call.1} parent=1 // pred_fallthru
      _
    // Predicated region
    $region10: #{tpu_custom_call.1} parent=1 // pred_check
      _
    $region11: #{tpu_custom_call.1} parent=1 // pred_check_branch
      %16 = sbr.rel (0) target = $region13
    $region12: #{tpu_custom_call.1} parent=1 // pred_region
      _
    $region13: #{tpu_custom_call.1} parent=1 // pred_fallthru
      _
    // Predicated region
    $region14: #{tpu_custom_call.1} parent=1 // pred_check
      _
    $region15: #{tpu_custom_call.1} parent=1 // pred_check_branch
      %18 = sbr.rel (0) target = $region17
    $region16: #{tpu_custom_call.1} parent=1 // pred_region
      _
    $region17: #{tpu_custom_call.1} parent=1 // pred_fallthru
      _
    // Predicated region
    $region18: #{tpu_custom_call.1} parent=1 // pred_check
      _
    $region19: #{tpu_custom_call.1} parent=1 // pred_check_branch
      %20 = sbr.rel (0) target = $region21
    $region20: #{tpu_custom_call.1} parent=1 // pred_region
      _
    $region21: #{tpu_custom_call.1} parent=1 // pred_fallthru
      _
    %v21 = vld [vmem:[%s0] sm:$0xff]
    %v23 = vcombine.high %v21, %v21
    %vm25 = vcmask 1043456
    %v26 = vsel %vm25, %v21, 0.0
    %v27 = vsel %vm25, %v23, 0.0
    %v28 = vld [vmem:[%s1] sm:$0xff]
    %v29 = vld [vmem:[%s1 + $0x8] sm:$0xff]
    %v30 = vld [vmem:[%s1 + $0x10] sm:$0xff]
    %v31 = vld [vmem:[%s1 + $0x18] sm:$0xff]
    %v32 = vld [vmem:[%s2] sm:$0xff]
    %v33 = vld [vmem:[%s2 + $0x8] sm:$0xff]
    %v34 = vld [vmem:[%s2 + $0x10] sm:$0xff]
    %v35 = vld [vmem:[%s2 + $0x18] sm:$0xff]
    %s36 = scalar_lea.vmem %s1, 32
    %v37 = vld [vmem:[%s36] sm:$0xff]
    %v38 = vld [vmem:[%s36 + $0x8] sm:$0xff]
    %v39 = vld [vmem:[%s36 + $0x10] sm:$0xff]
    %v40 = vld [vmem:[%s36 + $0x18] sm:$0xff]
    %s41 = scalar_lea.vmem %s2, 32
    %v42 = vld [vmem:[%s41] sm:$0xff]
    %v43 = vld [vmem:[%s41 + $0x8] sm:$0xff]
    %v44 = vld [vmem:[%s41 + $0x10] sm:$0xff]
    %v45 = vld [vmem:[%s41 + $0x18] sm:$0xff]
    %47 = vset.pattern.permute.xlu0 0
    %48 = vperm.xlu0 %47, %v32
    %v49 = vpop.permute.xlu0 %48
    %52 = vset.pattern.permute.xlu0 0
    %53 = vperm.xlu0 %52, %v33
    %v54 = vpop.permute.xlu0 %53
    %57 = vset.pattern.permute.xlu0 0
    %58 = vperm.xlu0 %57, %v34
    %v59 = vpop.permute.xlu0 %58
    %62 = vset.pattern.permute.xlu0 0
    %63 = vperm.xlu0 %62, %v35
    %v64 = vpop.permute.xlu0 %63
    %vm66 = vcmask 261120
    %v68 = vsel %vm66, %v28, 0
    %v71 = vsel %vm66, %v29, 0
    %v74 = vsel %vm66, %v30, 0
    %v77 = vsel %vm66, %v31, 0
    %79 = vmatprep.subr.mxu0 0.0
    %80 = vmatpush1.msra.mxu0 0.0
    %81 = vmatprep.subr.mxu0 0.0
    %82 = vmatpush1.msra.mxu0 0.0
    %83 = vmatprep.subr.mxu0 0.0
    %84 = vmatpush1.msra.mxu0 0.0
    %85 = vmatprep.subr.mxu0 0.0
    %86 = vmatpush1.msra.mxu0 0.0
    %87 = vmatprep.subr.mxu0 0.0
    %88 = vmatpush1.msra.mxu0 0.0
    %89 = vmatprep.subr.mxu0 0.0
    %90 = vmatpush1.msra.mxu0 0.0
    %91 = vmatprep.subr.mxu0 0.0
    %92 = vmatpush1.msra.mxu0 0.0
    %93 = vmatprep.subr.mxu0 0.0
    %94 = vmatpush1.msra.mxu0 0.0
    %95 = vmatprep.subr.mxu0 0.0
    %96 = vmatpush1.msra.mxu0 0.0
    %97 = vmatprep.subr.mxu0 0.0
    %98 = vmatpush1.msra.mxu0 0.0
    %99 = vmatprep.subr.mxu0 0.0
    %100 = vmatpush1.msra.mxu0 0.0
    %101 = vmatprep.subr.mxu0 0.0
    %102 = vmatpush1.msra.mxu0 0.0
    %103 = vmatprep.subr.mxu0 0.0
    %104 = vmatpush1.msra.mxu0 0.0
    %105 = vmatprep.subr.mxu0 0.0
    %106 = vmatpush1.msra.mxu0 0.0
    %107 = vmatprep.subr.mxu0 0.0
    %108 = vmatpush1.msra.mxu0 0.0
    %109 = vmatprep.subr.mxu0 %v27
    %110 = vmatpush1.msra.mxu0 %v26
    %111 = vmatprep.subr.mxu0 0.0
    %112 = vmatpush2.msra.mxu0 0.0
    %113 = vmatprep.subr.mxu0 0.0
    %114 = vmatpush2.msra.mxu0 0.0
    %115 = vmatprep.subr.mxu0 0.0
    %116 = vmatpush2.msra.mxu0 0.0
    %117 = vmatprep.subr.mxu0 0.0
    %118 = vmatpush2.msra.mxu0 0.0
    %119 = vmatprep.subr.mxu0 0.0
    %120 = vmatpush2.msra.mxu0 0.0
    %121 = vmatprep.subr.mxu0 0.0
    %122 = vmatpush2.msra.mxu0 0.0
    %123 = vmatprep.subr.mxu0 0.0
    %124 = vmatpush2.msra.mxu0 0.0
    %125 = vmatprep.subr.mxu0 0.0
    %126 = vmatpush2.msra.mxu0 0.0
    %127 = vmatprep.subr.mxu0 0.0
    %128 = vmatpush2.msra.mxu0 0.0
    %129 = vmatprep.subr.mxu0 0.0
    %130 = vmatpush2.msra.mxu0 0.0
    %131 = vmatprep.subr.mxu0 0.0
    %132 = vmatpush2.msra.mxu0 0.0
    %133 = vmatprep.subr.mxu0 0.0
    %134 = vmatpush2.msra.mxu0 0.0
    %135 = vmatprep.subr.mxu0 0.0
    %136 = vmatpush2.msra.mxu0 0.0
    %137 = vmatprep.subr.mxu0 0.0
    %138 = vmatpush2.msra.mxu0 0.0
    %139 = vmatprep.subr.mxu0 0.0
    %140 = vmatpush2.msra.mxu0 0.0
    %141 = vmatprep.subr.mxu0 0.0
    %142 = vmatpush2.msra.mxu0 0.0
    %143 = vmatprep.mubr.f32.mxu0 0.0
    %144 = vmatmul.mubr.f32.gmra.mxu0 %v68
    %v145 = vpop.f32.mrf.mxu0
    %v146 = vadd.f32 %v49, %v145
    %v147 = vpop.f32.mrf.mxu0
    %v148 = vadd.f32 %v49, %v147
    %149 = vmatprep.mubr.f32.mxu0 0.0
    %150 = vmatmul.mubr.f32.gmra.mxu0 %v71
    %v151 = vpop.f32.mrf.mxu0
    %v152 = vadd.f32 %v54, %v151
    %v153 = vpop.f32.mrf.mxu0
    %v154 = vadd.f32 %v54, %v153
    %155 = vmatprep.mubr.f32.mxu0 0.0
    %156 = vmatmul.mubr.f32.gmra.mxu0 %v74
    %v157 = vpop.f32.mrf.mxu0
    %v158 = vadd.f32 %v59, %v157
    %v159 = vpop.f32.mrf.mxu0
    %v160 = vadd.f32 %v59, %v159
    %161 = vmatprep.mubr.f32.mxu0 0.0
    %162 = vmatmul.mubr.f32.gmra.mxu0 %v77
    %v163 = vpop.f32.mrf.mxu0
    %v164 = vadd.f32 %v64, %v163
    %v165 = vpop.f32.mrf.mxu0
    %v166 = vadd.f32 %v64, %v165
    %167 = vdwg.mxu0
    %v168 = vand.u32 2147483647, %v146
    %vm169 = vcmp.le.f32.partialorder %v168, 0.7853982
    %vm170 = vcmp.lt.s32.totalorder %v146, 0
    %v171 = vand.u32 %v146, 2139095040
    %v172 = vshrl.u32 %v171, 23
    %v173 = vsub.s32 %v172, 127
    %v174 = vand.u32 2147483647, %v146
    %v175 = vand.u32 %v174, 8388607
    %v176 = vor.u32 %v175, 8388608
    %v177 = vsub.s32 0, %v176
    %v178 = vadd.s32 %v173, 1
    %vm179 = vcmp.gt.s32.totalorder %v178, 0
    %v180 = vsel %vm179, %v178, 0
    %v181 = vshrl.u32 %v180, 5
    %v182 = vand.u32 %v180, 31
    %v183 = vsub.s32 32, %v182
    %v184 = vshrl.u32 683565275, %v183
    %v185 = vshll.u32 683565275, %v182
    %v186 = vshrl.u32 2475754826, %v183
    %v187 = vor.u32 %v185, %v186
    %v188 = vshll.u32 2475754826, %v182
    %v189 = vshrl.u32 2131351028, %v183
    %v190 = vor.u32 %v188, %v189
    %v191 = vshll.u32 2131351028, %v182
    %v192 = vshrl.u32 2102212464, %v183
    %v193 = vor.u32 %v191, %v192
    %v194 = vshll.u32 2102212464, %v182
    %v195 = vshrl.u32 920167782, %v183
    %v196 = vor.u32 %v194, %v195
    %v197 = vshll.u32 920167782, %v182
    %v198 = vshrl.u32 1326507024, %v183
    %v199 = vor.u32 %v197, %v198
    %vm200 = vcmp.lt.s32.totalorder %v181, 1
    %vm201 = vcmp.lt.s32.totalorder %v181, 2
    %vm202 = vcmp.lt.s32.totalorder %v181, 3
    %vm203 = vcmp.lt.s32.totalorder %v181, 4
    %v204 = vsel %vm200, %v184, %v187
    %v205 = vsel %vm203, %v193, 2102212464
    %v206 = vsel %vm202, %v190, %v205
    %v207 = vsel %vm201, %v204, %v206
    %v208 = vsel %vm200, %v187, %v190
    %v209 = vsel %vm203, %v196, 920167782
    %v210 = vsel %vm202, %v193, %v209
    %v211 = vsel %vm201, %v208, %v210
    %v212 = vsel %vm200, %v190, %v193
    %v213 = vsel %vm203, %v199, 1326507024
    %v214 = vsel %vm202, %v196, %v213
    %v215 = vsel %vm201, %v212, %v214
    %v216 = vshll.u32 %v176, 8
    %v217 = vmul.u32.u64.compose %v216, %v215
    %v218 = vextract.low.u32 %v217
    %v219 = vextract.high.u32 %v217
    %v220 = vmul.u32.u64.compose %v216, %v211
    %v221 = vextract.low.u32 %v220
    %v222 = vextract.high.u32 %v220
    %v223 = vmul.u32 %v216, %v207
    %v224 = vadd.s32 %v219, %v221
    %vm225 = vc.u32 %v219, %v221
    %v226 = vadd.s32 %v222, 1
    %v227 = vsel %vm225, %v226, %v222
    %v228 = vadd.s32 %v223, %v227
    %v229 = vadd.s32 %v228, 536870912
    %v230 = vshrl.u32 %v229, 30
    %v231 = vshll.u32 %v230, 30
    %v232 = vsub.s32 %v228, %v231
    %vm233 = vcmp.lt.s32.totalorder %v232, 0
    %v234 = vsub.s32 0, %v232
    %v235 = vsel %vm233, %v234, %v232
    %v236 = vclz %v235
    %v237 = vsub.s32 %v236, 2
    %vm238 = vcmp.gt.s32.totalorder 0, %v237
    %v239 = vsel %vm238, 0, %v237
    %v240 = vsub.s32 32, %v239
    %v241 = vshll.u32 %v232, %v239
    %v242 = vshrl.u32 %v224, %v240
    %v243 = vor.u32 %v241, %v242
    %v244 = vsub.s32 4294967266, %v239
    %v245 = vadd.s32 %v244, 127
    %v246 = vshll.u32 %v245, 23
    %v247 = vor.u32 4788187, %v246
    %v248 = vand.u32 2147483647, %v247
    %v250 = vcvt.s32.f32 %v243
    %v251 = vmul.f32 %v250, %v248
    %v252 = vxor.u32 %v251, 2147483648
    %v253 = vsel %vm170, %v252, %v251
    %v254 = vsub.s32 4, %v230
    %v255 = vsel %vm170, %v254, %v230
    %v256 = vsel %vm169, %v146, %v253
    %v257 = vsel %vm169, 0, %v255
    %v258 = vcosq.f32.pop %v256
    %v259 = vsinq.f32.pop %v256
    %vm260 = vweird.f32 %v146
    %v261 = vadd.s32 %v257, 3
    %v262 = vand.u32 %v261, 3
    %vm263 = vcmp.lt.s32.totalorder %v262, 2
    %vm264 = vcmp.eq.s32.totalorder %v262, 0
    %v265 = vxor.u32 %v259, 2147483648
    %v266 = vsel %vm264, %v258, %v265
    %vm267 = vcmp.eq.s32.totalorder %v262, 2
    %v268 = vxor.u32 %v258, 2147483648
    %v269 = vsel %vm267, %v268, %v259
    %v270 = vsel %vm263, %v266, %v269
    %v271 = vsel %vm260, nan, %v270
    %v272 = vand.u32 2147483647, %v148
    %vm273 = vcmp.le.f32.partialorder %v272, 0.7853982
    %vm274 = vcmp.lt.s32.totalorder %v148, 0
    %v275 = vand.u32 %v148, 2139095040
    %v276 = vshrl.u32 %v275, 23
    %v277 = vsub.s32 %v276, 127
    %v278 = vand.u32 2147483647, %v148
    %v279 = vand.u32 %v278, 8388607
    %v280 = vor.u32 %v279, 8388608
    %v281 = vsub.s32 0, %v280
    %v282 = vadd.s32 %v277, 1
    %vm283 = vcmp.gt.s32.totalorder %v282, 0
    %v284 = vsel %vm283, %v282, 0
    %v285 = vshrl.u32 %v284, 5
    %v286 = vand.u32 %v284, 31
    %v287 = vsub.s32 32, %v286
    %v288 = vshrl.u32 683565275, %v287
    %v289 = vshll.u32 683565275, %v286
    %v290 = vshrl.u32 2475754826, %v287
    %v291 = vor.u32 %v289, %v290
    %v292 = vshll.u32 2475754826, %v286
    %v293 = vshrl.u32 2131351028, %v287
    %v294 = vor.u32 %v292, %v293
    %v295 = vshll.u32 2131351028, %v286
    %v296 = vshrl.u32 2102212464, %v287
    %v297 = vor.u32 %v295, %v296
    %v298 = vshll.u32 2102212464, %v286
    %v299 = vshrl.u32 920167782, %v287
    %v300 = vor.u32 %v298, %v299
    %v301 = vshll.u32 920167782, %v286
    %v302 = vshrl.u32 1326507024, %v287
    %v303 = vor.u32 %v301, %v302
    %vm304 = vcmp.lt.s32.totalorder %v285, 1
    %vm305 = vcmp.lt.s32.totalorder %v285, 2
    %vm306 = vcmp.lt.s32.totalorder %v285, 3
    %vm307 = vcmp.lt.s32.totalorder %v285, 4
    %v308 = vsel %vm304, %v288, %v291
    %v309 = vsel %vm307, %v297, 2102212464
    %v310 = vsel %vm306, %v294, %v309
    %v311 = vsel %vm305, %v308, %v310
    %v312 = vsel %vm304, %v291, %v294
    %v313 = vsel %vm307, %v300, 920167782
    %v314 = vsel %vm306, %v297, %v313
    %v315 = vsel %vm305, %v312, %v314
    %v316 = vsel %vm304, %v294, %v297
    %v317 = vsel %vm307, %v303, 1326507024
    %v318 = vsel %vm306, %v300, %v317
    %v319 = vsel %vm305, %v316, %v318
    %v320 = vshll.u32 %v280, 8
    %v321 = vmul.u32.u64.compose %v320, %v319
    %v322 = vextract.low.u32 %v321
    %v323 = vextract.high.u32 %v321
    %v324 = vmul.u32.u64.compose %v320, %v315
    %v325 = vextract.low.u32 %v324
    %v326 = vextract.high.u32 %v324
    %v327 = vmul.u32 %v320, %v311
    %v328 = vadd.s32 %v323, %v325
    %vm329 = vc.u32 %v323, %v325
    %v330 = vadd.s32 %v326, 1
    %v331 = vsel %vm329, %v330, %v326
    %v332 = vadd.s32 %v327, %v331
    %v333 = vadd.s32 %v332, 536870912
    %v334 = vshrl.u32 %v333, 30
    %v335 = vshll.u32 %v334, 30
    %v336 = vsub.s32 %v332, %v335
    %vm337 = vcmp.lt.s32.totalorder %v336, 0
    %v338 = vsub.s32 0, %v336
    %v339 = vsel %vm337, %v338, %v336
    %v340 = vclz %v339
    %v341 = vsub.s32 %v340, 2
    %vm342 = vcmp.gt.s32.totalorder 0, %v341
    %v343 = vsel %vm342, 0, %v341
    %v344 = vsub.s32 32, %v343
    %v345 = vshll.u32 %v336, %v343
    %v346 = vshrl.u32 %v328, %v344
    %v347 = vor.u32 %v345, %v346
    %v348 = vsub.s32 4294967266, %v343
    %v349 = vadd.s32 %v348, 127
    %v350 = vshll.u32 %v349, 23
    %v351 = vor.u32 4788187, %v350
    %v352 = vand.u32 2147483647, %v351
    %v354 = vcvt.s32.f32 %v347
    %v355 = vmul.f32 %v354, %v352
    %v356 = vxor.u32 %v355, 2147483648
    %v357 = vsel %vm274, %v356, %v355
    %v358 = vsub.s32 4, %v334
    %v359 = vsel %vm274, %v358, %v334
    %v360 = vsel %vm273, %v148, %v357
    %v361 = vsel %vm273, 0, %v359
    %v362 = vcosq.f32.pop %v360
    %v363 = vsinq.f32.pop %v360
    %vm364 = vweird.f32 %v148
    %v365 = vadd.s32 %v361, 3
    %v366 = vand.u32 %v365, 3
    %vm367 = vcmp.lt.s32.totalorder %v366, 2
    %vm368 = vcmp.eq.s32.totalorder %v366, 0
    %v369 = vxor.u32 %v363, 2147483648
    %v370 = vsel %vm368, %v362, %v369
    %vm371 = vcmp.eq.s32.totalorder %v366, 2
    %v372 = vxor.u32 %v362, 2147483648
    %v373 = vsel %vm371, %v372, %v363
    %v374 = vsel %vm367, %v370, %v373
    %v375 = vsel %vm364, nan, %v374
    %v376 = vand.u32 2147483647, %v152
    %vm377 = vcmp.le.f32.partialorder %v376, 0.7853982
    %vm378 = vcmp.lt.s32.totalorder %v152, 0
    %v379 = vand.u32 %v152, 2139095040
    %v380 = vshrl.u32 %v379, 23
    %v381 = vsub.s32 %v380, 127
    %v382 = vand.u32 2147483647, %v152
    %v383 = vand.u32 %v382, 8388607
    %v384 = vor.u32 %v383, 8388608
    %v385 = vsub.s32 0, %v384
    %v386 = vadd.s32 %v381, 1
    %vm387 = vcmp.gt.s32.totalorder %v386, 0
    %v388 = vsel %vm387, %v386, 0
    %v389 = vshrl.u32 %v388, 5
    %v390 = vand.u32 %v388, 31
    %v391 = vsub.s32 32, %v390
    %v392 = vshrl.u32 683565275, %v391
    %v393 = vshll.u32 683565275, %v390
    %v394 = vshrl.u32 2475754826, %v391
    %v395 = vor.u32 %v393, %v394
    %v396 = vshll.u32 2475754826, %v390
    %v397 = vshrl.u32 2131351028, %v391
    %v398 = vor.u32 %v396, %v397
    %v399 = vshll.u32 2131351028, %v390
    %v400 = vshrl.u32 2102212464, %v391
    %v401 = vor.u32 %v399, %v400
    %v402 = vshll.u32 2102212464, %v390
    %v403 = vshrl.u32 920167782, %v391
    %v404 = vor.u32 %v402, %v403
    %v405 = vshll.u32 920167782, %v390
    %v406 = vshrl.u32 1326507024, %v391
    %v407 = vor.u32 %v405, %v406
    %vm408 = vcmp.lt.s32.totalorder %v389, 1
    %vm409 = vcmp.lt.s32.totalorder %v389, 2
    %vm410 = vcmp.lt.s32.totalorder %v389, 3
    %vm411 = vcmp.lt.s32.totalorder %v389, 4
    %v412 = vsel %vm408, %v392, %v395
    %v413 = vsel %vm411, %v401, 2102212464
    %v414 = vsel %vm410, %v398, %v413
    %v415 = vsel %vm409, %v412, %v414
    %v416 = vsel %vm408, %v395, %v398
    %v417 = vsel %vm411, %v404, 920167782
    %v418 = vsel %vm410, %v401, %v417
    %v419 = vsel %vm409, %v416, %v418
    %v420 = vsel %vm408, %v398, %v401
    %v421 = vsel %vm411, %v407, 1326507024
    %v422 = vsel %vm410, %v404, %v421
    %v423 = vsel %vm409, %v420, %v422
    %v424 = vshll.u32 %v384, 8
    %v425 = vmul.u32.u64.compose %v424, %v423
    %v426 = vextract.low.u32 %v425
    %v427 = vextract.high.u32 %v425
    %v428 = vmul.u32.u64.compose %v424, %v419
    %v429 = vextract.low.u32 %v428
    %v430 = vextract.high.u32 %v428
    %v431 = vmul.u32 %v424, %v415
    %v432 = vadd.s32 %v427, %v429
    %vm433 = vc.u32 %v427, %v429
    %v434 = vadd.s32 %v430, 1
    %v435 = vsel %vm433, %v434, %v430
    %v436 = vadd.s32 %v431, %v435
    %v437 = vadd.s32 %v436, 536870912
    %v438 = vshrl.u32 %v437, 30
    %v439 = vshll.u32 %v438, 30
    %v440 = vsub.s32 %v436, %v439
    %vm441 = vcmp.lt.s32.totalorder %v440, 0
    %v442 = vsub.s32 0, %v440
    %v443 = vsel %vm441, %v442, %v440
    %v444 = vclz %v443
    %v445 = vsub.s32 %v444, 2
    %vm446 = vcmp.gt.s32.totalorder 0, %v445
    %v447 = vsel %vm446, 0, %v445
    %v448 = vsub.s32 32, %v447
    %v449 = vshll.u32 %v440, %v447
    %v450 = vshrl.u32 %v432, %v448
    %v451 = vor.u32 %v449, %v450
    %v452 = vsub.s32 4294967266, %v447
    %v453 = vadd.s32 %v452, 127
    %v454 = vshll.u32 %v453, 23
    %v455 = vor.u32 4788187, %v454
    %v456 = vand.u32 2147483647, %v455
    %v458 = vcvt.s32.f32 %v451
    %v459 = vmul.f32 %v458, %v456
    %v460 = vxor.u32 %v459, 2147483648
    %v461 = vsel %vm378, %v460, %v459
    %v462 = vsub.s32 4, %v438
    %v463 = vsel %vm378, %v462, %v438
    %v464 = vsel %vm377, %v152, %v461
    %v465 = vsel %vm377, 0, %v463
    %v466 = vcosq.f32.pop %v464
    %v467 = vsinq.f32.pop %v464
    %vm468 = vweird.f32 %v152
    %v469 = vadd.s32 %v465, 3
    %v470 = vand.u32 %v469, 3
    %vm471 = vcmp.lt.s32.totalorder %v470, 2
    %vm472 = vcmp.eq.s32.totalorder %v470, 0
    %v473 = vxor.u32 %v467, 2147483648
    %v474 = vsel %vm472, %v466, %v473
    %vm475 = vcmp.eq.s32.totalorder %v470, 2
    %v476 = vxor.u32 %v466, 2147483648
    %v477 = vsel %vm475, %v476, %v467
    %v478 = vsel %vm471, %v474, %v477
    %v479 = vsel %vm468, nan, %v478
    %v480 = vand.u32 2147483647, %v154
    %vm481 = vcmp.le.f32.partialorder %v480, 0.7853982
    %vm482 = vcmp.lt.s32.totalorder %v154, 0
    %v483 = vand.u32 %v154, 2139095040
    %v484 = vshrl.u32 %v483, 23
    %v485 = vsub.s32 %v484, 127
    %v486 = vand.u32 2147483647, %v154
    %v487 = vand.u32 %v486, 8388607
    %v488 = vor.u32 %v487, 8388608
    %v489 = vsub.s32 0, %v488
    %v490 = vadd.s32 %v485, 1
    %vm491 = vcmp.gt.s32.totalorder %v490, 0
    %v492 = vsel %vm491, %v490, 0
    %v493 = vshrl.u32 %v492, 5
    %v494 = vand.u32 %v492, 31
    %v495 = vsub.s32 32, %v494
    %v496 = vshrl.u32 683565275, %v495
    %v497 = vshll.u32 683565275, %v494
    %v498 = vshrl.u32 2475754826, %v495
    %v499 = vor.u32 %v497, %v498
    %v500 = vshll.u32 2475754826, %v494
    %v501 = vshrl.u32 2131351028, %v495
    %v502 = vor.u32 %v500, %v501
    %v503 = vshll.u32 2131351028, %v494
    %v504 = vshrl.u32 2102212464, %v495
    %v505 = vor.u32 %v503, %v504
    %v506 = vshll.u32 2102212464, %v494
    %v507 = vshrl.u32 920167782, %v495
    %v508 = vor.u32 %v506, %v507
    %v509 = vshll.u32 920167782, %v494
    %v510 = vshrl.u32 1326507024, %v495
    %v511 = vor.u32 %v509, %v510
    %vm512 = vcmp.lt.s32.totalorder %v493, 1
    %vm513 = vcmp.lt.s32.totalorder %v493, 2
    %vm514 = vcmp.lt.s32.totalorder %v493, 3
    %vm515 = vcmp.lt.s32.totalorder %v493, 4
    %v516 = vsel %vm512, %v496, %v499
    %v517 = vsel %vm515, %v505, 2102212464
    %v518 = vsel %vm514, %v502, %v517
    %v519 = vsel %vm513, %v516, %v518
    %v520 = vsel %vm512, %v499, %v502
    %v521 = vsel %vm515, %v508, 920167782
    %v522 = vsel %vm514, %v505, %v521
    %v523 = vsel %vm513, %v520, %v522
    %v524 = vsel %vm512, %v502, %v505
    %v525 = vsel %vm515, %v511, 1326507024
    %v526 = vsel %vm514, %v508, %v525
    %v527 = vsel %vm513, %v524, %v526
    %v528 = vshll.u32 %v488, 8
    %v529 = vmul.u32.u64.compose %v528, %v527
    %v530 = vextract.low.u32 %v529
    %v531 = vextract.high.u32 %v529
    %v532 = vmul.u32.u64.compose %v528, %v523
    %v533 = vextract.low.u32 %v532
    %v534 = vextract.high.u32 %v532
    %v535 = vmul.u32 %v528, %v519
    %v536 = vadd.s32 %v531, %v533
    %vm537 = vc.u32 %v531, %v533
    %v538 = vadd.s32 %v534, 1
    %v539 = vsel %vm537, %v538, %v534
    %v540 = vadd.s32 %v535, %v539
    %v541 = vadd.s32 %v540, 536870912
    %v542 = vshrl.u32 %v541, 30
    %v543 = vshll.u32 %v542, 30
    %v544 = vsub.s32 %v540, %v543
    %vm545 = vcmp.lt.s32.totalorder %v544, 0
    %v546 = vsub.s32 0, %v544
    %v547 = vsel %vm545, %v546, %v544
    %v548 = vclz %v547
    %v549 = vsub.s32 %v548, 2
    %vm550 = vcmp.gt.s32.totalorder 0, %v549
    %v551 = vsel %vm550, 0, %v549
    %v552 = vsub.s32 32, %v551
    %v553 = vshll.u32 %v544, %v551
    %v554 = vshrl.u32 %v536, %v552
    %v555 = vor.u32 %v553, %v554
    %v556 = vsub.s32 4294967266, %v551
    %v557 = vadd.s32 %v556, 127
    %v558 = vshll.u32 %v557, 23
    %v559 = vor.u32 4788187, %v558
    %v560 = vand.u32 2147483647, %v559
    %v562 = vcvt.s32.f32 %v555
    %v563 = vmul.f32 %v562, %v560
    %v564 = vxor.u32 %v563, 2147483648
    %v565 = vsel %vm482, %v564, %v563
    %v566 = vsub.s32 4, %v542
    %v567 = vsel %vm482, %v566, %v542
    %v568 = vsel %vm481, %v154, %v565
    %v569 = vsel %vm481, 0, %v567
    %v570 = vcosq.f32.pop %v568
    %v571 = vsinq.f32.pop %v568
    %vm572 = vweird.f32 %v154
    %v573 = vadd.s32 %v569, 3
    %v574 = vand.u32 %v573, 3
    %vm575 = vcmp.lt.s32.totalorder %v574, 2
    %vm576 = vcmp.eq.s32.totalorder %v574, 0
    %v577 = vxor.u32 %v571, 2147483648
    %v578 = vsel %vm576, %v570, %v577
    %vm579 = vcmp.eq.s32.totalorder %v574, 2
    %v580 = vxor.u32 %v570, 2147483648
    %v581 = vsel %vm579, %v580, %v571
    %v582 = vsel %vm575, %v578, %v581
    %v583 = vsel %vm572, nan, %v582
    %v584 = vand.u32 2147483647, %v158
    %vm585 = vcmp.le.f32.partialorder %v584, 0.7853982
    %vm586 = vcmp.lt.s32.totalorder %v158, 0
    %v587 = vand.u32 %v158, 2139095040
    %v588 = vshrl.u32 %v587, 23
    %v589 = vsub.s32 %v588, 127
    %v590 = vand.u32 2147483647, %v158
    %v591 = vand.u32 %v590, 8388607
    %v592 = vor.u32 %v591, 8388608
    %v593 = vsub.s32 0, %v592
    %v594 = vadd.s32 %v589, 1
    %vm595 = vcmp.gt.s32.totalorder %v594, 0
    %v596 = vsel %vm595, %v594, 0
    %v597 = vshrl.u32 %v596, 5
    %v598 = vand.u32 %v596, 31
    %v599 = vsub.s32 32, %v598
    %v600 = vshrl.u32 683565275, %v599
    %v601 = vshll.u32 683565275, %v598
    %v602 = vshrl.u32 2475754826, %v599
    %v603 = vor.u32 %v601, %v602
    %v604 = vshll.u32 2475754826, %v598
    %v605 = vshrl.u32 2131351028, %v599
    %v606 = vor.u32 %v604, %v605
    %v607 = vshll.u32 2131351028, %v598
    %v608 = vshrl.u32 2102212464, %v599
    %v609 = vor.u32 %v607, %v608
    %v610 = vshll.u32 2102212464, %v598
    %v611 = vshrl.u32 920167782, %v599
    %v612 = vor.u32 %v610, %v611
    %v613 = vshll.u32 920167782, %v598
    %v614 = vshrl.u32 1326507024, %v599
    %v615 = vor.u32 %v613, %v614
    %vm616 = vcmp.lt.s32.totalorder %v597, 1
    %vm617 = vcmp.lt.s32.totalorder %v597, 2
    %vm618 = vcmp.lt.s32.totalorder %v597, 3
    %vm619 = vcmp.lt.s32.totalorder %v597, 4
    %v620 = vsel %vm616, %v600, %v603
    %v621 = vsel %vm619, %v609, 2102212464
    %v622 = vsel %vm618, %v606, %v621
    %v623 = vsel %vm617, %v620, %v622
    %v624 = vsel %vm616, %v603, %v606
    %v625 = vsel %vm619, %v612, 920167782
    %v626 = vsel %vm618, %v609, %v625
    %v627 = vsel %vm617, %v624, %v626
    %v628 = vsel %vm616, %v606, %v609
    %v629 = vsel %vm619, %v615, 1326507024
    %v630 = vsel %vm618, %v612, %v629
    %v631 = vsel %vm617, %v628, %v630
    %v632 = vshll.u32 %v592, 8
    %v633 = vmul.u32.u64.compose %v632, %v631
    %v634 = vextract.low.u32 %v633
    %v635 = vextract.high.u32 %v633
    %v636 = vmul.u32.u64.compose %v632, %v627
    %v637 = vextract.low.u32 %v636
    %v638 = vextract.high.u32 %v636
    %v639 = vmul.u32 %v632, %v623
    %v640 = vadd.s32 %v635, %v637
    %vm641 = vc.u32 %v635, %v637
    %v642 = vadd.s32 %v638, 1
    %v643 = vsel %vm641, %v642, %v638
    %v644 = vadd.s32 %v639, %v643
    %v645 = vadd.s32 %v644, 536870912
    %v646 = vshrl.u32 %v645, 30
    %v647 = vshll.u32 %v646, 30
    %v648 = vsub.s32 %v644, %v647
    %vm649 = vcmp.lt.s32.totalorder %v648, 0
    %v650 = vsub.s32 0, %v648
    %v651 = vsel %vm649, %v650, %v648
    %v652 = vclz %v651
    %v653 = vsub.s32 %v652, 2
    %vm654 = vcmp.gt.s32.totalorder 0, %v653
    %v655 = vsel %vm654, 0, %v653
    %v656 = vsub.s32 32, %v655
    %v657 = vshll.u32 %v648, %v655
    %v658 = vshrl.u32 %v640, %v656
    %v659 = vor.u32 %v657, %v658
    %v660 = vsub.s32 4294967266, %v655
    %v661 = vadd.s32 %v660, 127
    %v662 = vshll.u32 %v661, 23
    %v663 = vor.u32 4788187, %v662
    %v664 = vand.u32 2147483647, %v663
    %v666 = vcvt.s32.f32 %v659
    %v667 = vmul.f32 %v666, %v664
    %v668 = vxor.u32 %v667, 2147483648
    %v669 = vsel %vm586, %v668, %v667
    %v670 = vsub.s32 4, %v646
    %v671 = vsel %vm586, %v670, %v646
    %v672 = vsel %vm585, %v158, %v669
    %v673 = vsel %vm585, 0, %v671
    %v674 = vcosq.f32.pop %v672
    %v675 = vsinq.f32.pop %v672
    %vm676 = vweird.f32 %v158
    %v677 = vadd.s32 %v673, 3
    %v678 = vand.u32 %v677, 3
    %vm679 = vcmp.lt.s32.totalorder %v678, 2
    %vm680 = vcmp.eq.s32.totalorder %v678, 0
    %v681 = vxor.u32 %v675, 2147483648
    %v682 = vsel %vm680, %v674, %v681
    %vm683 = vcmp.eq.s32.totalorder %v678, 2
    %v684 = vxor.u32 %v674, 2147483648
    %v685 = vsel %vm683, %v684, %v675
    %v686 = vsel %vm679, %v682, %v685
    %v687 = vsel %vm676, nan, %v686
    %v688 = vand.u32 2147483647, %v160
    %vm689 = vcmp.le.f32.partialorder %v688, 0.7853982
    %vm690 = vcmp.lt.s32.totalorder %v160, 0
    %v691 = vand.u32 %v160, 2139095040
    %v692 = vshrl.u32 %v691, 23
    %v693 = vsub.s32 %v692, 127
    %v694 = vand.u32 2147483647, %v160
    %v695 = vand.u32 %v694, 8388607
    %v696 = vor.u32 %v695, 8388608
    %v697 = vsub.s32 0, %v696
    %v698 = vadd.s32 %v693, 1
    %vm699 = vcmp.gt.s32.totalorder %v698, 0
    %v700 = vsel %vm699, %v698, 0
    %v701 = vshrl.u32 %v700, 5
    %v702 = vand.u32 %v700, 31
    %v703 = vsub.s32 32, %v702
    %v704 = vshrl.u32 683565275, %v703
    %v705 = vshll.u32 683565275, %v702
    %v706 = vshrl.u32 2475754826, %v703
    %v707 = vor.u32 %v705, %v706
    %v708 = vshll.u32 2475754826, %v702
    %v709 = vshrl.u32 2131351028, %v703
    %v710 = vor.u32 %v708, %v709
    %v711 = vshll.u32 2131351028, %v702
    %v712 = vshrl.u32 2102212464, %v703
    %v713 = vor.u32 %v711, %v712
    %v714 = vshll.u32 2102212464, %v702
    %v715 = vshrl.u32 920167782, %v703
    %v716 = vor.u32 %v714, %v715
    %v717 = vshll.u32 920167782, %v702
    %v718 = vshrl.u32 1326507024, %v703
    %v719 = vor.u32 %v717, %v718
    %vm720 = vcmp.lt.s32.totalorder %v701, 1
    %vm721 = vcmp.lt.s32.totalorder %v701, 2
    %vm722 = vcmp.lt.s32.totalorder %v701, 3
    %vm723 = vcmp.lt.s32.totalorder %v701, 4
    %v724 = vsel %vm720, %v704, %v707
    %v725 = vsel %vm723, %v713, 2102212464
    %v726 = vsel %vm722, %v710, %v725
    %v727 = vsel %vm721, %v724, %v726
    %v728 = vsel %vm720, %v707, %v710
    %v729 = vsel %vm723, %v716, 920167782
    %v730 = vsel %vm722, %v713, %v729
    %v731 = vsel %vm721, %v728, %v730
    %v732 = vsel %vm720, %v710, %v713
    %v733 = vsel %vm723, %v719, 1326507024
    %v734 = vsel %vm722, %v716, %v733
    %v735 = vsel %vm721, %v732, %v734
    %v736 = vshll.u32 %v696, 8
    %v737 = vmul.u32.u64.compose %v736, %v735
    %v738 = vextract.low.u32 %v737
    %v739 = vextract.high.u32 %v737
    %v740 = vmul.u32.u64.compose %v736, %v731
    %v741 = vextract.low.u32 %v740
    %v742 = vextract.high.u32 %v740
    %v743 = vmul.u32 %v736, %v727
    %v744 = vadd.s32 %v739, %v741
    %vm745 = vc.u32 %v739, %v741
    %v746 = vadd.s32 %v742, 1
    %v747 = vsel %vm745, %v746, %v742
    %v748 = vadd.s32 %v743, %v747
    %v749 = vadd.s32 %v748, 536870912
    %v750 = vshrl.u32 %v749, 30
    %v751 = vshll.u32 %v750, 30
    %v752 = vsub.s32 %v748, %v751
    %vm753 = vcmp.lt.s32.totalorder %v752, 0
    %v754 = vsub.s32 0, %v752
    %v755 = vsel %vm753, %v754, %v752
    %v756 = vclz %v755
    %v757 = vsub.s32 %v756, 2
    %vm758 = vcmp.gt.s32.totalorder 0, %v757
    %v759 = vsel %vm758, 0, %v757
    %v760 = vsub.s32 32, %v759
    %v761 = vshll.u32 %v752, %v759
    %v762 = vshrl.u32 %v744, %v760
    %v763 = vor.u32 %v761, %v762
    %v764 = vsub.s32 4294967266, %v759
    %v765 = vadd.s32 %v764, 127
    %v766 = vshll.u32 %v765, 23
    %v767 = vor.u32 4788187, %v766
    %v768 = vand.u32 2147483647, %v767
    %v770 = vcvt.s32.f32 %v763
    %v771 = vmul.f32 %v770, %v768
    %v772 = vxor.u32 %v771, 2147483648
    %v773 = vsel %vm690, %v772, %v771
    %v774 = vsub.s32 4, %v750
    %v775 = vsel %vm690, %v774, %v750
    %v776 = vsel %vm689, %v160, %v773
    %v777 = vsel %vm689, 0, %v775
    %v778 = vcosq.f32.pop %v776
    %v779 = vsinq.f32.pop %v776
    %vm780 = vweird.f32 %v160
    %v781 = vadd.s32 %v777, 3
    %v782 = vand.u32 %v781, 3
    %vm783 = vcmp.lt.s32.totalorder %v782, 2
    %vm784 = vcmp.eq.s32.totalorder %v782, 0
    %v785 = vxor.u32 %v779, 2147483648
    %v786 = vsel %vm784, %v778, %v785
    %vm787 = vcmp.eq.s32.totalorder %v782, 2
    %v788 = vxor.u32 %v778, 2147483648
    %v789 = vsel %vm787, %v788, %v779
    %v790 = vsel %vm783, %v786, %v789
    %v791 = vsel %vm780, nan, %v790
    %v792 = vand.u32 2147483647, %v164
    %vm793 = vcmp.le.f32.partialorder %v792, 0.7853982
    %vm794 = vcmp.lt.s32.totalorder %v164, 0
    %v795 = vand.u32 %v164, 2139095040
    %v796 = vshrl.u32 %v795, 23
    %v797 = vsub.s32 %v796, 127
    %v798 = vand.u32 2147483647, %v164
    %v799 = vand.u32 %v798, 8388607
    %v800 = vor.u32 %v799, 8388608
    %v801 = vsub.s32 0, %v800
    %v802 = vadd.s32 %v797, 1
    %vm803 = vcmp.gt.s32.totalorder %v802, 0
    %v804 = vsel %vm803, %v802, 0
    %v805 = vshrl.u32 %v804, 5
    %v806 = vand.u32 %v804, 31
    %v807 = vsub.s32 32, %v806
    %v808 = vshrl.u32 683565275, %v807
    %v809 = vshll.u32 683565275, %v806
    %v810 = vshrl.u32 2475754826, %v807
    %v811 = vor.u32 %v809, %v810
    %v812 = vshll.u32 2475754826, %v806
    %v813 = vshrl.u32 2131351028, %v807
    %v814 = vor.u32 %v812, %v813
    %v815 = vshll.u32 2131351028, %v806
    %v816 = vshrl.u32 2102212464, %v807
    %v817 = vor.u32 %v815, %v816
    %v818 = vshll.u32 2102212464, %v806
    %v819 = vshrl.u32 920167782, %v807
    %v820 = vor.u32 %v818, %v819
    %v821 = vshll.u32 920167782, %v806
    %v822 = vshrl.u32 1326507024, %v807
    %v823 = vor.u32 %v821, %v822
    %vm824 = vcmp.lt.s32.totalorder %v805, 1
    %vm825 = vcmp.lt.s32.totalorder %v805, 2
    %vm826 = vcmp.lt.s32.totalorder %v805, 3
    %vm827 = vcmp.lt.s32.totalorder %v805, 4
    %v828 = vsel %vm824, %v808, %v811
    %v829 = vsel %vm827, %v817, 2102212464
    %v830 = vsel %vm826, %v814, %v829
    %v831 = vsel %vm825, %v828, %v830
    %v832 = vsel %vm824, %v811, %v814
    %v833 = vsel %vm827, %v820, 920167782
    %v834 = vsel %vm826, %v817, %v833
    %v835 = vsel %vm825, %v832, %v834
    %v836 = vsel %vm824, %v814, %v817
    %v837 = vsel %vm827, %v823, 1326507024
    %v838 = vsel %vm826, %v820, %v837
    %v839 = vsel %vm825, %v836, %v838
    %v840 = vshll.u32 %v800, 8
    %v841 = vmul.u32.u64.compose %v840, %v839
    %v842 = vextract.low.u32 %v841
    %v843 = vextract.high.u32 %v841
    %v844 = vmul.u32.u64.compose %v840, %v835
    %v845 = vextract.low.u32 %v844
    %v846 = vextract.high.u32 %v844
    %v847 = vmul.u32 %v840, %v831
    %v848 = vadd.s32 %v843, %v845
    %vm849 = vc.u32 %v843, %v845
    %v850 = vadd.s32 %v846, 1
    %v851 = vsel %vm849, %v850, %v846
    %v852 = vadd.s32 %v847, %v851
    %v853 = vadd.s32 %v852, 536870912
    %v854 = vshrl.u32 %v853, 30
    %v855 = vshll.u32 %v854, 30
    %v856 = vsub.s32 %v852, %v855
    %vm857 = vcmp.lt.s32.totalorder %v856, 0
    %v858 = vsub.s32 0, %v856
    %v859 = vsel %vm857, %v858, %v856
    %v860 = vclz %v859
    %v861 = vsub.s32 %v860, 2
    %vm862 = vcmp.gt.s32.totalorder 0, %v861
    %v863 = vsel %vm862, 0, %v861
    %v864 = vsub.s32 32, %v863
    %v865 = vshll.u32 %v856, %v863
    %v866 = vshrl.u32 %v848, %v864
    %v867 = vor.u32 %v865, %v866
    %v868 = vsub.s32 4294967266, %v863
    %v869 = vadd.s32 %v868, 127
    %v870 = vshll.u32 %v869, 23
    %v871 = vor.u32 4788187, %v870
    %v872 = vand.u32 2147483647, %v871
    %v874 = vcvt.s32.f32 %v867
    %v875 = vmul.f32 %v874, %v872
    %v876 = vxor.u32 %v875, 2147483648
    %v877 = vsel %vm794, %v876, %v875
    %v878 = vsub.s32 4, %v854
    %v879 = vsel %vm794, %v878, %v854
    %v880 = vsel %vm793, %v164, %v877
    %v881 = vsel %vm793, 0, %v879
    %v882 = vcosq.f32.pop %v880
    %v883 = vsinq.f32.pop %v880
    %vm884 = vweird.f32 %v164
    %v885 = vadd.s32 %v881, 3
    %v886 = vand.u32 %v885, 3
    %vm887 = vcmp.lt.s32.totalorder %v886, 2
    %vm888 = vcmp.eq.s32.totalorder %v886, 0
    %v889 = vxor.u32 %v883, 2147483648
    %v890 = vsel %vm888, %v882, %v889
    %vm891 = vcmp.eq.s32.totalorder %v886, 2
    %v892 = vxor.u32 %v882, 2147483648
    %v893 = vsel %vm891, %v892, %v883
    %v894 = vsel %vm887, %v890, %v893
    %v895 = vsel %vm884, nan, %v894
    %v896 = vand.u32 2147483647, %v166
    %vm897 = vcmp.le.f32.partialorder %v896, 0.7853982
    %vm898 = vcmp.lt.s32.totalorder %v166, 0
    %v899 = vand.u32 %v166, 2139095040
    %v900 = vshrl.u32 %v899, 23
    %v901 = vsub.s32 %v900, 127
    %v902 = vand.u32 2147483647, %v166
    %v903 = vand.u32 %v902, 8388607
    %v904 = vor.u32 %v903, 8388608
    %v905 = vsub.s32 0, %v904
    %v906 = vadd.s32 %v901, 1
    %vm907 = vcmp.gt.s32.totalorder %v906, 0
    %v908 = vsel %vm907, %v906, 0
    %v909 = vshrl.u32 %v908, 5
    %v910 = vand.u32 %v908, 31
    %v911 = vsub.s32 32, %v910
    %v912 = vshrl.u32 683565275, %v911
    %v913 = vshll.u32 683565275, %v910
    %v914 = vshrl.u32 2475754826, %v911
    %v915 = vor.u32 %v913, %v914
    %v916 = vshll.u32 2475754826, %v910
    %v917 = vshrl.u32 2131351028, %v911
    %v918 = vor.u32 %v916, %v917
    %v919 = vshll.u32 2131351028, %v910
    %v920 = vshrl.u32 2102212464, %v911
    %v921 = vor.u32 %v919, %v920
    %v922 = vshll.u32 2102212464, %v910
    %v923 = vshrl.u32 920167782, %v911
    %v924 = vor.u32 %v922, %v923
    %v925 = vshll.u32 920167782, %v910
    %v926 = vshrl.u32 1326507024, %v911
    %v927 = vor.u32 %v925, %v926
    %vm928 = vcmp.lt.s32.totalorder %v909, 1
    %vm929 = vcmp.lt.s32.totalorder %v909, 2
    %vm930 = vcmp.lt.s32.totalorder %v909, 3
    %vm931 = vcmp.lt.s32.totalorder %v909, 4
    %v932 = vsel %vm928, %v912, %v915
    %v933 = vsel %vm931, %v921, 2102212464
    %v934 = vsel %vm930, %v918, %v933
    %v935 = vsel %vm929, %v932, %v934
    %v936 = vsel %vm928, %v915, %v918
    %v937 = vsel %vm931, %v924, 920167782
    %v938 = vsel %vm930, %v921, %v937
    %v939 = vsel %vm929, %v936, %v938
    %v940 = vsel %vm928, %v918, %v921
    %v941 = vsel %vm931, %v927, 1326507024
    %v942 = vsel %vm930, %v924, %v941
    %v943 = vsel %vm929, %v940, %v942
    %v944 = vshll.u32 %v904, 8
    %v945 = vmul.u32.u64.compose %v944, %v943
    %v946 = vextract.low.u32 %v945
    %v947 = vextract.high.u32 %v945
    %v948 = vmul.u32.u64.compose %v944, %v939
    %v949 = vextract.low.u32 %v948
    %v950 = vextract.high.u32 %v948
    %v951 = vmul.u32 %v944, %v935
    %v952 = vadd.s32 %v947, %v949
    %vm953 = vc.u32 %v947, %v949
    %v954 = vadd.s32 %v950, 1
    %v955 = vsel %vm953, %v954, %v950
    %v956 = vadd.s32 %v951, %v955
    %v957 = vadd.s32 %v956, 536870912
    %v958 = vshrl.u32 %v957, 30
    %v959 = vshll.u32 %v958, 30
    %v960 = vsub.s32 %v956, %v959
    %vm961 = vcmp.lt.s32.totalorder %v960, 0
    %v962 = vsub.s32 0, %v960
    %v963 = vsel %vm961, %v962, %v960
    %v964 = vclz %v963
    %v965 = vsub.s32 %v964, 2
    %vm966 = vcmp.gt.s32.totalorder 0, %v965
    %v967 = vsel %vm966, 0, %v965
    %v968 = vsub.s32 32, %v967
    %v969 = vshll.u32 %v960, %v967
    %v970 = vshrl.u32 %v952, %v968
    %v971 = vor.u32 %v969, %v970
    %v972 = vsub.s32 4294967266, %v967
    %v973 = vadd.s32 %v972, 127
    %v974 = vshll.u32 %v973, 23
    %v975 = vor.u32 4788187, %v974
    %v976 = vand.u32 2147483647, %v975
    %v978 = vcvt.s32.f32 %v971
    %v979 = vmul.f32 %v978, %v976
    %v980 = vxor.u32 %v979, 2147483648
    %v981 = vsel %vm898, %v980, %v979
    %v982 = vsub.s32 4, %v958
    %v983 = vsel %vm898, %v982, %v958
    %v984 = vsel %vm897, %v166, %v981
    %v985 = vsel %vm897, 0, %v983
    %v986 = vcosq.f32.pop %v984
    %v987 = vsinq.f32.pop %v984
    %vm988 = vweird.f32 %v166
    %v989 = vadd.s32 %v985, 3
    %v990 = vand.u32 %v989, 3
    %vm991 = vcmp.lt.s32.totalorder %v990, 2
    %vm992 = vcmp.eq.s32.totalorder %v990, 0
    %v993 = vxor.u32 %v987, 2147483648
    %v994 = vsel %vm992, %v986, %v993
    %vm995 = vcmp.eq.s32.totalorder %v990, 2
    %v996 = vxor.u32 %v986, 2147483648
    %v997 = vsel %vm995, %v996, %v987
    %v998 = vsel %vm991, %v994, %v997
    %v999 = vsel %vm988, nan, %v998
    %1001 = vset.pattern.permute.xlu0 0
    %1002 = vperm.xlu0 %1001, %v42
    %v1003 = vpop.permute.xlu0 %1002
    %1006 = vset.pattern.permute.xlu0 0
    %1007 = vperm.xlu0 %1006, %v43
    %v1008 = vpop.permute.xlu0 %1007
    %1011 = vset.pattern.permute.xlu0 0
    %1012 = vperm.xlu0 %1011, %v44
    %v1013 = vpop.permute.xlu0 %1012
    %1016 = vset.pattern.permute.xlu0 0
    %1017 = vperm.xlu0 %1016, %v45
    %v1018 = vpop.permute.xlu0 %1017
    %v1021 = vsel %vm66, %v37, 0
    %v1024 = vsel %vm66, %v38, 0
    %v1027 = vsel %vm66, %v39, 0
    %v1030 = vsel %vm66, %v40, 0
    %1032 = vmatprep.subr.mxu0 0.0
    %1033 = vmatpush1.msra.mxu0 0.0
    %1034 = vmatprep.subr.mxu0 0.0
    %1035 = vmatpush1.msra.mxu0 0.0
    %1036 = vmatprep.subr.mxu0 0.0
    %1037 = vmatpush1.msra.mxu0 0.0
    %1038 = vmatprep.subr.mxu0 0.0
    %1039 = vmatpush1.msra.mxu0 0.0
    %1040 = vmatprep.subr.mxu0 0.0
    %1041 = vmatpush1.msra.mxu0 0.0
    %1042 = vmatprep.subr.mxu0 0.0
    %1043 = vmatpush1.msra.mxu0 0.0
    %1044 = vmatprep.subr.mxu0 0.0
    %1045 = vmatpush1.msra.mxu0 0.0
    %1046 = vmatprep.subr.mxu0 0.0
    %1047 = vmatpush1.msra.mxu0 0.0
    %1048 = vmatprep.subr.mxu0 0.0
    %1049 = vmatpush1.msra.mxu0 0.0
    %1050 = vmatprep.subr.mxu0 0.0
    %1051 = vmatpush1.msra.mxu0 0.0
    %1052 = vmatprep.subr.mxu0 0.0
    %1053 = vmatpush1.msra.mxu0 0.0
    %1054 = vmatprep.subr.mxu0 0.0
    %1055 = vmatpush1.msra.mxu0 0.0
    %1056 = vmatprep.subr.mxu0 %v999
    %1057 = vmatpush1.msra.mxu0 %v895
    %1058 = vmatprep.subr.mxu0 %v791
    %1059 = vmatpush1.msra.mxu0 %v687
    %1060 = vmatprep.subr.mxu0 %v583
    %1061 = vmatpush1.msra.mxu0 %v479
    %1062 = vmatprep.subr.mxu0 %v375
    %1063 = vmatpush1.msra.mxu0 %v271
    %1064 = vmatprep.subr.mxu0 0.0
    %1065 = vmatpush2.msra.mxu0 0.0
    %1066 = vmatprep.subr.mxu0 0.0
    %1067 = vmatpush2.msra.mxu0 0.0
    %1068 = vmatprep.subr.mxu0 0.0
    %1069 = vmatpush2.msra.mxu0 0.0
    %1070 = vmatprep.subr.mxu0 0.0
    %1071 = vmatpush2.msra.mxu0 0.0
    %1072 = vmatprep.subr.mxu0 0.0
    %1073 = vmatpush2.msra.mxu0 0.0
    %1074 = vmatprep.subr.mxu0 0.0
    %1075 = vmatpush2.msra.mxu0 0.0
    %1076 = vmatprep.subr.mxu0 0.0
    %1077 = vmatpush2.msra.mxu0 0.0
    %1078 = vmatprep.subr.mxu0 0.0
    %1079 = vmatpush2.msra.mxu0 0.0
    %1080 = vmatprep.subr.mxu0 0.0
    %1081 = vmatpush2.msra.mxu0 0.0
    %1082 = vmatprep.subr.mxu0 0.0
    %1083 = vmatpush2.msra.mxu0 0.0
    %1084 = vmatprep.subr.mxu0 0.0
    %1085 = vmatpush2.msra.mxu0 0.0
    %1086 = vmatprep.subr.mxu0 0.0
    %1087 = vmatpush2.msra.mxu0 0.0
    %1088 = vmatprep.subr.mxu0 0.0
    %1089 = vmatpush2.msra.mxu0 0.0
    %1090 = vmatprep.subr.mxu0 0.0
    %1091 = vmatpush2.msra.mxu0 0.0
    %1092 = vmatprep.subr.mxu0 0.0
    %1093 = vmatpush2.msra.mxu0 0.0
    %1094 = vmatprep.subr.mxu0 0.0
    %1095 = vmatpush2.msra.mxu0 0.0
    %1096 = vmatprep.mubr.f32.mxu0 0.0
    %1097 = vmatmul.mubr.f32.gmra.mxu0 %v1021
    %v1098 = vpop.f32.mrf.mxu0
    %v1099 = vadd.f32 %v1003, %v1098
    %v1100 = vpop.f32.mrf.mxu0
    %v1101 = vadd.f32 %v1003, %v1100
    %1102 = vmatprep.mubr.f32.mxu0 0.0
    %1103 = vmatmul.mubr.f32.gmra.mxu0 %v1024
    %v1104 = vpop.f32.mrf.mxu0
    %v1105 = vadd.f32 %v1008, %v1104
    %v1106 = vpop.f32.mrf.mxu0
    %v1107 = vadd.f32 %v1008, %v1106
    %1108 = vmatprep.mubr.f32.mxu0 0.0
    %1109 = vmatmul.mubr.f32.gmra.mxu0 %v1027
    %v1110 = vpop.f32.mrf.mxu0
    %v1111 = vadd.f32 %v1013, %v1110
    %v1112 = vpop.f32.mrf.mxu0
    %v1113 = vadd.f32 %v1013, %v1112
    %1114 = vmatprep.mubr.f32.mxu0 0.0
    %1115 = vmatmul.mubr.f32.gmra.mxu0 %v1030
    %v1116 = vpop.f32.mrf.mxu0
    %v1117 = vadd.f32 %v1018, %v1116
    %v1118 = vpop.f32.mrf.mxu0
    %v1119 = vadd.f32 %v1018, %v1118
    %1120 = vdwg.mxu0
    %v1121 = vand.u32 2147483647, %v1099
    %vm1122 = vcmp.le.f32.partialorder %v1121, 0.7853982
    %vm1123 = vcmp.lt.s32.totalorder %v1099, 0
    %v1124 = vand.u32 %v1099, 2139095040
    %v1125 = vshrl.u32 %v1124, 23
    %v1126 = vsub.s32 %v1125, 127
    %v1127 = vand.u32 2147483647, %v1099
    %v1128 = vand.u32 %v1127, 8388607
    %v1129 = vor.u32 %v1128, 8388608
    %v1130 = vsub.s32 0, %v1129
    %v1131 = vadd.s32 %v1126, 1
    %vm1132 = vcmp.gt.s32.totalorder %v1131, 0
    %v1133 = vsel %vm1132, %v1131, 0
    %v1134 = vshrl.u32 %v1133, 5
    %v1135 = vand.u32 %v1133, 31
    %v1136 = vsub.s32 32, %v1135
    %v1137 = vshrl.u32 683565275, %v1136
    %v1138 = vshll.u32 683565275, %v1135
    %v1139 = vshrl.u32 2475754826, %v1136
    %v1140 = vor.u32 %v1138, %v1139
    %v1141 = vshll.u32 2475754826, %v1135
    %v1142 = vshrl.u32 2131351028, %v1136
    %v1143 = vor.u32 %v1141, %v1142
    %v1144 = vshll.u32 2131351028, %v1135
    %v1145 = vshrl.u32 2102212464, %v1136
    %v1146 = vor.u32 %v1144, %v1145
    %v1147 = vshll.u32 2102212464, %v1135
    %v1148 = vshrl.u32 920167782, %v1136
    %v1149 = vor.u32 %v1147, %v1148
    %v1150 = vshll.u32 920167782, %v1135
    %v1151 = vshrl.u32 1326507024, %v1136
    %v1152 = vor.u32 %v1150, %v1151
    %vm1153 = vcmp.lt.s32.totalorder %v1134, 1
    %vm1154 = vcmp.lt.s32.totalorder %v1134, 2
    %vm1155 = vcmp.lt.s32.totalorder %v1134, 3
    %vm1156 = vcmp.lt.s32.totalorder %v1134, 4
    %v1157 = vsel %vm1153, %v1137, %v1140
    %v1158 = vsel %vm1156, %v1146, 2102212464
    %v1159 = vsel %vm1155, %v1143, %v1158
    %v1160 = vsel %vm1154, %v1157, %v1159
    %v1161 = vsel %vm1153, %v1140, %v1143
    %v1162 = vsel %vm1156, %v1149, 920167782
    %v1163 = vsel %vm1155, %v1146, %v1162
    %v1164 = vsel %vm1154, %v1161, %v1163
    %v1165 = vsel %vm1153, %v1143, %v1146
    %v1166 = vsel %vm1156, %v1152, 1326507024
    %v1167 = vsel %vm1155, %v1149, %v1166
    %v1168 = vsel %vm1154, %v1165, %v1167
    %v1169 = vshll.u32 %v1129, 8
    %v1170 = vmul.u32.u64.compose %v1169, %v1168
    %v1171 = vextract.low.u32 %v1170
    %v1172 = vextract.high.u32 %v1170
    %v1173 = vmul.u32.u64.compose %v1169, %v1164
    %v1174 = vextract.low.u32 %v1173
    %v1175 = vextract.high.u32 %v1173
    %v1176 = vmul.u32 %v1169, %v1160
    %v1177 = vadd.s32 %v1172, %v1174
    %vm1178 = vc.u32 %v1172, %v1174
    %v1179 = vadd.s32 %v1175, 1
    %v1180 = vsel %vm1178, %v1179, %v1175
    %v1181 = vadd.s32 %v1176, %v1180
    %v1182 = vadd.s32 %v1181, 536870912
    %v1183 = vshrl.u32 %v1182, 30
    %v1184 = vshll.u32 %v1183, 30
    %v1185 = vsub.s32 %v1181, %v1184
    %vm1186 = vcmp.lt.s32.totalorder %v1185, 0
    %v1187 = vsub.s32 0, %v1185
    %v1188 = vsel %vm1186, %v1187, %v1185
    %v1189 = vclz %v1188
    %v1190 = vsub.s32 %v1189, 2
    %vm1191 = vcmp.gt.s32.totalorder 0, %v1190
    %v1192 = vsel %vm1191, 0, %v1190
    %v1193 = vsub.s32 32, %v1192
    %v1194 = vshll.u32 %v1185, %v1192
    %v1195 = vshrl.u32 %v1177, %v1193
    %v1196 = vor.u32 %v1194, %v1195
    %v1197 = vsub.s32 4294967266, %v1192
    %v1198 = vadd.s32 %v1197, 127
    %v1199 = vshll.u32 %v1198, 23
    %v1200 = vor.u32 4788187, %v1199
    %v1201 = vand.u32 2147483647, %v1200
    %v1203 = vcvt.s32.f32 %v1196
    %v1204 = vmul.f32 %v1203, %v1201
    %v1205 = vxor.u32 %v1204, 2147483648
    %v1206 = vsel %vm1123, %v1205, %v1204
    %v1207 = vsub.s32 4, %v1183
    %v1208 = vsel %vm1123, %v1207, %v1183
    %v1209 = vsel %vm1122, %v1099, %v1206
    %v1210 = vsel %vm1122, 0, %v1208
    %v1211 = vcosq.f32.pop %v1209
    %v1212 = vsinq.f32.pop %v1209
    %vm1213 = vweird.f32 %v1099
    %v1214 = vadd.s32 %v1210, 3
    %v1215 = vand.u32 %v1214, 3
    %vm1216 = vcmp.lt.s32.totalorder %v1215, 2
    %vm1217 = vcmp.eq.s32.totalorder %v1215, 0
    %v1218 = vxor.u32 %v1212, 2147483648
    %v1219 = vsel %vm1217, %v1211, %v1218
    %vm1220 = vcmp.eq.s32.totalorder %v1215, 2
    %v1221 = vxor.u32 %v1211, 2147483648
    %v1222 = vsel %vm1220, %v1221, %v1212
    %v1223 = vsel %vm1216, %v1219, %v1222
    %v1224 = vsel %vm1213, nan, %v1223
    %v1225 = vand.u32 2147483647, %v1101
    %vm1226 = vcmp.le.f32.partialorder %v1225, 0.7853982
    %vm1227 = vcmp.lt.s32.totalorder %v1101, 0
    %v1228 = vand.u32 %v1101, 2139095040
    %v1229 = vshrl.u32 %v1228, 23
    %v1230 = vsub.s32 %v1229, 127
    %v1231 = vand.u32 2147483647, %v1101
    %v1232 = vand.u32 %v1231, 8388607
    %v1233 = vor.u32 %v1232, 8388608
    %v1234 = vsub.s32 0, %v1233
    %v1235 = vadd.s32 %v1230, 1
    %vm1236 = vcmp.gt.s32.totalorder %v1235, 0
    %v1237 = vsel %vm1236, %v1235, 0
    %v1238 = vshrl.u32 %v1237, 5
    %v1239 = vand.u32 %v1237, 31
    %v1240 = vsub.s32 32, %v1239
    %v1241 = vshrl.u32 683565275, %v1240
    %v1242 = vshll.u32 683565275, %v1239
    %v1243 = vshrl.u32 2475754826, %v1240
    %v1244 = vor.u32 %v1242, %v1243
    %v1245 = vshll.u32 2475754826, %v1239
    %v1246 = vshrl.u32 2131351028, %v1240
    %v1247 = vor.u32 %v1245, %v1246
    %v1248 = vshll.u32 2131351028, %v1239
    %v1249 = vshrl.u32 2102212464, %v1240
    %v1250 = vor.u32 %v1248, %v1249
    %v1251 = vshll.u32 2102212464, %v1239
    %v1252 = vshrl.u32 920167782, %v1240
    %v1253 = vor.u32 %v1251, %v1252
    %v1254 = vshll.u32 920167782, %v1239
    %v1255 = vshrl.u32 1326507024, %v1240
    %v1256 = vor.u32 %v1254, %v1255
    %vm1257 = vcmp.lt.s32.totalorder %v1238, 1
    %vm1258 = vcmp.lt.s32.totalorder %v1238, 2
    %vm1259 = vcmp.lt.s32.totalorder %v1238, 3
    %vm1260 = vcmp.lt.s32.totalorder %v1238, 4
    %v1261 = vsel %vm1257, %v1241, %v1244
    %v1262 = vsel %vm1260, %v1250, 2102212464
    %v1263 = vsel %vm1259, %v1247, %v1262
    %v1264 = vsel %vm1258, %v1261, %v1263
    %v1265 = vsel %vm1257, %v1244, %v1247
    %v1266 = vsel %vm1260, %v1253, 920167782
    %v1267 = vsel %vm1259, %v1250, %v1266
    %v1268 = vsel %vm1258, %v1265, %v1267
    %v1269 = vsel %vm1257, %v1247, %v1250
    %v1270 = vsel %vm1260, %v1256, 1326507024
    %v1271 = vsel %vm1259, %v1253, %v1270
    %v1272 = vsel %vm1258, %v1269, %v1271
    %v1273 = vshll.u32 %v1233, 8
    %v1274 = vmul.u32.u64.compose %v1273, %v1272
    %v1275 = vextract.low.u32 %v1274
    %v1276 = vextract.high.u32 %v1274
    %v1277 = vmul.u32.u64.compose %v1273, %v1268
    %v1278 = vextract.low.u32 %v1277
    %v1279 = vextract.high.u32 %v1277
    %v1280 = vmul.u32 %v1273, %v1264
    %v1281 = vadd.s32 %v1276, %v1278
    %vm1282 = vc.u32 %v1276, %v1278
    %v1283 = vadd.s32 %v1279, 1
    %v1284 = vsel %vm1282, %v1283, %v1279
    %v1285 = vadd.s32 %v1280, %v1284
    %v1286 = vadd.s32 %v1285, 536870912
    %v1287 = vshrl.u32 %v1286, 30
    %v1288 = vshll.u32 %v1287, 30
    %v1289 = vsub.s32 %v1285, %v1288
    %vm1290 = vcmp.lt.s32.totalorder %v1289, 0
    %v1291 = vsub.s32 0, %v1289
    %v1292 = vsel %vm1290, %v1291, %v1289
    %v1293 = vclz %v1292
    %v1294 = vsub.s32 %v1293, 2
    %vm1295 = vcmp.gt.s32.totalorder 0, %v1294
    %v1296 = vsel %vm1295, 0, %v1294
    %v1297 = vsub.s32 32, %v1296
    %v1298 = vshll.u32 %v1289, %v1296
    %v1299 = vshrl.u32 %v1281, %v1297
    %v1300 = vor.u32 %v1298, %v1299
    %v1301 = vsub.s32 4294967266, %v1296
    %v1302 = vadd.s32 %v1301, 127
    %v1303 = vshll.u32 %v1302, 23
    %v1304 = vor.u32 4788187, %v1303
    %v1305 = vand.u32 2147483647, %v1304
    %v1307 = vcvt.s32.f32 %v1300
    %v1308 = vmul.f32 %v1307, %v1305
    %v1309 = vxor.u32 %v1308, 2147483648
    %v1310 = vsel %vm1227, %v1309, %v1308
    %v1311 = vsub.s32 4, %v1287
    %v1312 = vsel %vm1227, %v1311, %v1287
    %v1313 = vsel %vm1226, %v1101, %v1310
    %v1314 = vsel %vm1226, 0, %v1312
    %v1315 = vcosq.f32.pop %v1313
    %v1316 = vsinq.f32.pop %v1313
    %vm1317 = vweird.f32 %v1101
    %v1318 = vadd.s32 %v1314, 3
    %v1319 = vand.u32 %v1318, 3
    %vm1320 = vcmp.lt.s32.totalorder %v1319, 2
    %vm1321 = vcmp.eq.s32.totalorder %v1319, 0
    %v1322 = vxor.u32 %v1316, 2147483648
    %v1323 = vsel %vm1321, %v1315, %v1322
    %vm1324 = vcmp.eq.s32.totalorder %v1319, 2
    %v1325 = vxor.u32 %v1315, 2147483648
    %v1326 = vsel %vm1324, %v1325, %v1316
    %v1327 = vsel %vm1320, %v1323, %v1326
    %v1328 = vsel %vm1317, nan, %v1327
    %v1329 = vand.u32 2147483647, %v1105
    %vm1330 = vcmp.le.f32.partialorder %v1329, 0.7853982
    %vm1331 = vcmp.lt.s32.totalorder %v1105, 0
    %v1332 = vand.u32 %v1105, 2139095040
    %v1333 = vshrl.u32 %v1332, 23
    %v1334 = vsub.s32 %v1333, 127
    %v1335 = vand.u32 2147483647, %v1105
    %v1336 = vand.u32 %v1335, 8388607
    %v1337 = vor.u32 %v1336, 8388608
    %v1338 = vsub.s32 0, %v1337
    %v1339 = vadd.s32 %v1334, 1
    %vm1340 = vcmp.gt.s32.totalorder %v1339, 0
    %v1341 = vsel %vm1340, %v1339, 0
    %v1342 = vshrl.u32 %v1341, 5
    %v1343 = vand.u32 %v1341, 31
    %v1344 = vsub.s32 32, %v1343
    %v1345 = vshrl.u32 683565275, %v1344
    %v1346 = vshll.u32 683565275, %v1343
    %v1347 = vshrl.u32 2475754826, %v1344
    %v1348 = vor.u32 %v1346, %v1347
    %v1349 = vshll.u32 2475754826, %v1343
    %v1350 = vshrl.u32 2131351028, %v1344
    %v1351 = vor.u32 %v1349, %v1350
    %v1352 = vshll.u32 2131351028, %v1343
    %v1353 = vshrl.u32 2102212464, %v1344
    %v1354 = vor.u32 %v1352, %v1353
    %v1355 = vshll.u32 2102212464, %v1343
    %v1356 = vshrl.u32 920167782, %v1344
    %v1357 = vor.u32 %v1355, %v1356
    %v1358 = vshll.u32 920167782, %v1343
    %v1359 = vshrl.u32 1326507024, %v1344
    %v1360 = vor.u32 %v1358, %v1359
    %vm1361 = vcmp.lt.s32.totalorder %v1342, 1
    %vm1362 = vcmp.lt.s32.totalorder %v1342, 2
    %vm1363 = vcmp.lt.s32.totalorder %v1342, 3
    %vm1364 = vcmp.lt.s32.totalorder %v1342, 4
    %v1365 = vsel %vm1361, %v1345, %v1348
    %v1366 = vsel %vm1364, %v1354, 2102212464
    %v1367 = vsel %vm1363, %v1351, %v1366
    %v1368 = vsel %vm1362, %v1365, %v1367
    %v1369 = vsel %vm1361, %v1348, %v1351
    %v1370 = vsel %vm1364, %v1357, 920167782
    %v1371 = vsel %vm1363, %v1354, %v1370
    %v1372 = vsel %vm1362, %v1369, %v1371
    %v1373 = vsel %vm1361, %v1351, %v1354
    %v1374 = vsel %vm1364, %v1360, 1326507024
    %v1375 = vsel %vm1363, %v1357, %v1374
    %v1376 = vsel %vm1362, %v1373, %v1375
    %v1377 = vshll.u32 %v1337, 8
    %v1378 = vmul.u32.u64.compose %v1377, %v1376
    %v1379 = vextract.low.u32 %v1378
    %v1380 = vextract.high.u32 %v1378
    %v1381 = vmul.u32.u64.compose %v1377, %v1372
    %v1382 = vextract.low.u32 %v1381
    %v1383 = vextract.high.u32 %v1381
    %v1384 = vmul.u32 %v1377, %v1368
    %v1385 = vadd.s32 %v1380, %v1382
    %vm1386 = vc.u32 %v1380, %v1382
    %v1387 = vadd.s32 %v1383, 1
    %v1388 = vsel %vm1386, %v1387, %v1383
    %v1389 = vadd.s32 %v1384, %v1388
    %v1390 = vadd.s32 %v1389, 536870912
    %v1391 = vshrl.u32 %v1390, 30
    %v1392 = vshll.u32 %v1391, 30
    %v1393 = vsub.s32 %v1389, %v1392
    %vm1394 = vcmp.lt.s32.totalorder %v1393, 0
    %v1395 = vsub.s32 0, %v1393
    %v1396 = vsel %vm1394, %v1395, %v1393
    %v1397 = vclz %v1396
    %v1398 = vsub.s32 %v1397, 2
    %vm1399 = vcmp.gt.s32.totalorder 0, %v1398
    %v1400 = vsel %vm1399, 0, %v1398
    %v1401 = vsub.s32 32, %v1400
    %v1402 = vshll.u32 %v1393, %v1400
    %v1403 = vshrl.u32 %v1385, %v1401
    %v1404 = vor.u32 %v1402, %v1403
    %v1405 = vsub.s32 4294967266, %v1400
    %v1406 = vadd.s32 %v1405, 127
    %v1407 = vshll.u32 %v1406, 23
    %v1408 = vor.u32 4788187, %v1407
    %v1409 = vand.u32 2147483647, %v1408
    %v1411 = vcvt.s32.f32 %v1404
    %v1412 = vmul.f32 %v1411, %v1409
    %v1413 = vxor.u32 %v1412, 2147483648
    %v1414 = vsel %vm1331, %v1413, %v1412
    %v1415 = vsub.s32 4, %v1391
    %v1416 = vsel %vm1331, %v1415, %v1391
    %v1417 = vsel %vm1330, %v1105, %v1414
    %v1418 = vsel %vm1330, 0, %v1416
    %v1419 = vcosq.f32.pop %v1417
    %v1420 = vsinq.f32.pop %v1417
    %vm1421 = vweird.f32 %v1105
    %v1422 = vadd.s32 %v1418, 3
    %v1423 = vand.u32 %v1422, 3
    %vm1424 = vcmp.lt.s32.totalorder %v1423, 2
    %vm1425 = vcmp.eq.s32.totalorder %v1423, 0
    %v1426 = vxor.u32 %v1420, 2147483648
    %v1427 = vsel %vm1425, %v1419, %v1426
    %vm1428 = vcmp.eq.s32.totalorder %v1423, 2
    %v1429 = vxor.u32 %v1419, 2147483648
    %v1430 = vsel %vm1428, %v1429, %v1420
    %v1431 = vsel %vm1424, %v1427, %v1430
    %v1432 = vsel %vm1421, nan, %v1431
    %v1433 = vand.u32 2147483647, %v1107
    %vm1434 = vcmp.le.f32.partialorder %v1433, 0.7853982
    %vm1435 = vcmp.lt.s32.totalorder %v1107, 0
    %v1436 = vand.u32 %v1107, 2139095040
    %v1437 = vshrl.u32 %v1436, 23
    %v1438 = vsub.s32 %v1437, 127
    %v1439 = vand.u32 2147483647, %v1107
    %v1440 = vand.u32 %v1439, 8388607
    %v1441 = vor.u32 %v1440, 8388608
    %v1442 = vsub.s32 0, %v1441
    %v1443 = vadd.s32 %v1438, 1
    %vm1444 = vcmp.gt.s32.totalorder %v1443, 0
    %v1445 = vsel %vm1444, %v1443, 0
    %v1446 = vshrl.u32 %v1445, 5
    %v1447 = vand.u32 %v1445, 31
    %v1448 = vsub.s32 32, %v1447
    %v1449 = vshrl.u32 683565275, %v1448
    %v1450 = vshll.u32 683565275, %v1447
    %v1451 = vshrl.u32 2475754826, %v1448
    %v1452 = vor.u32 %v1450, %v1451
    %v1453 = vshll.u32 2475754826, %v1447
    %v1454 = vshrl.u32 2131351028, %v1448
    %v1455 = vor.u32 %v1453, %v1454
    %v1456 = vshll.u32 2131351028, %v1447
    %v1457 = vshrl.u32 2102212464, %v1448
    %v1458 = vor.u32 %v1456, %v1457
    %v1459 = vshll.u32 2102212464, %v1447
    %v1460 = vshrl.u32 920167782, %v1448
    %v1461 = vor.u32 %v1459, %v1460
    %v1462 = vshll.u32 920167782, %v1447
    %v1463 = vshrl.u32 1326507024, %v1448
    %v1464 = vor.u32 %v1462, %v1463
    %vm1465 = vcmp.lt.s32.totalorder %v1446, 1
    %vm1466 = vcmp.lt.s32.totalorder %v1446, 2
    %vm1467 = vcmp.lt.s32.totalorder %v1446, 3
    %vm1468 = vcmp.lt.s32.totalorder %v1446, 4
    %v1469 = vsel %vm1465, %v1449, %v1452
    %v1470 = vsel %vm1468, %v1458, 2102212464
    %v1471 = vsel %vm1467, %v1455, %v1470
    %v1472 = vsel %vm1466, %v1469, %v1471
    %v1473 = vsel %vm1465, %v1452, %v1455
    %v1474 = vsel %vm1468, %v1461, 920167782
    %v1475 = vsel %vm1467, %v1458, %v1474
    %v1476 = vsel %vm1466, %v1473, %v1475
    %v1477 = vsel %vm1465, %v1455, %v1458
    %v1478 = vsel %vm1468, %v1464, 1326507024
    %v1479 = vsel %vm1467, %v1461, %v1478
    %v1480 = vsel %vm1466, %v1477, %v1479
    %v1481 = vshll.u32 %v1441, 8
    %v1482 = vmul.u32.u64.compose %v1481, %v1480
    %v1483 = vextract.low.u32 %v1482
    %v1484 = vextract.high.u32 %v1482
    %v1485 = vmul.u32.u64.compose %v1481, %v1476
    %v1486 = vextract.low.u32 %v1485
    %v1487 = vextract.high.u32 %v1485
    %v1488 = vmul.u32 %v1481, %v1472
    %v1489 = vadd.s32 %v1484, %v1486
    %vm1490 = vc.u32 %v1484, %v1486
    %v1491 = vadd.s32 %v1487, 1
    %v1492 = vsel %vm1490, %v1491, %v1487
    %v1493 = vadd.s32 %v1488, %v1492
    %v1494 = vadd.s32 %v1493, 536870912
    %v1495 = vshrl.u32 %v1494, 30
    %v1496 = vshll.u32 %v1495, 30
    %v1497 = vsub.s32 %v1493, %v1496
    %vm1498 = vcmp.lt.s32.totalorder %v1497, 0
    %v1499 = vsub.s32 0, %v1497
    %v1500 = vsel %vm1498, %v1499, %v1497
    %v1501 = vclz %v1500
    %v1502 = vsub.s32 %v1501, 2
    %vm1503 = vcmp.gt.s32.totalorder 0, %v1502
    %v1504 = vsel %vm1503, 0, %v1502
    %v1505 = vsub.s32 32, %v1504
    %v1506 = vshll.u32 %v1497, %v1504
    %v1507 = vshrl.u32 %v1489, %v1505
    %v1508 = vor.u32 %v1506, %v1507
    %v1509 = vsub.s32 4294967266, %v1504
    %v1510 = vadd.s32 %v1509, 127
    %v1511 = vshll.u32 %v1510, 23
    %v1512 = vor.u32 4788187, %v1511
    %v1513 = vand.u32 2147483647, %v1512
    %v1515 = vcvt.s32.f32 %v1508
    %v1516 = vmul.f32 %v1515, %v1513
    %v1517 = vxor.u32 %v1516, 2147483648
    %v1518 = vsel %vm1435, %v1517, %v1516
    %v1519 = vsub.s32 4, %v1495
    %v1520 = vsel %vm1435, %v1519, %v1495
    %v1521 = vsel %vm1434, %v1107, %v1518
    %v1522 = vsel %vm1434, 0, %v1520
    %v1523 = vcosq.f32.pop %v1521
    %v1524 = vsinq.f32.pop %v1521
    %vm1525 = vweird.f32 %v1107
    %v1526 = vadd.s32 %v1522, 3
    %v1527 = vand.u32 %v1526, 3
    %vm1528 = vcmp.lt.s32.totalorder %v1527, 2
    %vm1529 = vcmp.eq.s32.totalorder %v1527, 0
    %v1530 = vxor.u32 %v1524, 2147483648
    %v1531 = vsel %vm1529, %v1523, %v1530
    %vm1532 = vcmp.eq.s32.totalorder %v1527, 2
    %v1533 = vxor.u32 %v1523, 2147483648
    %v1534 = vsel %vm1532, %v1533, %v1524
    %v1535 = vsel %vm1528, %v1531, %v1534
    %v1536 = vsel %vm1525, nan, %v1535
    %v1537 = vand.u32 2147483647, %v1111
    %vm1538 = vcmp.le.f32.partialorder %v1537, 0.7853982
    %vm1539 = vcmp.lt.s32.totalorder %v1111, 0
    %v1540 = vand.u32 %v1111, 2139095040
    %v1541 = vshrl.u32 %v1540, 23
    %v1542 = vsub.s32 %v1541, 127
    %v1543 = vand.u32 2147483647, %v1111
    %v1544 = vand.u32 %v1543, 8388607
    %v1545 = vor.u32 %v1544, 8388608
    %v1546 = vsub.s32 0, %v1545
    %v1547 = vadd.s32 %v1542, 1
    %vm1548 = vcmp.gt.s32.totalorder %v1547, 0
    %v1549 = vsel %vm1548, %v1547, 0
    %v1550 = vshrl.u32 %v1549, 5
    %v1551 = vand.u32 %v1549, 31
    %v1552 = vsub.s32 32, %v1551
    %v1553 = vshrl.u32 683565275, %v1552
    %v1554 = vshll.u32 683565275, %v1551
    %v1555 = vshrl.u32 2475754826, %v1552
    %v1556 = vor.u32 %v1554, %v1555
    %v1557 = vshll.u32 2475754826, %v1551
    %v1558 = vshrl.u32 2131351028, %v1552
    %v1559 = vor.u32 %v1557, %v1558
    %v1560 = vshll.u32 2131351028, %v1551
    %v1561 = vshrl.u32 2102212464, %v1552
    %v1562 = vor.u32 %v1560, %v1561
    %v1563 = vshll.u32 2102212464, %v1551
    %v1564 = vshrl.u32 920167782, %v1552
    %v1565 = vor.u32 %v1563, %v1564
    %v1566 = vshll.u32 920167782, %v1551
    %v1567 = vshrl.u32 1326507024, %v1552
    %v1568 = vor.u32 %v1566, %v1567
    %vm1569 = vcmp.lt.s32.totalorder %v1550, 1
    %vm1570 = vcmp.lt.s32.totalorder %v1550, 2
    %vm1571 = vcmp.lt.s32.totalorder %v1550, 3
    %vm1572 = vcmp.lt.s32.totalorder %v1550, 4
    %v1573 = vsel %vm1569, %v1553, %v1556
    %v1574 = vsel %vm1572, %v1562, 2102212464
    %v1575 = vsel %vm1571, %v1559, %v1574
    %v1576 = vsel %vm1570, %v1573, %v1575
    %v1577 = vsel %vm1569, %v1556, %v1559
    %v1578 = vsel %vm1572, %v1565, 920167782
    %v1579 = vsel %vm1571, %v1562, %v1578
    %v1580 = vsel %vm1570, %v1577, %v1579
    %v1581 = vsel %vm1569, %v1559, %v1562
    %v1582 = vsel %vm1572, %v1568, 1326507024
    %v1583 = vsel %vm1571, %v1565, %v1582
    %v1584 = vsel %vm1570, %v1581, %v1583
    %v1585 = vshll.u32 %v1545, 8
    %v1586 = vmul.u32.u64.compose %v1585, %v1584
    %v1587 = vextract.low.u32 %v1586
    %v1588 = vextract.high.u32 %v1586
    %v1589 = vmul.u32.u64.compose %v1585, %v1580
    %v1590 = vextract.low.u32 %v1589
    %v1591 = vextract.high.u32 %v1589
    %v1592 = vmul.u32 %v1585, %v1576
    %v1593 = vadd.s32 %v1588, %v1590
    %vm1594 = vc.u32 %v1588, %v1590
    %v1595 = vadd.s32 %v1591, 1
    %v1596 = vsel %vm1594, %v1595, %v1591
    %v1597 = vadd.s32 %v1592, %v1596
    %v1598 = vadd.s32 %v1597, 536870912
    %v1599 = vshrl.u32 %v1598, 30
    %v1600 = vshll.u32 %v1599, 30
    %v1601 = vsub.s32 %v1597, %v1600
    %vm1602 = vcmp.lt.s32.totalorder %v1601, 0
    %v1603 = vsub.s32 0, %v1601
    %v1604 = vsel %vm1602, %v1603, %v1601
    %v1605 = vclz %v1604
    %v1606 = vsub.s32 %v1605, 2
    %vm1607 = vcmp.gt.s32.totalorder 0, %v1606
    %v1608 = vsel %vm1607, 0, %v1606
    %v1609 = vsub.s32 32, %v1608
    %v1610 = vshll.u32 %v1601, %v1608
    %v1611 = vshrl.u32 %v1593, %v1609
    %v1612 = vor.u32 %v1610, %v1611
    %v1613 = vsub.s32 4294967266, %v1608
    %v1614 = vadd.s32 %v1613, 127
    %v1615 = vshll.u32 %v1614, 23
    %v1616 = vor.u32 4788187, %v1615
    %v1617 = vand.u32 2147483647, %v1616
    %v1619 = vcvt.s32.f32 %v1612
    %v1620 = vmul.f32 %v1619, %v1617
    %v1621 = vxor.u32 %v1620, 2147483648
    %v1622 = vsel %vm1539, %v1621, %v1620
    %v1623 = vsub.s32 4, %v1599
    %v1624 = vsel %vm1539, %v1623, %v1599
    %v1625 = vsel %vm1538, %v1111, %v1622
    %v1626 = vsel %vm1538, 0, %v1624
    %v1627 = vcosq.f32.pop %v1625
    %v1628 = vsinq.f32.pop %v1625
    %vm1629 = vweird.f32 %v1111
    %v1630 = vadd.s32 %v1626, 3
    %v1631 = vand.u32 %v1630, 3
    %vm1632 = vcmp.lt.s32.totalorder %v1631, 2
    %vm1633 = vcmp.eq.s32.totalorder %v1631, 0
    %v1634 = vxor.u32 %v1628, 2147483648
    %v1635 = vsel %vm1633, %v1627, %v1634
    %vm1636 = vcmp.eq.s32.totalorder %v1631, 2
    %v1637 = vxor.u32 %v1627, 2147483648
    %v1638 = vsel %vm1636, %v1637, %v1628
    %v1639 = vsel %vm1632, %v1635, %v1638
    %v1640 = vsel %vm1629, nan, %v1639
    %v1641 = vand.u32 2147483647, %v1113
    %vm1642 = vcmp.le.f32.partialorder %v1641, 0.7853982
    %vm1643 = vcmp.lt.s32.totalorder %v1113, 0
    %v1644 = vand.u32 %v1113, 2139095040
    %v1645 = vshrl.u32 %v1644, 23
    %v1646 = vsub.s32 %v1645, 127
    %v1647 = vand.u32 2147483647, %v1113
    %v1648 = vand.u32 %v1647, 8388607
    %v1649 = vor.u32 %v1648, 8388608
    %v1650 = vsub.s32 0, %v1649
    %v1651 = vadd.s32 %v1646, 1
    %vm1652 = vcmp.gt.s32.totalorder %v1651, 0
    %v1653 = vsel %vm1652, %v1651, 0
    %v1654 = vshrl.u32 %v1653, 5
    %v1655 = vand.u32 %v1653, 31
    %v1656 = vsub.s32 32, %v1655
    %v1657 = vshrl.u32 683565275, %v1656
    %v1658 = vshll.u32 683565275, %v1655
    %v1659 = vshrl.u32 2475754826, %v1656
    %v1660 = vor.u32 %v1658, %v1659
    %v1661 = vshll.u32 2475754826, %v1655
    %v1662 = vshrl.u32 2131351028, %v1656
    %v1663 = vor.u32 %v1661, %v1662
    %v1664 = vshll.u32 2131351028, %v1655
    %v1665 = vshrl.u32 2102212464, %v1656
    %v1666 = vor.u32 %v1664, %v1665
    %v1667 = vshll.u32 2102212464, %v1655
    %v1668 = vshrl.u32 920167782, %v1656
    %v1669 = vor.u32 %v1667, %v1668
    %v1670 = vshll.u32 920167782, %v1655
    %v1671 = vshrl.u32 1326507024, %v1656
    %v1672 = vor.u32 %v1670, %v1671
    %vm1673 = vcmp.lt.s32.totalorder %v1654, 1
    %vm1674 = vcmp.lt.s32.totalorder %v1654, 2
    %vm1675 = vcmp.lt.s32.totalorder %v1654, 3
    %vm1676 = vcmp.lt.s32.totalorder %v1654, 4
    %v1677 = vsel %vm1673, %v1657, %v1660
    %v1678 = vsel %vm1676, %v1666, 2102212464
    %v1679 = vsel %vm1675, %v1663, %v1678
    %v1680 = vsel %vm1674, %v1677, %v1679
    %v1681 = vsel %vm1673, %v1660, %v1663
    %v1682 = vsel %vm1676, %v1669, 920167782
    %v1683 = vsel %vm1675, %v1666, %v1682
    %v1684 = vsel %vm1674, %v1681, %v1683
    %v1685 = vsel %vm1673, %v1663, %v1666
    %v1686 = vsel %vm1676, %v1672, 1326507024
    %v1687 = vsel %vm1675, %v1669, %v1686
    %v1688 = vsel %vm1674, %v1685, %v1687
    %v1689 = vshll.u32 %v1649, 8
    %v1690 = vmul.u32.u64.compose %v1689, %v1688
    %v1691 = vextract.low.u32 %v1690
    %v1692 = vextract.high.u32 %v1690
    %v1693 = vmul.u32.u64.compose %v1689, %v1684
    %v1694 = vextract.low.u32 %v1693
    %v1695 = vextract.high.u32 %v1693
    %v1696 = vmul.u32 %v1689, %v1680
    %v1697 = vadd.s32 %v1692, %v1694
    %vm1698 = vc.u32 %v1692, %v1694
    %v1699 = vadd.s32 %v1695, 1
    %v1700 = vsel %vm1698, %v1699, %v1695
    %v1701 = vadd.s32 %v1696, %v1700
    %v1702 = vadd.s32 %v1701, 536870912
    %v1703 = vshrl.u32 %v1702, 30
    %v1704 = vshll.u32 %v1703, 30
    %v1705 = vsub.s32 %v1701, %v1704
    %vm1706 = vcmp.lt.s32.totalorder %v1705, 0
    %v1707 = vsub.s32 0, %v1705
    %v1708 = vsel %vm1706, %v1707, %v1705
    %v1709 = vclz %v1708
    %v1710 = vsub.s32 %v1709, 2
    %vm1711 = vcmp.gt.s32.totalorder 0, %v1710
    %v1712 = vsel %vm1711, 0, %v1710
    %v1713 = vsub.s32 32, %v1712
    %v1714 = vshll.u32 %v1705, %v1712
    %v1715 = vshrl.u32 %v1697, %v1713
    %v1716 = vor.u32 %v1714, %v1715
    %v1717 = vsub.s32 4294967266, %v1712
    %v1718 = vadd.s32 %v1717, 127
    %v1719 = vshll.u32 %v1718, 23
    %v1720 = vor.u32 4788187, %v1719
    %v1721 = vand.u32 2147483647, %v1720
    %v1723 = vcvt.s32.f32 %v1716
    %v1724 = vmul.f32 %v1723, %v1721
    %v1725 = vxor.u32 %v1724, 2147483648
    %v1726 = vsel %vm1643, %v1725, %v1724
    %v1727 = vsub.s32 4, %v1703
    %v1728 = vsel %vm1643, %v1727, %v1703
    %v1729 = vsel %vm1642, %v1113, %v1726
    %v1730 = vsel %vm1642, 0, %v1728
    %v1731 = vcosq.f32.pop %v1729
    %v1732 = vsinq.f32.pop %v1729
    %vm1733 = vweird.f32 %v1113
    %v1734 = vadd.s32 %v1730, 3
    %v1735 = vand.u32 %v1734, 3
    %vm1736 = vcmp.lt.s32.totalorder %v1735, 2
    %vm1737 = vcmp.eq.s32.totalorder %v1735, 0
    %v1738 = vxor.u32 %v1732, 2147483648
    %v1739 = vsel %vm1737, %v1731, %v1738
    %vm1740 = vcmp.eq.s32.totalorder %v1735, 2
    %v1741 = vxor.u32 %v1731, 2147483648
    %v1742 = vsel %vm1740, %v1741, %v1732
    %v1743 = vsel %vm1736, %v1739, %v1742
    %v1744 = vsel %vm1733, nan, %v1743
    %v1745 = vand.u32 2147483647, %v1117
    %vm1746 = vcmp.le.f32.partialorder %v1745, 0.7853982
    %vm1747 = vcmp.lt.s32.totalorder %v1117, 0
    %v1748 = vand.u32 %v1117, 2139095040
    %v1749 = vshrl.u32 %v1748, 23
    %v1750 = vsub.s32 %v1749, 127
    %v1751 = vand.u32 2147483647, %v1117
    %v1752 = vand.u32 %v1751, 8388607
    %v1753 = vor.u32 %v1752, 8388608
    %v1754 = vsub.s32 0, %v1753
    %v1755 = vadd.s32 %v1750, 1
    %vm1756 = vcmp.gt.s32.totalorder %v1755, 0
    %v1757 = vsel %vm1756, %v1755, 0
    %v1758 = vshrl.u32 %v1757, 5
    %v1759 = vand.u32 %v1757, 31
    %v1760 = vsub.s32 32, %v1759
    %v1761 = vshrl.u32 683565275, %v1760
    %v1762 = vshll.u32 683565275, %v1759
    %v1763 = vshrl.u32 2475754826, %v1760
    %v1764 = vor.u32 %v1762, %v1763
    %v1765 = vshll.u32 2475754826, %v1759
    %v1766 = vshrl.u32 2131351028, %v1760
    %v1767 = vor.u32 %v1765, %v1766
    %v1768 = vshll.u32 2131351028, %v1759
    %v1769 = vshrl.u32 2102212464, %v1760
    %v1770 = vor.u32 %v1768, %v1769
    %v1771 = vshll.u32 2102212464, %v1759
    %v1772 = vshrl.u32 920167782, %v1760
    %v1773 = vor.u32 %v1771, %v1772
    %v1774 = vshll.u32 920167782, %v1759
    %v1775 = vshrl.u32 1326507024, %v1760
    %v1776 = vor.u32 %v1774, %v1775
    %vm1777 = vcmp.lt.s32.totalorder %v1758, 1
    %vm1778 = vcmp.lt.s32.totalorder %v1758, 2
    %vm1779 = vcmp.lt.s32.totalorder %v1758, 3
    %vm1780 = vcmp.lt.s32.totalorder %v1758, 4
    %v1781 = vsel %vm1777, %v1761, %v1764
    %v1782 = vsel %vm1780, %v1770, 2102212464
    %v1783 = vsel %vm1779, %v1767, %v1782
    %v1784 = vsel %vm1778, %v1781, %v1783
    %v1785 = vsel %vm1777, %v1764, %v1767
    %v1786 = vsel %vm1780, %v1773, 920167782
    %v1787 = vsel %vm1779, %v1770, %v1786
    %v1788 = vsel %vm1778, %v1785, %v1787
    %v1789 = vsel %vm1777, %v1767, %v1770
    %v1790 = vsel %vm1780, %v1776, 1326507024
    %v1791 = vsel %vm1779, %v1773, %v1790
    %v1792 = vsel %vm1778, %v1789, %v1791
    %v1793 = vshll.u32 %v1753, 8
    %v1794 = vmul.u32.u64.compose %v1793, %v1792
    %v1795 = vextract.low.u32 %v1794
    %v1796 = vextract.high.u32 %v1794
    %v1797 = vmul.u32.u64.compose %v1793, %v1788
    %v1798 = vextract.low.u32 %v1797
    %v1799 = vextract.high.u32 %v1797
    %v1800 = vmul.u32 %v1793, %v1784
    %v1801 = vadd.s32 %v1796, %v1798
    %vm1802 = vc.u32 %v1796, %v1798
    %v1803 = vadd.s32 %v1799, 1
    %v1804 = vsel %vm1802, %v1803, %v1799
    %v1805 = vadd.s32 %v1800, %v1804
    %v1806 = vadd.s32 %v1805, 536870912
    %v1807 = vshrl.u32 %v1806, 30
    %v1808 = vshll.u32 %v1807, 30
    %v1809 = vsub.s32 %v1805, %v1808
    %vm1810 = vcmp.lt.s32.totalorder %v1809, 0
    %v1811 = vsub.s32 0, %v1809
    %v1812 = vsel %vm1810, %v1811, %v1809
    %v1813 = vclz %v1812
    %v1814 = vsub.s32 %v1813, 2
    %vm1815 = vcmp.gt.s32.totalorder 0, %v1814
    %v1816 = vsel %vm1815, 0, %v1814
    %v1817 = vsub.s32 32, %v1816
    %v1818 = vshll.u32 %v1809, %v1816
    %v1819 = vshrl.u32 %v1801, %v1817
    %v1820 = vor.u32 %v1818, %v1819
    %v1821 = vsub.s32 4294967266, %v1816
    %v1822 = vadd.s32 %v1821, 127
    %v1823 = vshll.u32 %v1822, 23
    %v1824 = vor.u32 4788187, %v1823
    %v1825 = vand.u32 2147483647, %v1824
    %v1827 = vcvt.s32.f32 %v1820
    %v1828 = vmul.f32 %v1827, %v1825
    %v1829 = vxor.u32 %v1828, 2147483648
    %v1830 = vsel %vm1747, %v1829, %v1828
    %v1831 = vsub.s32 4, %v1807
    %v1832 = vsel %vm1747, %v1831, %v1807
    %v1833 = vsel %vm1746, %v1117, %v1830
    %v1834 = vsel %vm1746, 0, %v1832
    %v1835 = vcosq.f32.pop %v1833
    %v1836 = vsinq.f32.pop %v1833
    %vm1837 = vweird.f32 %v1117
    %v1838 = vadd.s32 %v1834, 3
    %v1839 = vand.u32 %v1838, 3
    %vm1840 = vcmp.lt.s32.totalorder %v1839, 2
    %vm1841 = vcmp.eq.s32.totalorder %v1839, 0
    %v1842 = vxor.u32 %v1836, 2147483648
    %v1843 = vsel %vm1841, %v1835, %v1842
    %vm1844 = vcmp.eq.s32.totalorder %v1839, 2
    %v1845 = vxor.u32 %v1835, 2147483648
    %v1846 = vsel %vm1844, %v1845, %v1836
    %v1847 = vsel %vm1840, %v1843, %v1846
    %v1848 = vsel %vm1837, nan, %v1847
    %v1849 = vand.u32 2147483647, %v1119
    %vm1850 = vcmp.le.f32.partialorder %v1849, 0.7853982
    %vm1851 = vcmp.lt.s32.totalorder %v1119, 0
    %v1852 = vand.u32 %v1119, 2139095040
    %v1853 = vshrl.u32 %v1852, 23
    %v1854 = vsub.s32 %v1853, 127
    %v1855 = vand.u32 2147483647, %v1119
    %v1856 = vand.u32 %v1855, 8388607
    %v1857 = vor.u32 %v1856, 8388608
    %v1858 = vsub.s32 0, %v1857
    %v1859 = vadd.s32 %v1854, 1
    %vm1860 = vcmp.gt.s32.totalorder %v1859, 0
    %v1861 = vsel %vm1860, %v1859, 0
    %v1862 = vshrl.u32 %v1861, 5
    %v1863 = vand.u32 %v1861, 31
    %v1864 = vsub.s32 32, %v1863
    %v1865 = vshrl.u32 683565275, %v1864
    %v1866 = vshll.u32 683565275, %v1863
    %v1867 = vshrl.u32 2475754826, %v1864
    %v1868 = vor.u32 %v1866, %v1867
    %v1869 = vshll.u32 2475754826, %v1863
    %v1870 = vshrl.u32 2131351028, %v1864
    %v1871 = vor.u32 %v1869, %v1870
    %v1872 = vshll.u32 2131351028, %v1863
    %v1873 = vshrl.u32 2102212464, %v1864
    %v1874 = vor.u32 %v1872, %v1873
    %v1875 = vshll.u32 2102212464, %v1863
    %v1876 = vshrl.u32 920167782, %v1864
    %v1877 = vor.u32 %v1875, %v1876
    %v1878 = vshll.u32 920167782, %v1863
    %v1879 = vshrl.u32 1326507024, %v1864
    %v1880 = vor.u32 %v1878, %v1879
    %vm1881 = vcmp.lt.s32.totalorder %v1862, 1
    %vm1882 = vcmp.lt.s32.totalorder %v1862, 2
    %vm1883 = vcmp.lt.s32.totalorder %v1862, 3
    %vm1884 = vcmp.lt.s32.totalorder %v1862, 4
    %v1885 = vsel %vm1881, %v1865, %v1868
    %v1886 = vsel %vm1884, %v1874, 2102212464
    %v1887 = vsel %vm1883, %v1871, %v1886
    %v1888 = vsel %vm1882, %v1885, %v1887
    %v1889 = vsel %vm1881, %v1868, %v1871
    %v1890 = vsel %vm1884, %v1877, 920167782
    %v1891 = vsel %vm1883, %v1874, %v1890
    %v1892 = vsel %vm1882, %v1889, %v1891
    %v1893 = vsel %vm1881, %v1871, %v1874
    %v1894 = vsel %vm1884, %v1880, 1326507024
    %v1895 = vsel %vm1883, %v1877, %v1894
    %v1896 = vsel %vm1882, %v1893, %v1895
    %v1897 = vshll.u32 %v1857, 8
    %v1898 = vmul.u32.u64.compose %v1897, %v1896
    %v1899 = vextract.low.u32 %v1898
    %v1900 = vextract.high.u32 %v1898
    %v1901 = vmul.u32.u64.compose %v1897, %v1892
    %v1902 = vextract.low.u32 %v1901
    %v1903 = vextract.high.u32 %v1901
    %v1904 = vmul.u32 %v1897, %v1888
    %v1905 = vadd.s32 %v1900, %v1902
    %vm1906 = vc.u32 %v1900, %v1902
    %v1907 = vadd.s32 %v1903, 1
    %v1908 = vsel %vm1906, %v1907, %v1903
    %v1909 = vadd.s32 %v1904, %v1908
    %v1910 = vadd.s32 %v1909, 536870912
    %v1911 = vshrl.u32 %v1910, 30
    %v1912 = vshll.u32 %v1911, 30
    %v1913 = vsub.s32 %v1909, %v1912
    %vm1914 = vcmp.lt.s32.totalorder %v1913, 0
    %v1915 = vsub.s32 0, %v1913
    %v1916 = vsel %vm1914, %v1915, %v1913
    %v1917 = vclz %v1916
    %v1918 = vsub.s32 %v1917, 2
    %vm1919 = vcmp.gt.s32.totalorder 0, %v1918
    %v1920 = vsel %vm1919, 0, %v1918
    %v1921 = vsub.s32 32, %v1920
    %v1922 = vshll.u32 %v1913, %v1920
    %v1923 = vshrl.u32 %v1905, %v1921
    %v1924 = vor.u32 %v1922, %v1923
    %v1925 = vsub.s32 4294967266, %v1920
    %v1926 = vadd.s32 %v1925, 127
    %v1927 = vshll.u32 %v1926, 23
    %v1928 = vor.u32 4788187, %v1927
    %v1929 = vand.u32 2147483647, %v1928
    %v1931 = vcvt.s32.f32 %v1924
    %v1932 = vmul.f32 %v1931, %v1929
    %v1933 = vxor.u32 %v1932, 2147483648
    %v1934 = vsel %vm1851, %v1933, %v1932
    %v1935 = vsub.s32 4, %v1911
    %v1936 = vsel %vm1851, %v1935, %v1911
    %v1937 = vsel %vm1850, %v1119, %v1934
    %v1938 = vsel %vm1850, 0, %v1936
    %v1939 = vcosq.f32.pop %v1937
    %v1940 = vsinq.f32.pop %v1937
    %vm1941 = vweird.f32 %v1119
    %v1942 = vadd.s32 %v1938, 3
    %v1943 = vand.u32 %v1942, 3
    %vm1944 = vcmp.lt.s32.totalorder %v1943, 2
    %vm1945 = vcmp.eq.s32.totalorder %v1943, 0
    %v1946 = vxor.u32 %v1940, 2147483648
    %v1947 = vsel %vm1945, %v1939, %v1946
    %vm1948 = vcmp.eq.s32.totalorder %v1943, 2
    %v1949 = vxor.u32 %v1939, 2147483648
    %v1950 = vsel %vm1948, %v1949, %v1940
    %v1951 = vsel %vm1944, %v1947, %v1950
    %v1952 = vsel %vm1941, nan, %v1951
    %v1953 = vadd.f32 %v1224, %v26
    %v1954 = vadd.f32 %v1328, %v27
    %v1955 = vadd.f32 %v1432, 0.0
    %v1956 = vadd.f32 %v1536, 0.0
    %v1957 = vadd.f32 %v1640, 0.0
    %v1958 = vadd.f32 %v1744, 0.0
    %v1959 = vadd.f32 %v1848, 0.0
    %v1960 = vadd.f32 %v1952, 0.0
    %s1961 = scalar_lea.vmem %s1, 64
    %v1962 = vld [vmem:[%s1961] sm:$0xff]
    %v1963 = vld [vmem:[%s1961 + $0x8] sm:$0xff]
    %v1964 = vld [vmem:[%s1961 + $0x10] sm:$0xff]
    %v1965 = vld [vmem:[%s1961 + $0x18] sm:$0xff]
    %s1966 = scalar_lea.vmem %s2, 64
    %v1967 = vld [vmem:[%s1966] sm:$0xff]
    %v1968 = vld [vmem:[%s1966 + $0x8] sm:$0xff]
    %v1969 = vld [vmem:[%s1966 + $0x10] sm:$0xff]
    %v1970 = vld [vmem:[%s1966 + $0x18] sm:$0xff]
    %s1971 = scalar_lea.vmem %s1, 96
    %v1972 = vld [vmem:[%s1971] sm:$0xff]
    %v1973 = vld [vmem:[%s1971 + $0x8] sm:$0xff]
    %v1974 = vld [vmem:[%s1971 + $0x10] sm:$0xff]
    %v1975 = vld [vmem:[%s1971 + $0x18] sm:$0xff]
    %s1976 = scalar_lea.vmem %s2, 96
    %v1977 = vld [vmem:[%s1976] sm:$0xff]
    %v1978 = vld [vmem:[%s1976 + $0x8] sm:$0xff]
    %v1979 = vld [vmem:[%s1976 + $0x10] sm:$0xff]
    %v1980 = vld [vmem:[%s1976 + $0x18] sm:$0xff]
    %1982 = vset.pattern.permute.xlu0 0
    %1983 = vperm.xlu0 %1982, %v1967
    %v1984 = vpop.permute.xlu0 %1983
    %1987 = vset.pattern.permute.xlu0 0
    %1988 = vperm.xlu0 %1987, %v1968
    %v1989 = vpop.permute.xlu0 %1988
    %1992 = vset.pattern.permute.xlu0 0
    %1993 = vperm.xlu0 %1992, %v1969
    %v1994 = vpop.permute.xlu0 %1993
    %1997 = vset.pattern.permute.xlu0 0
    %1998 = vperm.xlu0 %1997, %v1970
    %v1999 = vpop.permute.xlu0 %1998
    %v2002 = vsel %vm66, %v1962, 0
    %v2005 = vsel %vm66, %v1963, 0
    %v2008 = vsel %vm66, %v1964, 0
    %v2011 = vsel %vm66, %v1965, 0
    %2013 = vmatprep.subr.mxu0 0.0
    %2014 = vmatpush1.msra.mxu0 0.0
    %2015 = vmatprep.subr.mxu0 0.0
    %2016 = vmatpush1.msra.mxu0 0.0
    %2017 = vmatprep.subr.mxu0 0.0
    %2018 = vmatpush1.msra.mxu0 0.0
    %2019 = vmatprep.subr.mxu0 0.0
    %2020 = vmatpush1.msra.mxu0 0.0
    %2021 = vmatprep.subr.mxu0 0.0
    %2022 = vmatpush1.msra.mxu0 0.0
    %2023 = vmatprep.subr.mxu0 0.0
    %2024 = vmatpush1.msra.mxu0 0.0
    %2025 = vmatprep.subr.mxu0 0.0
    %2026 = vmatpush1.msra.mxu0 0.0
    %2027 = vmatprep.subr.mxu0 0.0
    %2028 = vmatpush1.msra.mxu0 0.0
    %2029 = vmatprep.subr.mxu0 0.0
    %2030 = vmatpush1.msra.mxu0 0.0
    %2031 = vmatprep.subr.mxu0 0.0
    %2032 = vmatpush1.msra.mxu0 0.0
    %2033 = vmatprep.subr.mxu0 0.0
    %2034 = vmatpush1.msra.mxu0 0.0
    %2035 = vmatprep.subr.mxu0 0.0
    %2036 = vmatpush1.msra.mxu0 0.0
    %2037 = vmatprep.subr.mxu0 %v1960
    %2038 = vmatpush1.msra.mxu0 %v1959
    %2039 = vmatprep.subr.mxu0 %v1958
    %2040 = vmatpush1.msra.mxu0 %v1957
    %2041 = vmatprep.subr.mxu0 %v1956
    %2042 = vmatpush1.msra.mxu0 %v1955
    %2043 = vmatprep.subr.mxu0 %v1954
    %2044 = vmatpush1.msra.mxu0 %v1953
    %2045 = vmatprep.subr.mxu0 0.0
    %2046 = vmatpush2.msra.mxu0 0.0
    %2047 = vmatprep.subr.mxu0 0.0
    %2048 = vmatpush2.msra.mxu0 0.0
    %2049 = vmatprep.subr.mxu0 0.0
    %2050 = vmatpush2.msra.mxu0 0.0
    %2051 = vmatprep.subr.mxu0 0.0
    %2052 = vmatpush2.msra.mxu0 0.0
    %2053 = vmatprep.subr.mxu0 0.0
    %2054 = vmatpush2.msra.mxu0 0.0
    %2055 = vmatprep.subr.mxu0 0.0
    %2056 = vmatpush2.msra.mxu0 0.0
    %2057 = vmatprep.subr.mxu0 0.0
    %2058 = vmatpush2.msra.mxu0 0.0
    %2059 = vmatprep.subr.mxu0 0.0
    %2060 = vmatpush2.msra.mxu0 0.0
    %2061 = vmatprep.subr.mxu0 0.0
    %2062 = vmatpush2.msra.mxu0 0.0
    %2063 = vmatprep.subr.mxu0 0.0
    %2064 = vmatpush2.msra.mxu0 0.0
    %2065 = vmatprep.subr.mxu0 0.0
    %2066 = vmatpush2.msra.mxu0 0.0
    %2067 = vmatprep.subr.mxu0 0.0
    %2068 = vmatpush2.msra.mxu0 0.0
    %2069 = vmatprep.subr.mxu0 0.0
    %2070 = vmatpush2.msra.mxu0 0.0
    %2071 = vmatprep.subr.mxu0 0.0
    %2072 = vmatpush2.msra.mxu0 0.0
    %2073 = vmatprep.subr.mxu0 0.0
    %2074 = vmatpush2.msra.mxu0 0.0
    %2075 = vmatprep.subr.mxu0 0.0
    %2076 = vmatpush2.msra.mxu0 0.0
    %2077 = vmatprep.mubr.f32.mxu0 0.0
    %2078 = vmatmul.mubr.f32.gmra.mxu0 %v2002
    %v2079 = vpop.f32.mrf.mxu0
    %v2080 = vadd.f32 %v1984, %v2079
    %v2081 = vpop.f32.mrf.mxu0
    %v2082 = vadd.f32 %v1984, %v2081
    %2083 = vmatprep.mubr.f32.mxu0 0.0
    %2084 = vmatmul.mubr.f32.gmra.mxu0 %v2005
    %v2085 = vpop.f32.mrf.mxu0
    %v2086 = vadd.f32 %v1989, %v2085
    %v2087 = vpop.f32.mrf.mxu0
    %v2088 = vadd.f32 %v1989, %v2087
    %2089 = vmatprep.mubr.f32.mxu0 0.0
    %2090 = vmatmul.mubr.f32.gmra.mxu0 %v2008
    %v2091 = vpop.f32.mrf.mxu0
    %v2092 = vadd.f32 %v1994, %v2091
    %v2093 = vpop.f32.mrf.mxu0
    %v2094 = vadd.f32 %v1994, %v2093
    %2095 = vmatprep.mubr.f32.mxu0 0.0
    %2096 = vmatmul.mubr.f32.gmra.mxu0 %v2011
    %v2097 = vpop.f32.mrf.mxu0
    %v2098 = vadd.f32 %v1999, %v2097
    %v2099 = vpop.f32.mrf.mxu0
    %v2100 = vadd.f32 %v1999, %v2099
    %2101 = vdwg.mxu0
    %v2102 = vand.u32 2147483647, %v2080
    %vm2103 = vcmp.le.f32.partialorder %v2102, 0.7853982
    %vm2104 = vcmp.lt.s32.totalorder %v2080, 0
    %v2105 = vand.u32 %v2080, 2139095040
    %v2106 = vshrl.u32 %v2105, 23
    %v2107 = vsub.s32 %v2106, 127
    %v2108 = vand.u32 2147483647, %v2080
    %v2109 = vand.u32 %v2108, 8388607
    %v2110 = vor.u32 %v2109, 8388608
    %v2111 = vsub.s32 0, %v2110
    %v2112 = vadd.s32 %v2107, 1
    %vm2113 = vcmp.gt.s32.totalorder %v2112, 0
    %v2114 = vsel %vm2113, %v2112, 0
    %v2115 = vshrl.u32 %v2114, 5
    %v2116 = vand.u32 %v2114, 31
    %v2117 = vsub.s32 32, %v2116
    %v2118 = vshrl.u32 683565275, %v2117
    %v2119 = vshll.u32 683565275, %v2116
    %v2120 = vshrl.u32 2475754826, %v2117
    %v2121 = vor.u32 %v2119, %v2120
    %v2122 = vshll.u32 2475754826, %v2116
    %v2123 = vshrl.u32 2131351028, %v2117
    %v2124 = vor.u32 %v2122, %v2123
    %v2125 = vshll.u32 2131351028, %v2116
    %v2126 = vshrl.u32 2102212464, %v2117
    %v2127 = vor.u32 %v2125, %v2126
    %v2128 = vshll.u32 2102212464, %v2116
    %v2129 = vshrl.u32 920167782, %v2117
    %v2130 = vor.u32 %v2128, %v2129
    %v2131 = vshll.u32 920167782, %v2116
    %v2132 = vshrl.u32 1326507024, %v2117
    %v2133 = vor.u32 %v2131, %v2132
    %vm2134 = vcmp.lt.s32.totalorder %v2115, 1
    %vm2135 = vcmp.lt.s32.totalorder %v2115, 2
    %vm2136 = vcmp.lt.s32.totalorder %v2115, 3
    %vm2137 = vcmp.lt.s32.totalorder %v2115, 4
    %v2138 = vsel %vm2134, %v2118, %v2121
    %v2139 = vsel %vm2137, %v2127, 2102212464
    %v2140 = vsel %vm2136, %v2124, %v2139
    %v2141 = vsel %vm2135, %v2138, %v2140
    %v2142 = vsel %vm2134, %v2121, %v2124
    %v2143 = vsel %vm2137, %v2130, 920167782
    %v2144 = vsel %vm2136, %v2127, %v2143
    %v2145 = vsel %vm2135, %v2142, %v2144
    %v2146 = vsel %vm2134, %v2124, %v2127
    %v2147 = vsel %vm2137, %v2133, 1326507024
    %v2148 = vsel %vm2136, %v2130, %v2147
    %v2149 = vsel %vm2135, %v2146, %v2148
    %v2150 = vshll.u32 %v2110, 8
    %v2151 = vmul.u32.u64.compose %v2150, %v2149
    %v2152 = vextract.low.u32 %v2151
    %v2153 = vextract.high.u32 %v2151
    %v2154 = vmul.u32.u64.compose %v2150, %v2145
    %v2155 = vextract.low.u32 %v2154
    %v2156 = vextract.high.u32 %v2154
    %v2157 = vmul.u32 %v2150, %v2141
    %v2158 = vadd.s32 %v2153, %v2155
    %vm2159 = vc.u32 %v2153, %v2155
    %v2160 = vadd.s32 %v2156, 1
    %v2161 = vsel %vm2159, %v2160, %v2156
    %v2162 = vadd.s32 %v2157, %v2161
    %v2163 = vadd.s32 %v2162, 536870912
    %v2164 = vshrl.u32 %v2163, 30
    %v2165 = vshll.u32 %v2164, 30
    %v2166 = vsub.s32 %v2162, %v2165
    %vm2167 = vcmp.lt.s32.totalorder %v2166, 0
    %v2168 = vsub.s32 0, %v2166
    %v2169 = vsel %vm2167, %v2168, %v2166
    %v2170 = vclz %v2169
    %v2171 = vsub.s32 %v2170, 2
    %vm2172 = vcmp.gt.s32.totalorder 0, %v2171
    %v2173 = vsel %vm2172, 0, %v2171
    %v2174 = vsub.s32 32, %v2173
    %v2175 = vshll.u32 %v2166, %v2173
    %v2176 = vshrl.u32 %v2158, %v2174
    %v2177 = vor.u32 %v2175, %v2176
    %v2178 = vsub.s32 4294967266, %v2173
    %v2179 = vadd.s32 %v2178, 127
    %v2180 = vshll.u32 %v2179, 23
    %v2181 = vor.u32 4788187, %v2180
    %v2182 = vand.u32 2147483647, %v2181
    %v2184 = vcvt.s32.f32 %v2177
    %v2185 = vmul.f32 %v2184, %v2182
    %v2186 = vxor.u32 %v2185, 2147483648
    %v2187 = vsel %vm2104, %v2186, %v2185
    %v2188 = vsub.s32 4, %v2164
    %v2189 = vsel %vm2104, %v2188, %v2164
    %v2190 = vsel %vm2103, %v2080, %v2187
    %v2191 = vsel %vm2103, 0, %v2189
    %v2192 = vcosq.f32.pop %v2190
    %v2193 = vsinq.f32.pop %v2190
    %vm2194 = vweird.f32 %v2080
    %v2195 = vadd.s32 %v2191, 3
    %v2196 = vand.u32 %v2195, 3
    %vm2197 = vcmp.lt.s32.totalorder %v2196, 2
    %vm2198 = vcmp.eq.s32.totalorder %v2196, 0
    %v2199 = vxor.u32 %v2193, 2147483648
    %v2200 = vsel %vm2198, %v2192, %v2199
    %vm2201 = vcmp.eq.s32.totalorder %v2196, 2
    %v2202 = vxor.u32 %v2192, 2147483648
    %v2203 = vsel %vm2201, %v2202, %v2193
    %v2204 = vsel %vm2197, %v2200, %v2203
    %v2205 = vsel %vm2194, nan, %v2204
    %v2206 = vand.u32 2147483647, %v2082
    %vm2207 = vcmp.le.f32.partialorder %v2206, 0.7853982
    %vm2208 = vcmp.lt.s32.totalorder %v2082, 0
    %v2209 = vand.u32 %v2082, 2139095040
    %v2210 = vshrl.u32 %v2209, 23
    %v2211 = vsub.s32 %v2210, 127
    %v2212 = vand.u32 2147483647, %v2082
    %v2213 = vand.u32 %v2212, 8388607
    %v2214 = vor.u32 %v2213, 8388608
    %v2215 = vsub.s32 0, %v2214
    %v2216 = vadd.s32 %v2211, 1
    %vm2217 = vcmp.gt.s32.totalorder %v2216, 0
    %v2218 = vsel %vm2217, %v2216, 0
    %v2219 = vshrl.u32 %v2218, 5
    %v2220 = vand.u32 %v2218, 31
    %v2221 = vsub.s32 32, %v2220
    %v2222 = vshrl.u32 683565275, %v2221
    %v2223 = vshll.u32 683565275, %v2220
    %v2224 = vshrl.u32 2475754826, %v2221
    %v2225 = vor.u32 %v2223, %v2224
    %v2226 = vshll.u32 2475754826, %v2220
    %v2227 = vshrl.u32 2131351028, %v2221
    %v2228 = vor.u32 %v2226, %v2227
    %v2229 = vshll.u32 2131351028, %v2220
    %v2230 = vshrl.u32 2102212464, %v2221
    %v2231 = vor.u32 %v2229, %v2230
    %v2232 = vshll.u32 2102212464, %v2220
    %v2233 = vshrl.u32 920167782, %v2221
    %v2234 = vor.u32 %v2232, %v2233
    %v2235 = vshll.u32 920167782, %v2220
    %v2236 = vshrl.u32 1326507024, %v2221
    %v2237 = vor.u32 %v2235, %v2236
    %vm2238 = vcmp.lt.s32.totalorder %v2219, 1
    %vm2239 = vcmp.lt.s32.totalorder %v2219, 2
    %vm2240 = vcmp.lt.s32.totalorder %v2219, 3
    %vm2241 = vcmp.lt.s32.totalorder %v2219, 4
    %v2242 = vsel %vm2238, %v2222, %v2225
    %v2243 = vsel %vm2241, %v2231, 2102212464
    %v2244 = vsel %vm2240, %v2228, %v2243
    %v2245 = vsel %vm2239, %v2242, %v2244
    %v2246 = vsel %vm2238, %v2225, %v2228
    %v2247 = vsel %vm2241, %v2234, 920167782
    %v2248 = vsel %vm2240, %v2231, %v2247
    %v2249 = vsel %vm2239, %v2246, %v2248
    %v2250 = vsel %vm2238, %v2228, %v2231
    %v2251 = vsel %vm2241, %v2237, 1326507024
    %v2252 = vsel %vm2240, %v2234, %v2251
    %v2253 = vsel %vm2239, %v2250, %v2252
    %v2254 = vshll.u32 %v2214, 8
    %v2255 = vmul.u32.u64.compose %v2254, %v2253
    %v2256 = vextract.low.u32 %v2255
    %v2257 = vextract.high.u32 %v2255
    %v2258 = vmul.u32.u64.compose %v2254, %v2249
    %v2259 = vextract.low.u32 %v2258
    %v2260 = vextract.high.u32 %v2258
    %v2261 = vmul.u32 %v2254, %v2245
    %v2262 = vadd.s32 %v2257, %v2259
    %vm2263 = vc.u32 %v2257, %v2259
    %v2264 = vadd.s32 %v2260, 1
    %v2265 = vsel %vm2263, %v2264, %v2260
    %v2266 = vadd.s32 %v2261, %v2265
    %v2267 = vadd.s32 %v2266, 536870912
    %v2268 = vshrl.u32 %v2267, 30
    %v2269 = vshll.u32 %v2268, 30
    %v2270 = vsub.s32 %v2266, %v2269
    %vm2271 = vcmp.lt.s32.totalorder %v2270, 0
    %v2272 = vsub.s32 0, %v2270
    %v2273 = vsel %vm2271, %v2272, %v2270
    %v2274 = vclz %v2273
    %v2275 = vsub.s32 %v2274, 2
    %vm2276 = vcmp.gt.s32.totalorder 0, %v2275
    %v2277 = vsel %vm2276, 0, %v2275
    %v2278 = vsub.s32 32, %v2277
    %v2279 = vshll.u32 %v2270, %v2277
    %v2280 = vshrl.u32 %v2262, %v2278
    %v2281 = vor.u32 %v2279, %v2280
    %v2282 = vsub.s32 4294967266, %v2277
    %v2283 = vadd.s32 %v2282, 127
    %v2284 = vshll.u32 %v2283, 23
    %v2285 = vor.u32 4788187, %v2284
    %v2286 = vand.u32 2147483647, %v2285
    %v2288 = vcvt.s32.f32 %v2281
    %v2289 = vmul.f32 %v2288, %v2286
    %v2290 = vxor.u32 %v2289, 2147483648
    %v2291 = vsel %vm2208, %v2290, %v2289
    %v2292 = vsub.s32 4, %v2268
    %v2293 = vsel %vm2208, %v2292, %v2268
    %v2294 = vsel %vm2207, %v2082, %v2291
    %v2295 = vsel %vm2207, 0, %v2293
    %v2296 = vcosq.f32.pop %v2294
    %v2297 = vsinq.f32.pop %v2294
    %vm2298 = vweird.f32 %v2082
    %v2299 = vadd.s32 %v2295, 3
    %v2300 = vand.u32 %v2299, 3
    %vm2301 = vcmp.lt.s32.totalorder %v2300, 2
    %vm2302 = vcmp.eq.s32.totalorder %v2300, 0
    %v2303 = vxor.u32 %v2297, 2147483648
    %v2304 = vsel %vm2302, %v2296, %v2303
    %vm2305 = vcmp.eq.s32.totalorder %v2300, 2
    %v2306 = vxor.u32 %v2296, 2147483648
    %v2307 = vsel %vm2305, %v2306, %v2297
    %v2308 = vsel %vm2301, %v2304, %v2307
    %v2309 = vsel %vm2298, nan, %v2308
    %v2310 = vand.u32 2147483647, %v2086
    %vm2311 = vcmp.le.f32.partialorder %v2310, 0.7853982
    %vm2312 = vcmp.lt.s32.totalorder %v2086, 0
    %v2313 = vand.u32 %v2086, 2139095040
    %v2314 = vshrl.u32 %v2313, 23
    %v2315 = vsub.s32 %v2314, 127
    %v2316 = vand.u32 2147483647, %v2086
    %v2317 = vand.u32 %v2316, 8388607
    %v2318 = vor.u32 %v2317, 8388608
    %v2319 = vsub.s32 0, %v2318
    %v2320 = vadd.s32 %v2315, 1
    %vm2321 = vcmp.gt.s32.totalorder %v2320, 0
    %v2322 = vsel %vm2321, %v2320, 0
    %v2323 = vshrl.u32 %v2322, 5
    %v2324 = vand.u32 %v2322, 31
    %v2325 = vsub.s32 32, %v2324
    %v2326 = vshrl.u32 683565275, %v2325
    %v2327 = vshll.u32 683565275, %v2324
    %v2328 = vshrl.u32 2475754826, %v2325
    %v2329 = vor.u32 %v2327, %v2328
    %v2330 = vshll.u32 2475754826, %v2324
    %v2331 = vshrl.u32 2131351028, %v2325
    %v2332 = vor.u32 %v2330, %v2331
    %v2333 = vshll.u32 2131351028, %v2324
    %v2334 = vshrl.u32 2102212464, %v2325
    %v2335 = vor.u32 %v2333, %v2334
    %v2336 = vshll.u32 2102212464, %v2324
    %v2337 = vshrl.u32 920167782, %v2325
    %v2338 = vor.u32 %v2336, %v2337
    %v2339 = vshll.u32 920167782, %v2324
    %v2340 = vshrl.u32 1326507024, %v2325
    %v2341 = vor.u32 %v2339, %v2340
    %vm2342 = vcmp.lt.s32.totalorder %v2323, 1
    %vm2343 = vcmp.lt.s32.totalorder %v2323, 2
    %vm2344 = vcmp.lt.s32.totalorder %v2323, 3
    %vm2345 = vcmp.lt.s32.totalorder %v2323, 4
    %v2346 = vsel %vm2342, %v2326, %v2329
    %v2347 = vsel %vm2345, %v2335, 2102212464
    %v2348 = vsel %vm2344, %v2332, %v2347
    %v2349 = vsel %vm2343, %v2346, %v2348
    %v2350 = vsel %vm2342, %v2329, %v2332
    %v2351 = vsel %vm2345, %v2338, 920167782
    %v2352 = vsel %vm2344, %v2335, %v2351
    %v2353 = vsel %vm2343, %v2350, %v2352
    %v2354 = vsel %vm2342, %v2332, %v2335
    %v2355 = vsel %vm2345, %v2341, 1326507024
    %v2356 = vsel %vm2344, %v2338, %v2355
    %v2357 = vsel %vm2343, %v2354, %v2356
    %v2358 = vshll.u32 %v2318, 8
    %v2359 = vmul.u32.u64.compose %v2358, %v2357
    %v2360 = vextract.low.u32 %v2359
    %v2361 = vextract.high.u32 %v2359
    %v2362 = vmul.u32.u64.compose %v2358, %v2353
    %v2363 = vextract.low.u32 %v2362
    %v2364 = vextract.high.u32 %v2362
    %v2365 = vmul.u32 %v2358, %v2349
    %v2366 = vadd.s32 %v2361, %v2363
    %vm2367 = vc.u32 %v2361, %v2363
    %v2368 = vadd.s32 %v2364, 1
    %v2369 = vsel %vm2367, %v2368, %v2364
    %v2370 = vadd.s32 %v2365, %v2369
    %v2371 = vadd.s32 %v2370, 536870912
    %v2372 = vshrl.u32 %v2371, 30
    %v2373 = vshll.u32 %v2372, 30
    %v2374 = vsub.s32 %v2370, %v2373
    %vm2375 = vcmp.lt.s32.totalorder %v2374, 0
    %v2376 = vsub.s32 0, %v2374
    %v2377 = vsel %vm2375, %v2376, %v2374
    %v2378 = vclz %v2377
    %v2379 = vsub.s32 %v2378, 2
    %vm2380 = vcmp.gt.s32.totalorder 0, %v2379
    %v2381 = vsel %vm2380, 0, %v2379
    %v2382 = vsub.s32 32, %v2381
    %v2383 = vshll.u32 %v2374, %v2381
    %v2384 = vshrl.u32 %v2366, %v2382
    %v2385 = vor.u32 %v2383, %v2384
    %v2386 = vsub.s32 4294967266, %v2381
    %v2387 = vadd.s32 %v2386, 127
    %v2388 = vshll.u32 %v2387, 23
    %v2389 = vor.u32 4788187, %v2388
    %v2390 = vand.u32 2147483647, %v2389
    %v2392 = vcvt.s32.f32 %v2385
    %v2393 = vmul.f32 %v2392, %v2390
    %v2394 = vxor.u32 %v2393, 2147483648
    %v2395 = vsel %vm2312, %v2394, %v2393
    %v2396 = vsub.s32 4, %v2372
    %v2397 = vsel %vm2312, %v2396, %v2372
    %v2398 = vsel %vm2311, %v2086, %v2395
    %v2399 = vsel %vm2311, 0, %v2397
    %v2400 = vcosq.f32.pop %v2398
    %v2401 = vsinq.f32.pop %v2398
    %vm2402 = vweird.f32 %v2086
    %v2403 = vadd.s32 %v2399, 3
    %v2404 = vand.u32 %v2403, 3
    %vm2405 = vcmp.lt.s32.totalorder %v2404, 2
    %vm2406 = vcmp.eq.s32.totalorder %v2404, 0
    %v2407 = vxor.u32 %v2401, 2147483648
    %v2408 = vsel %vm2406, %v2400, %v2407
    %vm2409 = vcmp.eq.s32.totalorder %v2404, 2
    %v2410 = vxor.u32 %v2400, 2147483648
    %v2411 = vsel %vm2409, %v2410, %v2401
    %v2412 = vsel %vm2405, %v2408, %v2411
    %v2413 = vsel %vm2402, nan, %v2412
    %v2414 = vand.u32 2147483647, %v2088
    %vm2415 = vcmp.le.f32.partialorder %v2414, 0.7853982
    %vm2416 = vcmp.lt.s32.totalorder %v2088, 0
    %v2417 = vand.u32 %v2088, 2139095040
    %v2418 = vshrl.u32 %v2417, 23
    %v2419 = vsub.s32 %v2418, 127
    %v2420 = vand.u32 2147483647, %v2088
    %v2421 = vand.u32 %v2420, 8388607
    %v2422 = vor.u32 %v2421, 8388608
    %v2423 = vsub.s32 0, %v2422
    %v2424 = vadd.s32 %v2419, 1
    %vm2425 = vcmp.gt.s32.totalorder %v2424, 0
    %v2426 = vsel %vm2425, %v2424, 0
    %v2427 = vshrl.u32 %v2426, 5
    %v2428 = vand.u32 %v2426, 31
    %v2429 = vsub.s32 32, %v2428
    %v2430 = vshrl.u32 683565275, %v2429
    %v2431 = vshll.u32 683565275, %v2428
    %v2432 = vshrl.u32 2475754826, %v2429
    %v2433 = vor.u32 %v2431, %v2432
    %v2434 = vshll.u32 2475754826, %v2428
    %v2435 = vshrl.u32 2131351028, %v2429
    %v2436 = vor.u32 %v2434, %v2435
    %v2437 = vshll.u32 2131351028, %v2428
    %v2438 = vshrl.u32 2102212464, %v2429
    %v2439 = vor.u32 %v2437, %v2438
    %v2440 = vshll.u32 2102212464, %v2428
    %v2441 = vshrl.u32 920167782, %v2429
    %v2442 = vor.u32 %v2440, %v2441
    %v2443 = vshll.u32 920167782, %v2428
    %v2444 = vshrl.u32 1326507024, %v2429
    %v2445 = vor.u32 %v2443, %v2444
    %vm2446 = vcmp.lt.s32.totalorder %v2427, 1
    %vm2447 = vcmp.lt.s32.totalorder %v2427, 2
    %vm2448 = vcmp.lt.s32.totalorder %v2427, 3
    %vm2449 = vcmp.lt.s32.totalorder %v2427, 4
    %v2450 = vsel %vm2446, %v2430, %v2433
    %v2451 = vsel %vm2449, %v2439, 2102212464
    %v2452 = vsel %vm2448, %v2436, %v2451
    %v2453 = vsel %vm2447, %v2450, %v2452
    %v2454 = vsel %vm2446, %v2433, %v2436
    %v2455 = vsel %vm2449, %v2442, 920167782
    %v2456 = vsel %vm2448, %v2439, %v2455
    %v2457 = vsel %vm2447, %v2454, %v2456
    %v2458 = vsel %vm2446, %v2436, %v2439
    %v2459 = vsel %vm2449, %v2445, 1326507024
    %v2460 = vsel %vm2448, %v2442, %v2459
    %v2461 = vsel %vm2447, %v2458, %v2460
    %v2462 = vshll.u32 %v2422, 8
    %v2463 = vmul.u32.u64.compose %v2462, %v2461
    %v2464 = vextract.low.u32 %v2463
    %v2465 = vextract.high.u32 %v2463
    %v2466 = vmul.u32.u64.compose %v2462, %v2457
    %v2467 = vextract.low.u32 %v2466
    %v2468 = vextract.high.u32 %v2466
    %v2469 = vmul.u32 %v2462, %v2453
    %v2470 = vadd.s32 %v2465, %v2467
    %vm2471 = vc.u32 %v2465, %v2467
    %v2472 = vadd.s32 %v2468, 1
    %v2473 = vsel %vm2471, %v2472, %v2468
    %v2474 = vadd.s32 %v2469, %v2473
    %v2475 = vadd.s32 %v2474, 536870912
    %v2476 = vshrl.u32 %v2475, 30
    %v2477 = vshll.u32 %v2476, 30
    %v2478 = vsub.s32 %v2474, %v2477
    %vm2479 = vcmp.lt.s32.totalorder %v2478, 0
    %v2480 = vsub.s32 0, %v2478
    %v2481 = vsel %vm2479, %v2480, %v2478
    %v2482 = vclz %v2481
    %v2483 = vsub.s32 %v2482, 2
    %vm2484 = vcmp.gt.s32.totalorder 0, %v2483
    %v2485 = vsel %vm2484, 0, %v2483
    %v2486 = vsub.s32 32, %v2485
    %v2487 = vshll.u32 %v2478, %v2485
    %v2488 = vshrl.u32 %v2470, %v2486
    %v2489 = vor.u32 %v2487, %v2488
    %v2490 = vsub.s32 4294967266, %v2485
    %v2491 = vadd.s32 %v2490, 127
    %v2492 = vshll.u32 %v2491, 23
    %v2493 = vor.u32 4788187, %v2492
    %v2494 = vand.u32 2147483647, %v2493
    %v2496 = vcvt.s32.f32 %v2489
    %v2497 = vmul.f32 %v2496, %v2494
    %v2498 = vxor.u32 %v2497, 2147483648
    %v2499 = vsel %vm2416, %v2498, %v2497
    %v2500 = vsub.s32 4, %v2476
    %v2501 = vsel %vm2416, %v2500, %v2476
    %v2502 = vsel %vm2415, %v2088, %v2499
    %v2503 = vsel %vm2415, 0, %v2501
    %v2504 = vcosq.f32.pop %v2502
    %v2505 = vsinq.f32.pop %v2502
    %vm2506 = vweird.f32 %v2088
    %v2507 = vadd.s32 %v2503, 3
    %v2508 = vand.u32 %v2507, 3
    %vm2509 = vcmp.lt.s32.totalorder %v2508, 2
    %vm2510 = vcmp.eq.s32.totalorder %v2508, 0
    %v2511 = vxor.u32 %v2505, 2147483648
    %v2512 = vsel %vm2510, %v2504, %v2511
    %vm2513 = vcmp.eq.s32.totalorder %v2508, 2
    %v2514 = vxor.u32 %v2504, 2147483648
    %v2515 = vsel %vm2513, %v2514, %v2505
    %v2516 = vsel %vm2509, %v2512, %v2515
    %v2517 = vsel %vm2506, nan, %v2516
    %v2518 = vand.u32 2147483647, %v2092
    %vm2519 = vcmp.le.f32.partialorder %v2518, 0.7853982
    %vm2520 = vcmp.lt.s32.totalorder %v2092, 0
    %v2521 = vand.u32 %v2092, 2139095040
    %v2522 = vshrl.u32 %v2521, 23
    %v2523 = vsub.s32 %v2522, 127
    %v2524 = vand.u32 2147483647, %v2092
    %v2525 = vand.u32 %v2524, 8388607
    %v2526 = vor.u32 %v2525, 8388608
    %v2527 = vsub.s32 0, %v2526
    %v2528 = vadd.s32 %v2523, 1
    %vm2529 = vcmp.gt.s32.totalorder %v2528, 0
    %v2530 = vsel %vm2529, %v2528, 0
    %v2531 = vshrl.u32 %v2530, 5
    %v2532 = vand.u32 %v2530, 31
    %v2533 = vsub.s32 32, %v2532
    %v2534 = vshrl.u32 683565275, %v2533
    %v2535 = vshll.u32 683565275, %v2532
    %v2536 = vshrl.u32 2475754826, %v2533
    %v2537 = vor.u32 %v2535, %v2536
    %v2538 = vshll.u32 2475754826, %v2532
    %v2539 = vshrl.u32 2131351028, %v2533
    %v2540 = vor.u32 %v2538, %v2539
    %v2541 = vshll.u32 2131351028, %v2532
    %v2542 = vshrl.u32 2102212464, %v2533
    %v2543 = vor.u32 %v2541, %v2542
    %v2544 = vshll.u32 2102212464, %v2532
    %v2545 = vshrl.u32 920167782, %v2533
    %v2546 = vor.u32 %v2544, %v2545
    %v2547 = vshll.u32 920167782, %v2532
    %v2548 = vshrl.u32 1326507024, %v2533
    %v2549 = vor.u32 %v2547, %v2548
    %vm2550 = vcmp.lt.s32.totalorder %v2531, 1
    %vm2551 = vcmp.lt.s32.totalorder %v2531, 2
    %vm2552 = vcmp.lt.s32.totalorder %v2531, 3
    %vm2553 = vcmp.lt.s32.totalorder %v2531, 4
    %v2554 = vsel %vm2550, %v2534, %v2537
    %v2555 = vsel %vm2553, %v2543, 2102212464
    %v2556 = vsel %vm2552, %v2540, %v2555
    %v2557 = vsel %vm2551, %v2554, %v2556
    %v2558 = vsel %vm2550, %v2537, %v2540
    %v2559 = vsel %vm2553, %v2546, 920167782
    %v2560 = vsel %vm2552, %v2543, %v2559
    %v2561 = vsel %vm2551, %v2558, %v2560
    %v2562 = vsel %vm2550, %v2540, %v2543
    %v2563 = vsel %vm2553, %v2549, 1326507024
    %v2564 = vsel %vm2552, %v2546, %v2563
    %v2565 = vsel %vm2551, %v2562, %v2564
    %v2566 = vshll.u32 %v2526, 8
    %v2567 = vmul.u32.u64.compose %v2566, %v2565
    %v2568 = vextract.low.u32 %v2567
    %v2569 = vextract.high.u32 %v2567
    %v2570 = vmul.u32.u64.compose %v2566, %v2561
    %v2571 = vextract.low.u32 %v2570
    %v2572 = vextract.high.u32 %v2570
    %v2573 = vmul.u32 %v2566, %v2557
    %v2574 = vadd.s32 %v2569, %v2571
    %vm2575 = vc.u32 %v2569, %v2571
    %v2576 = vadd.s32 %v2572, 1
    %v2577 = vsel %vm2575, %v2576, %v2572
    %v2578 = vadd.s32 %v2573, %v2577
    %v2579 = vadd.s32 %v2578, 536870912
    %v2580 = vshrl.u32 %v2579, 30
    %v2581 = vshll.u32 %v2580, 30
    %v2582 = vsub.s32 %v2578, %v2581
    %vm2583 = vcmp.lt.s32.totalorder %v2582, 0
    %v2584 = vsub.s32 0, %v2582
    %v2585 = vsel %vm2583, %v2584, %v2582
    %v2586 = vclz %v2585
    %v2587 = vsub.s32 %v2586, 2
    %vm2588 = vcmp.gt.s32.totalorder 0, %v2587
    %v2589 = vsel %vm2588, 0, %v2587
    %v2590 = vsub.s32 32, %v2589
    %v2591 = vshll.u32 %v2582, %v2589
    %v2592 = vshrl.u32 %v2574, %v2590
    %v2593 = vor.u32 %v2591, %v2592
    %v2594 = vsub.s32 4294967266, %v2589
    %v2595 = vadd.s32 %v2594, 127
    %v2596 = vshll.u32 %v2595, 23
    %v2597 = vor.u32 4788187, %v2596
    %v2598 = vand.u32 2147483647, %v2597
    %v2600 = vcvt.s32.f32 %v2593
    %v2601 = vmul.f32 %v2600, %v2598
    %v2602 = vxor.u32 %v2601, 2147483648
    %v2603 = vsel %vm2520, %v2602, %v2601
    %v2604 = vsub.s32 4, %v2580
    %v2605 = vsel %vm2520, %v2604, %v2580
    %v2606 = vsel %vm2519, %v2092, %v2603
    %v2607 = vsel %vm2519, 0, %v2605
    %v2608 = vcosq.f32.pop %v2606
    %v2609 = vsinq.f32.pop %v2606
    %vm2610 = vweird.f32 %v2092
    %v2611 = vadd.s32 %v2607, 3
    %v2612 = vand.u32 %v2611, 3
    %vm2613 = vcmp.lt.s32.totalorder %v2612, 2
    %vm2614 = vcmp.eq.s32.totalorder %v2612, 0
    %v2615 = vxor.u32 %v2609, 2147483648
    %v2616 = vsel %vm2614, %v2608, %v2615
    %vm2617 = vcmp.eq.s32.totalorder %v2612, 2
    %v2618 = vxor.u32 %v2608, 2147483648
    %v2619 = vsel %vm2617, %v2618, %v2609
    %v2620 = vsel %vm2613, %v2616, %v2619
    %v2621 = vsel %vm2610, nan, %v2620
    %v2622 = vand.u32 2147483647, %v2094
    %vm2623 = vcmp.le.f32.partialorder %v2622, 0.7853982
    %vm2624 = vcmp.lt.s32.totalorder %v2094, 0
    %v2625 = vand.u32 %v2094, 2139095040
    %v2626 = vshrl.u32 %v2625, 23
    %v2627 = vsub.s32 %v2626, 127
    %v2628 = vand.u32 2147483647, %v2094
    %v2629 = vand.u32 %v2628, 8388607
    %v2630 = vor.u32 %v2629, 8388608
    %v2631 = vsub.s32 0, %v2630
    %v2632 = vadd.s32 %v2627, 1
    %vm2633 = vcmp.gt.s32.totalorder %v2632, 0
    %v2634 = vsel %vm2633, %v2632, 0
    %v2635 = vshrl.u32 %v2634, 5
    %v2636 = vand.u32 %v2634, 31
    %v2637 = vsub.s32 32, %v2636
    %v2638 = vshrl.u32 683565275, %v2637
    %v2639 = vshll.u32 683565275, %v2636
    %v2640 = vshrl.u32 2475754826, %v2637
    %v2641 = vor.u32 %v2639, %v2640
    %v2642 = vshll.u32 2475754826, %v2636
    %v2643 = vshrl.u32 2131351028, %v2637
    %v2644 = vor.u32 %v2642, %v2643
    %v2645 = vshll.u32 2131351028, %v2636
    %v2646 = vshrl.u32 2102212464, %v2637
    %v2647 = vor.u32 %v2645, %v2646
    %v2648 = vshll.u32 2102212464, %v2636
    %v2649 = vshrl.u32 920167782, %v2637
    %v2650 = vor.u32 %v2648, %v2649
    %v2651 = vshll.u32 920167782, %v2636
    %v2652 = vshrl.u32 1326507024, %v2637
    %v2653 = vor.u32 %v2651, %v2652
    %vm2654 = vcmp.lt.s32.totalorder %v2635, 1
    %vm2655 = vcmp.lt.s32.totalorder %v2635, 2
    %vm2656 = vcmp.lt.s32.totalorder %v2635, 3
    %vm2657 = vcmp.lt.s32.totalorder %v2635, 4
    %v2658 = vsel %vm2654, %v2638, %v2641
    %v2659 = vsel %vm2657, %v2647, 2102212464
    %v2660 = vsel %vm2656, %v2644, %v2659
    %v2661 = vsel %vm2655, %v2658, %v2660
    %v2662 = vsel %vm2654, %v2641, %v2644
    %v2663 = vsel %vm2657, %v2650, 920167782
    %v2664 = vsel %vm2656, %v2647, %v2663
    %v2665 = vsel %vm2655, %v2662, %v2664
    %v2666 = vsel %vm2654, %v2644, %v2647
    %v2667 = vsel %vm2657, %v2653, 1326507024
    %v2668 = vsel %vm2656, %v2650, %v2667
    %v2669 = vsel %vm2655, %v2666, %v2668
    %v2670 = vshll.u32 %v2630, 8
    %v2671 = vmul.u32.u64.compose %v2670, %v2669
    %v2672 = vextract.low.u32 %v2671
    %v2673 = vextract.high.u32 %v2671
    %v2674 = vmul.u32.u64.compose %v2670, %v2665
    %v2675 = vextract.low.u32 %v2674
    %v2676 = vextract.high.u32 %v2674
    %v2677 = vmul.u32 %v2670, %v2661
    %v2678 = vadd.s32 %v2673, %v2675
    %vm2679 = vc.u32 %v2673, %v2675
    %v2680 = vadd.s32 %v2676, 1
    %v2681 = vsel %vm2679, %v2680, %v2676
    %v2682 = vadd.s32 %v2677, %v2681
    %v2683 = vadd.s32 %v2682, 536870912
    %v2684 = vshrl.u32 %v2683, 30
    %v2685 = vshll.u32 %v2684, 30
    %v2686 = vsub.s32 %v2682, %v2685
    %vm2687 = vcmp.lt.s32.totalorder %v2686, 0
    %v2688 = vsub.s32 0, %v2686
    %v2689 = vsel %vm2687, %v2688, %v2686
    %v2690 = vclz %v2689
    %v2691 = vsub.s32 %v2690, 2
    %vm2692 = vcmp.gt.s32.totalorder 0, %v2691
    %v2693 = vsel %vm2692, 0, %v2691
    %v2694 = vsub.s32 32, %v2693
    %v2695 = vshll.u32 %v2686, %v2693
    %v2696 = vshrl.u32 %v2678, %v2694
    %v2697 = vor.u32 %v2695, %v2696
    %v2698 = vsub.s32 4294967266, %v2693
    %v2699 = vadd.s32 %v2698, 127
    %v2700 = vshll.u32 %v2699, 23
    %v2701 = vor.u32 4788187, %v2700
    %v2702 = vand.u32 2147483647, %v2701
    %v2704 = vcvt.s32.f32 %v2697
    %v2705 = vmul.f32 %v2704, %v2702
    %v2706 = vxor.u32 %v2705, 2147483648
    %v2707 = vsel %vm2624, %v2706, %v2705
    %v2708 = vsub.s32 4, %v2684
    %v2709 = vsel %vm2624, %v2708, %v2684
    %v2710 = vsel %vm2623, %v2094, %v2707
    %v2711 = vsel %vm2623, 0, %v2709
    %v2712 = vcosq.f32.pop %v2710
    %v2713 = vsinq.f32.pop %v2710
    %vm2714 = vweird.f32 %v2094
    %v2715 = vadd.s32 %v2711, 3
    %v2716 = vand.u32 %v2715, 3
    %vm2717 = vcmp.lt.s32.totalorder %v2716, 2
    %vm2718 = vcmp.eq.s32.totalorder %v2716, 0
    %v2719 = vxor.u32 %v2713, 2147483648
    %v2720 = vsel %vm2718, %v2712, %v2719
    %vm2721 = vcmp.eq.s32.totalorder %v2716, 2
    %v2722 = vxor.u32 %v2712, 2147483648
    %v2723 = vsel %vm2721, %v2722, %v2713
    %v2724 = vsel %vm2717, %v2720, %v2723
    %v2725 = vsel %vm2714, nan, %v2724
    %v2726 = vand.u32 2147483647, %v2098
    %vm2727 = vcmp.le.f32.partialorder %v2726, 0.7853982
    %vm2728 = vcmp.lt.s32.totalorder %v2098, 0
    %v2729 = vand.u32 %v2098, 2139095040
    %v2730 = vshrl.u32 %v2729, 23
    %v2731 = vsub.s32 %v2730, 127
    %v2732 = vand.u32 2147483647, %v2098
    %v2733 = vand.u32 %v2732, 8388607
    %v2734 = vor.u32 %v2733, 8388608
    %v2735 = vsub.s32 0, %v2734
    %v2736 = vadd.s32 %v2731, 1
    %vm2737 = vcmp.gt.s32.totalorder %v2736, 0
    %v2738 = vsel %vm2737, %v2736, 0
    %v2739 = vshrl.u32 %v2738, 5
    %v2740 = vand.u32 %v2738, 31
    %v2741 = vsub.s32 32, %v2740
    %v2742 = vshrl.u32 683565275, %v2741
    %v2743 = vshll.u32 683565275, %v2740
    %v2744 = vshrl.u32 2475754826, %v2741
    %v2745 = vor.u32 %v2743, %v2744
    %v2746 = vshll.u32 2475754826, %v2740
    %v2747 = vshrl.u32 2131351028, %v2741
    %v2748 = vor.u32 %v2746, %v2747
    %v2749 = vshll.u32 2131351028, %v2740
    %v2750 = vshrl.u32 2102212464, %v2741
    %v2751 = vor.u32 %v2749, %v2750
    %v2752 = vshll.u32 2102212464, %v2740
    %v2753 = vshrl.u32 920167782, %v2741
    %v2754 = vor.u32 %v2752, %v2753
    %v2755 = vshll.u32 920167782, %v2740
    %v2756 = vshrl.u32 1326507024, %v2741
    %v2757 = vor.u32 %v2755, %v2756
    %vm2758 = vcmp.lt.s32.totalorder %v2739, 1
    %vm2759 = vcmp.lt.s32.totalorder %v2739, 2
    %vm2760 = vcmp.lt.s32.totalorder %v2739, 3
    %vm2761 = vcmp.lt.s32.totalorder %v2739, 4
    %v2762 = vsel %vm2758, %v2742, %v2745
    %v2763 = vsel %vm2761, %v2751, 2102212464
    %v2764 = vsel %vm2760, %v2748, %v2763
    %v2765 = vsel %vm2759, %v2762, %v2764
    %v2766 = vsel %vm2758, %v2745, %v2748
    %v2767 = vsel %vm2761, %v2754, 920167782
    %v2768 = vsel %vm2760, %v2751, %v2767
    %v2769 = vsel %vm2759, %v2766, %v2768
    %v2770 = vsel %vm2758, %v2748, %v2751
    %v2771 = vsel %vm2761, %v2757, 1326507024
    %v2772 = vsel %vm2760, %v2754, %v2771
    %v2773 = vsel %vm2759, %v2770, %v2772
    %v2774 = vshll.u32 %v2734, 8
    %v2775 = vmul.u32.u64.compose %v2774, %v2773
    %v2776 = vextract.low.u32 %v2775
    %v2777 = vextract.high.u32 %v2775
    %v2778 = vmul.u32.u64.compose %v2774, %v2769
    %v2779 = vextract.low.u32 %v2778
    %v2780 = vextract.high.u32 %v2778
    %v2781 = vmul.u32 %v2774, %v2765
    %v2782 = vadd.s32 %v2777, %v2779
    %vm2783 = vc.u32 %v2777, %v2779
    %v2784 = vadd.s32 %v2780, 1
    %v2785 = vsel %vm2783, %v2784, %v2780
    %v2786 = vadd.s32 %v2781, %v2785
    %v2787 = vadd.s32 %v2786, 536870912
    %v2788 = vshrl.u32 %v2787, 30
    %v2789 = vshll.u32 %v2788, 30
    %v2790 = vsub.s32 %v2786, %v2789
    %vm2791 = vcmp.lt.s32.totalorder %v2790, 0
    %v2792 = vsub.s32 0, %v2790
    %v2793 = vsel %vm2791, %v2792, %v2790
    %v2794 = vclz %v2793
    %v2795 = vsub.s32 %v2794, 2
    %vm2796 = vcmp.gt.s32.totalorder 0, %v2795
    %v2797 = vsel %vm2796, 0, %v2795
    %v2798 = vsub.s32 32, %v2797
    %v2799 = vshll.u32 %v2790, %v2797
    %v2800 = vshrl.u32 %v2782, %v2798
    %v2801 = vor.u32 %v2799, %v2800
    %v2802 = vsub.s32 4294967266, %v2797
    %v2803 = vadd.s32 %v2802, 127
    %v2804 = vshll.u32 %v2803, 23
    %v2805 = vor.u32 4788187, %v2804
    %v2806 = vand.u32 2147483647, %v2805
    %v2808 = vcvt.s32.f32 %v2801
    %v2809 = vmul.f32 %v2808, %v2806
    %v2810 = vxor.u32 %v2809, 2147483648
    %v2811 = vsel %vm2728, %v2810, %v2809
    %v2812 = vsub.s32 4, %v2788
    %v2813 = vsel %vm2728, %v2812, %v2788
    %v2814 = vsel %vm2727, %v2098, %v2811
    %v2815 = vsel %vm2727, 0, %v2813
    %v2816 = vcosq.f32.pop %v2814
    %v2817 = vsinq.f32.pop %v2814
    %vm2818 = vweird.f32 %v2098
    %v2819 = vadd.s32 %v2815, 3
    %v2820 = vand.u32 %v2819, 3
    %vm2821 = vcmp.lt.s32.totalorder %v2820, 2
    %vm2822 = vcmp.eq.s32.totalorder %v2820, 0
    %v2823 = vxor.u32 %v2817, 2147483648
    %v2824 = vsel %vm2822, %v2816, %v2823
    %vm2825 = vcmp.eq.s32.totalorder %v2820, 2
    %v2826 = vxor.u32 %v2816, 2147483648
    %v2827 = vsel %vm2825, %v2826, %v2817
    %v2828 = vsel %vm2821, %v2824, %v2827
    %v2829 = vsel %vm2818, nan, %v2828
    %v2830 = vand.u32 2147483647, %v2100
    %vm2831 = vcmp.le.f32.partialorder %v2830, 0.7853982
    %vm2832 = vcmp.lt.s32.totalorder %v2100, 0
    %v2833 = vand.u32 %v2100, 2139095040
    %v2834 = vshrl.u32 %v2833, 23
    %v2835 = vsub.s32 %v2834, 127
    %v2836 = vand.u32 2147483647, %v2100
    %v2837 = vand.u32 %v2836, 8388607
    %v2838 = vor.u32 %v2837, 8388608
    %v2839 = vsub.s32 0, %v2838
    %v2840 = vadd.s32 %v2835, 1
    %vm2841 = vcmp.gt.s32.totalorder %v2840, 0
    %v2842 = vsel %vm2841, %v2840, 0
    %v2843 = vshrl.u32 %v2842, 5
    %v2844 = vand.u32 %v2842, 31
    %v2845 = vsub.s32 32, %v2844
    %v2846 = vshrl.u32 683565275, %v2845
    %v2847 = vshll.u32 683565275, %v2844
    %v2848 = vshrl.u32 2475754826, %v2845
    %v2849 = vor.u32 %v2847, %v2848
    %v2850 = vshll.u32 2475754826, %v2844
    %v2851 = vshrl.u32 2131351028, %v2845
    %v2852 = vor.u32 %v2850, %v2851
    %v2853 = vshll.u32 2131351028, %v2844
    %v2854 = vshrl.u32 2102212464, %v2845
    %v2855 = vor.u32 %v2853, %v2854
    %v2856 = vshll.u32 2102212464, %v2844
    %v2857 = vshrl.u32 920167782, %v2845
    %v2858 = vor.u32 %v2856, %v2857
    %v2859 = vshll.u32 920167782, %v2844
    %v2860 = vshrl.u32 1326507024, %v2845
    %v2861 = vor.u32 %v2859, %v2860
    %vm2862 = vcmp.lt.s32.totalorder %v2843, 1
    %vm2863 = vcmp.lt.s32.totalorder %v2843, 2
    %vm2864 = vcmp.lt.s32.totalorder %v2843, 3
    %vm2865 = vcmp.lt.s32.totalorder %v2843, 4
    %v2866 = vsel %vm2862, %v2846, %v2849
    %v2867 = vsel %vm2865, %v2855, 2102212464
    %v2868 = vsel %vm2864, %v2852, %v2867
    %v2869 = vsel %vm2863, %v2866, %v2868
    %v2870 = vsel %vm2862, %v2849, %v2852
    %v2871 = vsel %vm2865, %v2858, 920167782
    %v2872 = vsel %vm2864, %v2855, %v2871
    %v2873 = vsel %vm2863, %v2870, %v2872
    %v2874 = vsel %vm2862, %v2852, %v2855
    %v2875 = vsel %vm2865, %v2861, 1326507024
    %v2876 = vsel %vm2864, %v2858, %v2875
    %v2877 = vsel %vm2863, %v2874, %v2876
    %v2878 = vshll.u32 %v2838, 8
    %v2879 = vmul.u32.u64.compose %v2878, %v2877
    %v2880 = vextract.low.u32 %v2879
    %v2881 = vextract.high.u32 %v2879
    %v2882 = vmul.u32.u64.compose %v2878, %v2873
    %v2883 = vextract.low.u32 %v2882
    %v2884 = vextract.high.u32 %v2882
    %v2885 = vmul.u32 %v2878, %v2869
    %v2886 = vadd.s32 %v2881, %v2883
    %vm2887 = vc.u32 %v2881, %v2883
    %v2888 = vadd.s32 %v2884, 1
    %v2889 = vsel %vm2887, %v2888, %v2884
    %v2890 = vadd.s32 %v2885, %v2889
    %v2891 = vadd.s32 %v2890, 536870912
    %v2892 = vshrl.u32 %v2891, 30
    %v2893 = vshll.u32 %v2892, 30
    %v2894 = vsub.s32 %v2890, %v2893
    %vm2895 = vcmp.lt.s32.totalorder %v2894, 0
    %v2896 = vsub.s32 0, %v2894
    %v2897 = vsel %vm2895, %v2896, %v2894
    %v2898 = vclz %v2897
    %v2899 = vsub.s32 %v2898, 2
    %vm2900 = vcmp.gt.s32.totalorder 0, %v2899
    %v2901 = vsel %vm2900, 0, %v2899
    %v2902 = vsub.s32 32, %v2901
    %v2903 = vshll.u32 %v2894, %v2901
    %v2904 = vshrl.u32 %v2886, %v2902
    %v2905 = vor.u32 %v2903, %v2904
    %v2906 = vsub.s32 4294967266, %v2901
    %v2907 = vadd.s32 %v2906, 127
    %v2908 = vshll.u32 %v2907, 23
    %v2909 = vor.u32 4788187, %v2908
    %v2910 = vand.u32 2147483647, %v2909
    %v2912 = vcvt.s32.f32 %v2905
    %v2913 = vmul.f32 %v2912, %v2910
    %v2914 = vxor.u32 %v2913, 2147483648
    %v2915 = vsel %vm2832, %v2914, %v2913
    %v2916 = vsub.s32 4, %v2892
    %v2917 = vsel %vm2832, %v2916, %v2892
    %v2918 = vsel %vm2831, %v2100, %v2915
    %v2919 = vsel %vm2831, 0, %v2917
    %v2920 = vcosq.f32.pop %v2918
    %v2921 = vsinq.f32.pop %v2918
    %vm2922 = vweird.f32 %v2100
    %v2923 = vadd.s32 %v2919, 3
    %v2924 = vand.u32 %v2923, 3
    %vm2925 = vcmp.lt.s32.totalorder %v2924, 2
    %vm2926 = vcmp.eq.s32.totalorder %v2924, 0
    %v2927 = vxor.u32 %v2921, 2147483648
    %v2928 = vsel %vm2926, %v2920, %v2927
    %vm2929 = vcmp.eq.s32.totalorder %v2924, 2
    %v2930 = vxor.u32 %v2920, 2147483648
    %v2931 = vsel %vm2929, %v2930, %v2921
    %v2932 = vsel %vm2925, %v2928, %v2931
    %v2933 = vsel %vm2922, nan, %v2932
    %2935 = vset.pattern.permute.xlu0 0
    %2936 = vperm.xlu0 %2935, %v1977
    %v2937 = vpop.permute.xlu0 %2936
    %2940 = vset.pattern.permute.xlu0 0
    %2941 = vperm.xlu0 %2940, %v1978
    %v2942 = vpop.permute.xlu0 %2941
    %2945 = vset.pattern.permute.xlu0 0
    %2946 = vperm.xlu0 %2945, %v1979
    %v2947 = vpop.permute.xlu0 %2946
    %2950 = vset.pattern.permute.xlu0 0
    %2951 = vperm.xlu0 %2950, %v1980
    %v2952 = vpop.permute.xlu0 %2951
    %v2955 = vsel %vm66, %v1972, 0
    %v2958 = vsel %vm66, %v1973, 0
    %v2961 = vsel %vm66, %v1974, 0
    %v2964 = vsel %vm66, %v1975, 0
    %2966 = vmatprep.subr.mxu0 0.0
    %2967 = vmatpush1.msra.mxu0 0.0
    %2968 = vmatprep.subr.mxu0 0.0
    %2969 = vmatpush1.msra.mxu0 0.0
    %2970 = vmatprep.subr.mxu0 0.0
    %2971 = vmatpush1.msra.mxu0 0.0
    %2972 = vmatprep.subr.mxu0 0.0
    %2973 = vmatpush1.msra.mxu0 0.0
    %2974 = vmatprep.subr.mxu0 0.0
    %2975 = vmatpush1.msra.mxu0 0.0
    %2976 = vmatprep.subr.mxu0 0.0
    %2977 = vmatpush1.msra.mxu0 0.0
    %2978 = vmatprep.subr.mxu0 0.0
    %2979 = vmatpush1.msra.mxu0 0.0
    %2980 = vmatprep.subr.mxu0 0.0
    %2981 = vmatpush1.msra.mxu0 0.0
    %2982 = vmatprep.subr.mxu0 0.0
    %2983 = vmatpush1.msra.mxu0 0.0
    %2984 = vmatprep.subr.mxu0 0.0
    %2985 = vmatpush1.msra.mxu0 0.0
    %2986 = vmatprep.subr.mxu0 0.0
    %2987 = vmatpush1.msra.mxu0 0.0
    %2988 = vmatprep.subr.mxu0 0.0
    %2989 = vmatpush1.msra.mxu0 0.0
    %2990 = vmatprep.subr.mxu0 %v2933
    %2991 = vmatpush1.msra.mxu0 %v2829
    %2992 = vmatprep.subr.mxu0 %v2725
    %2993 = vmatpush1.msra.mxu0 %v2621
    %2994 = vmatprep.subr.mxu0 %v2517
    %2995 = vmatpush1.msra.mxu0 %v2413
    %2996 = vmatprep.subr.mxu0 %v2309
    %2997 = vmatpush1.msra.mxu0 %v2205
    %2998 = vmatprep.subr.mxu0 0.0
    %2999 = vmatpush2.msra.mxu0 0.0
    %3000 = vmatprep.subr.mxu0 0.0
    %3001 = vmatpush2.msra.mxu0 0.0
    %3002 = vmatprep.subr.mxu0 0.0
    %3003 = vmatpush2.msra.mxu0 0.0
    %3004 = vmatprep.subr.mxu0 0.0
    %3005 = vmatpush2.msra.mxu0 0.0
    %3006 = vmatprep.subr.mxu0 0.0
    %3007 = vmatpush2.msra.mxu0 0.0
    %3008 = vmatprep.subr.mxu0 0.0
    %3009 = vmatpush2.msra.mxu0 0.0
    %3010 = vmatprep.subr.mxu0 0.0
    %3011 = vmatpush2.msra.mxu0 0.0
    %3012 = vmatprep.subr.mxu0 0.0
    %3013 = vmatpush2.msra.mxu0 0.0
    %3014 = vmatprep.subr.mxu0 0.0
    %3015 = vmatpush2.msra.mxu0 0.0
    %3016 = vmatprep.subr.mxu0 0.0
    %3017 = vmatpush2.msra.mxu0 0.0
    %3018 = vmatprep.subr.mxu0 0.0
    %3019 = vmatpush2.msra.mxu0 0.0
    %3020 = vmatprep.subr.mxu0 0.0
    %3021 = vmatpush2.msra.mxu0 0.0
    %3022 = vmatprep.subr.mxu0 0.0
    %3023 = vmatpush2.msra.mxu0 0.0
    %3024 = vmatprep.subr.mxu0 0.0
    %3025 = vmatpush2.msra.mxu0 0.0
    %3026 = vmatprep.subr.mxu0 0.0
    %3027 = vmatpush2.msra.mxu0 0.0
    %3028 = vmatprep.subr.mxu0 0.0
    %3029 = vmatpush2.msra.mxu0 0.0
    %3030 = vmatprep.mubr.f32.mxu0 0.0
    %3031 = vmatmul.mubr.f32.gmra.mxu0 %v2955
    %v3032 = vpop.f32.mrf.mxu0
    %v3033 = vadd.f32 %v2937, %v3032
    %v3034 = vpop.f32.mrf.mxu0
    %v3035 = vadd.f32 %v2937, %v3034
    %3036 = vmatprep.mubr.f32.mxu0 0.0
    %3037 = vmatmul.mubr.f32.gmra.mxu0 %v2958
    %v3038 = vpop.f32.mrf.mxu0
    %v3039 = vadd.f32 %v2942, %v3038
    %v3040 = vpop.f32.mrf.mxu0
    %v3041 = vadd.f32 %v2942, %v3040
    %3042 = vmatprep.mubr.f32.mxu0 0.0
    %3043 = vmatmul.mubr.f32.gmra.mxu0 %v2961
    %v3044 = vpop.f32.mrf.mxu0
    %v3045 = vadd.f32 %v2947, %v3044
    %v3046 = vpop.f32.mrf.mxu0
    %v3047 = vadd.f32 %v2947, %v3046
    %3048 = vmatprep.mubr.f32.mxu0 0.0
    %3049 = vmatmul.mubr.f32.gmra.mxu0 %v2964
    %v3050 = vpop.f32.mrf.mxu0
    %v3051 = vadd.f32 %v2952, %v3050
    %v3052 = vpop.f32.mrf.mxu0
    %v3053 = vadd.f32 %v2952, %v3052
    %3054 = vdwg.mxu0
    %v3055 = vand.u32 2147483647, %v3033
    %vm3056 = vcmp.le.f32.partialorder %v3055, 0.7853982
    %vm3057 = vcmp.lt.s32.totalorder %v3033, 0
    %v3058 = vand.u32 %v3033, 2139095040
    %v3059 = vshrl.u32 %v3058, 23
    %v3060 = vsub.s32 %v3059, 127
    %v3061 = vand.u32 2147483647, %v3033
    %v3062 = vand.u32 %v3061, 8388607
    %v3063 = vor.u32 %v3062, 8388608
    %v3064 = vsub.s32 0, %v3063
    %v3065 = vadd.s32 %v3060, 1
    %vm3066 = vcmp.gt.s32.totalorder %v3065, 0
    %v3067 = vsel %vm3066, %v3065, 0
    %v3068 = vshrl.u32 %v3067, 5
    %v3069 = vand.u32 %v3067, 31
    %v3070 = vsub.s32 32, %v3069
    %v3071 = vshrl.u32 683565275, %v3070
    %v3072 = vshll.u32 683565275, %v3069
    %v3073 = vshrl.u32 2475754826, %v3070
    %v3074 = vor.u32 %v3072, %v3073
    %v3075 = vshll.u32 2475754826, %v3069
    %v3076 = vshrl.u32 2131351028, %v3070
    %v3077 = vor.u32 %v3075, %v3076
    %v3078 = vshll.u32 2131351028, %v3069
    %v3079 = vshrl.u32 2102212464, %v3070
    %v3080 = vor.u32 %v3078, %v3079
    %v3081 = vshll.u32 2102212464, %v3069
    %v3082 = vshrl.u32 920167782, %v3070
    %v3083 = vor.u32 %v3081, %v3082
    %v3084 = vshll.u32 920167782, %v3069
    %v3085 = vshrl.u32 1326507024, %v3070
    %v3086 = vor.u32 %v3084, %v3085
    %vm3087 = vcmp.lt.s32.totalorder %v3068, 1
    %vm3088 = vcmp.lt.s32.totalorder %v3068, 2
    %vm3089 = vcmp.lt.s32.totalorder %v3068, 3
    %vm3090 = vcmp.lt.s32.totalorder %v3068, 4
    %v3091 = vsel %vm3087, %v3071, %v3074
    %v3092 = vsel %vm3090, %v3080, 2102212464
    %v3093 = vsel %vm3089, %v3077, %v3092
    %v3094 = vsel %vm3088, %v3091, %v3093
    %v3095 = vsel %vm3087, %v3074, %v3077
    %v3096 = vsel %vm3090, %v3083, 920167782
    %v3097 = vsel %vm3089, %v3080, %v3096
    %v3098 = vsel %vm3088, %v3095, %v3097
    %v3099 = vsel %vm3087, %v3077, %v3080
    %v3100 = vsel %vm3090, %v3086, 1326507024
    %v3101 = vsel %vm3089, %v3083, %v3100
    %v3102 = vsel %vm3088, %v3099, %v3101
    %v3103 = vshll.u32 %v3063, 8
    %v3104 = vmul.u32.u64.compose %v3103, %v3102
    %v3105 = vextract.low.u32 %v3104
    %v3106 = vextract.high.u32 %v3104
    %v3107 = vmul.u32.u64.compose %v3103, %v3098
    %v3108 = vextract.low.u32 %v3107
    %v3109 = vextract.high.u32 %v3107
    %v3110 = vmul.u32 %v3103, %v3094
    %v3111 = vadd.s32 %v3106, %v3108
    %vm3112 = vc.u32 %v3106, %v3108
    %v3113 = vadd.s32 %v3109, 1
    %v3114 = vsel %vm3112, %v3113, %v3109
    %v3115 = vadd.s32 %v3110, %v3114
    %v3116 = vadd.s32 %v3115, 536870912
    %v3117 = vshrl.u32 %v3116, 30
    %v3118 = vshll.u32 %v3117, 30
    %v3119 = vsub.s32 %v3115, %v3118
    %vm3120 = vcmp.lt.s32.totalorder %v3119, 0
    %v3121 = vsub.s32 0, %v3119
    %v3122 = vsel %vm3120, %v3121, %v3119
    %v3123 = vclz %v3122
    %v3124 = vsub.s32 %v3123, 2
    %vm3125 = vcmp.gt.s32.totalorder 0, %v3124
    %v3126 = vsel %vm3125, 0, %v3124
    %v3127 = vsub.s32 32, %v3126
    %v3128 = vshll.u32 %v3119, %v3126
    %v3129 = vshrl.u32 %v3111, %v3127
    %v3130 = vor.u32 %v3128, %v3129
    %v3131 = vsub.s32 4294967266, %v3126
    %v3132 = vadd.s32 %v3131, 127
    %v3133 = vshll.u32 %v3132, 23
    %v3134 = vor.u32 4788187, %v3133
    %v3135 = vand.u32 2147483647, %v3134
    %v3137 = vcvt.s32.f32 %v3130
    %v3138 = vmul.f32 %v3137, %v3135
    %v3139 = vxor.u32 %v3138, 2147483648
    %v3140 = vsel %vm3057, %v3139, %v3138
    %v3141 = vsub.s32 4, %v3117
    %v3142 = vsel %vm3057, %v3141, %v3117
    %v3143 = vsel %vm3056, %v3033, %v3140
    %v3144 = vsel %vm3056, 0, %v3142
    %v3145 = vcosq.f32.pop %v3143
    %v3146 = vsinq.f32.pop %v3143
    %vm3147 = vweird.f32 %v3033
    %v3148 = vadd.s32 %v3144, 3
    %v3149 = vand.u32 %v3148, 3
    %vm3150 = vcmp.lt.s32.totalorder %v3149, 2
    %vm3151 = vcmp.eq.s32.totalorder %v3149, 0
    %v3152 = vxor.u32 %v3146, 2147483648
    %v3153 = vsel %vm3151, %v3145, %v3152
    %vm3154 = vcmp.eq.s32.totalorder %v3149, 2
    %v3155 = vxor.u32 %v3145, 2147483648
    %v3156 = vsel %vm3154, %v3155, %v3146
    %v3157 = vsel %vm3150, %v3153, %v3156
    %v3158 = vsel %vm3147, nan, %v3157
    %v3159 = vand.u32 2147483647, %v3035
    %vm3160 = vcmp.le.f32.partialorder %v3159, 0.7853982
    %vm3161 = vcmp.lt.s32.totalorder %v3035, 0
    %v3162 = vand.u32 %v3035, 2139095040
    %v3163 = vshrl.u32 %v3162, 23
    %v3164 = vsub.s32 %v3163, 127
    %v3165 = vand.u32 2147483647, %v3035
    %v3166 = vand.u32 %v3165, 8388607
    %v3167 = vor.u32 %v3166, 8388608
    %v3168 = vsub.s32 0, %v3167
    %v3169 = vadd.s32 %v3164, 1
    %vm3170 = vcmp.gt.s32.totalorder %v3169, 0
    %v3171 = vsel %vm3170, %v3169, 0
    %v3172 = vshrl.u32 %v3171, 5
    %v3173 = vand.u32 %v3171, 31
    %v3174 = vsub.s32 32, %v3173
    %v3175 = vshrl.u32 683565275, %v3174
    %v3176 = vshll.u32 683565275, %v3173
    %v3177 = vshrl.u32 2475754826, %v3174
    %v3178 = vor.u32 %v3176, %v3177
    %v3179 = vshll.u32 2475754826, %v3173
    %v3180 = vshrl.u32 2131351028, %v3174
    %v3181 = vor.u32 %v3179, %v3180
    %v3182 = vshll.u32 2131351028, %v3173
    %v3183 = vshrl.u32 2102212464, %v3174
    %v3184 = vor.u32 %v3182, %v3183
    %v3185 = vshll.u32 2102212464, %v3173
    %v3186 = vshrl.u32 920167782, %v3174
    %v3187 = vor.u32 %v3185, %v3186
    %v3188 = vshll.u32 920167782, %v3173
    %v3189 = vshrl.u32 1326507024, %v3174
    %v3190 = vor.u32 %v3188, %v3189
    %vm3191 = vcmp.lt.s32.totalorder %v3172, 1
    %vm3192 = vcmp.lt.s32.totalorder %v3172, 2
    %vm3193 = vcmp.lt.s32.totalorder %v3172, 3
    %vm3194 = vcmp.lt.s32.totalorder %v3172, 4
    %v3195 = vsel %vm3191, %v3175, %v3178
    %v3196 = vsel %vm3194, %v3184, 2102212464
    %v3197 = vsel %vm3193, %v3181, %v3196
    %v3198 = vsel %vm3192, %v3195, %v3197
    %v3199 = vsel %vm3191, %v3178, %v3181
    %v3200 = vsel %vm3194, %v3187, 920167782
    %v3201 = vsel %vm3193, %v3184, %v3200
    %v3202 = vsel %vm3192, %v3199, %v3201
    %v3203 = vsel %vm3191, %v3181, %v3184
    %v3204 = vsel %vm3194, %v3190, 1326507024
    %v3205 = vsel %vm3193, %v3187, %v3204
    %v3206 = vsel %vm3192, %v3203, %v3205
    %v3207 = vshll.u32 %v3167, 8
    %v3208 = vmul.u32.u64.compose %v3207, %v3206
    %v3209 = vextract.low.u32 %v3208
    %v3210 = vextract.high.u32 %v3208
    %v3211 = vmul.u32.u64.compose %v3207, %v3202
    %v3212 = vextract.low.u32 %v3211
    %v3213 = vextract.high.u32 %v3211
    %v3214 = vmul.u32 %v3207, %v3198
    %v3215 = vadd.s32 %v3210, %v3212
    %vm3216 = vc.u32 %v3210, %v3212
    %v3217 = vadd.s32 %v3213, 1
    %v3218 = vsel %vm3216, %v3217, %v3213
    %v3219 = vadd.s32 %v3214, %v3218
    %v3220 = vadd.s32 %v3219, 536870912
    %v3221 = vshrl.u32 %v3220, 30
    %v3222 = vshll.u32 %v3221, 30
    %v3223 = vsub.s32 %v3219, %v3222
    %vm3224 = vcmp.lt.s32.totalorder %v3223, 0
    %v3225 = vsub.s32 0, %v3223
    %v3226 = vsel %vm3224, %v3225, %v3223
    %v3227 = vclz %v3226
    %v3228 = vsub.s32 %v3227, 2
    %vm3229 = vcmp.gt.s32.totalorder 0, %v3228
    %v3230 = vsel %vm3229, 0, %v3228
    %v3231 = vsub.s32 32, %v3230
    %v3232 = vshll.u32 %v3223, %v3230
    %v3233 = vshrl.u32 %v3215, %v3231
    %v3234 = vor.u32 %v3232, %v3233
    %v3235 = vsub.s32 4294967266, %v3230
    %v3236 = vadd.s32 %v3235, 127
    %v3237 = vshll.u32 %v3236, 23
    %v3238 = vor.u32 4788187, %v3237
    %v3239 = vand.u32 2147483647, %v3238
    %v3241 = vcvt.s32.f32 %v3234
    %v3242 = vmul.f32 %v3241, %v3239
    %v3243 = vxor.u32 %v3242, 2147483648
    %v3244 = vsel %vm3161, %v3243, %v3242
    %v3245 = vsub.s32 4, %v3221
    %v3246 = vsel %vm3161, %v3245, %v3221
    %v3247 = vsel %vm3160, %v3035, %v3244
    %v3248 = vsel %vm3160, 0, %v3246
    %v3249 = vcosq.f32.pop %v3247
    %v3250 = vsinq.f32.pop %v3247
    %vm3251 = vweird.f32 %v3035
    %v3252 = vadd.s32 %v3248, 3
    %v3253 = vand.u32 %v3252, 3
    %vm3254 = vcmp.lt.s32.totalorder %v3253, 2
    %vm3255 = vcmp.eq.s32.totalorder %v3253, 0
    %v3256 = vxor.u32 %v3250, 2147483648
    %v3257 = vsel %vm3255, %v3249, %v3256
    %vm3258 = vcmp.eq.s32.totalorder %v3253, 2
    %v3259 = vxor.u32 %v3249, 2147483648
    %v3260 = vsel %vm3258, %v3259, %v3250
    %v3261 = vsel %vm3254, %v3257, %v3260
    %v3262 = vsel %vm3251, nan, %v3261
    %v3263 = vand.u32 2147483647, %v3039
    %vm3264 = vcmp.le.f32.partialorder %v3263, 0.7853982
    %vm3265 = vcmp.lt.s32.totalorder %v3039, 0
    %v3266 = vand.u32 %v3039, 2139095040
    %v3267 = vshrl.u32 %v3266, 23
    %v3268 = vsub.s32 %v3267, 127
    %v3269 = vand.u32 2147483647, %v3039
    %v3270 = vand.u32 %v3269, 8388607
    %v3271 = vor.u32 %v3270, 8388608
    %v3272 = vsub.s32 0, %v3271
    %v3273 = vadd.s32 %v3268, 1
    %vm3274 = vcmp.gt.s32.totalorder %v3273, 0
    %v3275 = vsel %vm3274, %v3273, 0
    %v3276 = vshrl.u32 %v3275, 5
    %v3277 = vand.u32 %v3275, 31
    %v3278 = vsub.s32 32, %v3277
    %v3279 = vshrl.u32 683565275, %v3278
    %v3280 = vshll.u32 683565275, %v3277
    %v3281 = vshrl.u32 2475754826, %v3278
    %v3282 = vor.u32 %v3280, %v3281
    %v3283 = vshll.u32 2475754826, %v3277
    %v3284 = vshrl.u32 2131351028, %v3278
    %v3285 = vor.u32 %v3283, %v3284
    %v3286 = vshll.u32 2131351028, %v3277
    %v3287 = vshrl.u32 2102212464, %v3278
    %v3288 = vor.u32 %v3286, %v3287
    %v3289 = vshll.u32 2102212464, %v3277
    %v3290 = vshrl.u32 920167782, %v3278
    %v3291 = vor.u32 %v3289, %v3290
    %v3292 = vshll.u32 920167782, %v3277
    %v3293 = vshrl.u32 1326507024, %v3278
    %v3294 = vor.u32 %v3292, %v3293
    %vm3295 = vcmp.lt.s32.totalorder %v3276, 1
    %vm3296 = vcmp.lt.s32.totalorder %v3276, 2
    %vm3297 = vcmp.lt.s32.totalorder %v3276, 3
    %vm3298 = vcmp.lt.s32.totalorder %v3276, 4
    %v3299 = vsel %vm3295, %v3279, %v3282
    %v3300 = vsel %vm3298, %v3288, 2102212464
    %v3301 = vsel %vm3297, %v3285, %v3300
    %v3302 = vsel %vm3296, %v3299, %v3301
    %v3303 = vsel %vm3295, %v3282, %v3285
    %v3304 = vsel %vm3298, %v3291, 920167782
    %v3305 = vsel %vm3297, %v3288, %v3304
    %v3306 = vsel %vm3296, %v3303, %v3305
    %v3307 = vsel %vm3295, %v3285, %v3288
    %v3308 = vsel %vm3298, %v3294, 1326507024
    %v3309 = vsel %vm3297, %v3291, %v3308
    %v3310 = vsel %vm3296, %v3307, %v3309
    %v3311 = vshll.u32 %v3271, 8
    %v3312 = vmul.u32.u64.compose %v3311, %v3310
    %v3313 = vextract.low.u32 %v3312
    %v3314 = vextract.high.u32 %v3312
    %v3315 = vmul.u32.u64.compose %v3311, %v3306
    %v3316 = vextract.low.u32 %v3315
    %v3317 = vextract.high.u32 %v3315
    %v3318 = vmul.u32 %v3311, %v3302
    %v3319 = vadd.s32 %v3314, %v3316
    %vm3320 = vc.u32 %v3314, %v3316
    %v3321 = vadd.s32 %v3317, 1
    %v3322 = vsel %vm3320, %v3321, %v3317
    %v3323 = vadd.s32 %v3318, %v3322
    %v3324 = vadd.s32 %v3323, 536870912
    %v3325 = vshrl.u32 %v3324, 30
    %v3326 = vshll.u32 %v3325, 30
    %v3327 = vsub.s32 %v3323, %v3326
    %vm3328 = vcmp.lt.s32.totalorder %v3327, 0
    %v3329 = vsub.s32 0, %v3327
    %v3330 = vsel %vm3328, %v3329, %v3327
    %v3331 = vclz %v3330
    %v3332 = vsub.s32 %v3331, 2
    %vm3333 = vcmp.gt.s32.totalorder 0, %v3332
    %v3334 = vsel %vm3333, 0, %v3332
    %v3335 = vsub.s32 32, %v3334
    %v3336 = vshll.u32 %v3327, %v3334
    %v3337 = vshrl.u32 %v3319, %v3335
    %v3338 = vor.u32 %v3336, %v3337
    %v3339 = vsub.s32 4294967266, %v3334
    %v3340 = vadd.s32 %v3339, 127
    %v3341 = vshll.u32 %v3340, 23
    %v3342 = vor.u32 4788187, %v3341
    %v3343 = vand.u32 2147483647, %v3342
    %v3345 = vcvt.s32.f32 %v3338
    %v3346 = vmul.f32 %v3345, %v3343
    %v3347 = vxor.u32 %v3346, 2147483648
    %v3348 = vsel %vm3265, %v3347, %v3346
    %v3349 = vsub.s32 4, %v3325
    %v3350 = vsel %vm3265, %v3349, %v3325
    %v3351 = vsel %vm3264, %v3039, %v3348
    %v3352 = vsel %vm3264, 0, %v3350
    %v3353 = vcosq.f32.pop %v3351
    %v3354 = vsinq.f32.pop %v3351
    %vm3355 = vweird.f32 %v3039
    %v3356 = vadd.s32 %v3352, 3
    %v3357 = vand.u32 %v3356, 3
    %vm3358 = vcmp.lt.s32.totalorder %v3357, 2
    %vm3359 = vcmp.eq.s32.totalorder %v3357, 0
    %v3360 = vxor.u32 %v3354, 2147483648
    %v3361 = vsel %vm3359, %v3353, %v3360
    %vm3362 = vcmp.eq.s32.totalorder %v3357, 2
    %v3363 = vxor.u32 %v3353, 2147483648
    %v3364 = vsel %vm3362, %v3363, %v3354
    %v3365 = vsel %vm3358, %v3361, %v3364
    %v3366 = vsel %vm3355, nan, %v3365
    %v3367 = vand.u32 2147483647, %v3041
    %vm3368 = vcmp.le.f32.partialorder %v3367, 0.7853982
    %vm3369 = vcmp.lt.s32.totalorder %v3041, 0
    %v3370 = vand.u32 %v3041, 2139095040
    %v3371 = vshrl.u32 %v3370, 23
    %v3372 = vsub.s32 %v3371, 127
    %v3373 = vand.u32 2147483647, %v3041
    %v3374 = vand.u32 %v3373, 8388607
    %v3375 = vor.u32 %v3374, 8388608
    %v3376 = vsub.s32 0, %v3375
    %v3377 = vadd.s32 %v3372, 1
    %vm3378 = vcmp.gt.s32.totalorder %v3377, 0
    %v3379 = vsel %vm3378, %v3377, 0
    %v3380 = vshrl.u32 %v3379, 5
    %v3381 = vand.u32 %v3379, 31
    %v3382 = vsub.s32 32, %v3381
    %v3383 = vshrl.u32 683565275, %v3382
    %v3384 = vshll.u32 683565275, %v3381
    %v3385 = vshrl.u32 2475754826, %v3382
    %v3386 = vor.u32 %v3384, %v3385
    %v3387 = vshll.u32 2475754826, %v3381
    %v3388 = vshrl.u32 2131351028, %v3382
    %v3389 = vor.u32 %v3387, %v3388
    %v3390 = vshll.u32 2131351028, %v3381
    %v3391 = vshrl.u32 2102212464, %v3382
    %v3392 = vor.u32 %v3390, %v3391
    %v3393 = vshll.u32 2102212464, %v3381
    %v3394 = vshrl.u32 920167782, %v3382
    %v3395 = vor.u32 %v3393, %v3394
    %v3396 = vshll.u32 920167782, %v3381
    %v3397 = vshrl.u32 1326507024, %v3382
    %v3398 = vor.u32 %v3396, %v3397
    %vm3399 = vcmp.lt.s32.totalorder %v3380, 1
    %vm3400 = vcmp.lt.s32.totalorder %v3380, 2
    %vm3401 = vcmp.lt.s32.totalorder %v3380, 3
    %vm3402 = vcmp.lt.s32.totalorder %v3380, 4
    %v3403 = vsel %vm3399, %v3383, %v3386
    %v3404 = vsel %vm3402, %v3392, 2102212464
    %v3405 = vsel %vm3401, %v3389, %v3404
    %v3406 = vsel %vm3400, %v3403, %v3405
    %v3407 = vsel %vm3399, %v3386, %v3389
    %v3408 = vsel %vm3402, %v3395, 920167782
    %v3409 = vsel %vm3401, %v3392, %v3408
    %v3410 = vsel %vm3400, %v3407, %v3409
    %v3411 = vsel %vm3399, %v3389, %v3392
    %v3412 = vsel %vm3402, %v3398, 1326507024
    %v3413 = vsel %vm3401, %v3395, %v3412
    %v3414 = vsel %vm3400, %v3411, %v3413
    %v3415 = vshll.u32 %v3375, 8
    %v3416 = vmul.u32.u64.compose %v3415, %v3414
    %v3417 = vextract.low.u32 %v3416
    %v3418 = vextract.high.u32 %v3416
    %v3419 = vmul.u32.u64.compose %v3415, %v3410
    %v3420 = vextract.low.u32 %v3419
    %v3421 = vextract.high.u32 %v3419
    %v3422 = vmul.u32 %v3415, %v3406
    %v3423 = vadd.s32 %v3418, %v3420
    %vm3424 = vc.u32 %v3418, %v3420
    %v3425 = vadd.s32 %v3421, 1
    %v3426 = vsel %vm3424, %v3425, %v3421
    %v3427 = vadd.s32 %v3422, %v3426
    %v3428 = vadd.s32 %v3427, 536870912
    %v3429 = vshrl.u32 %v3428, 30
    %v3430 = vshll.u32 %v3429, 30
    %v3431 = vsub.s32 %v3427, %v3430
    %vm3432 = vcmp.lt.s32.totalorder %v3431, 0
    %v3433 = vsub.s32 0, %v3431
    %v3434 = vsel %vm3432, %v3433, %v3431
    %v3435 = vclz %v3434
    %v3436 = vsub.s32 %v3435, 2
    %vm3437 = vcmp.gt.s32.totalorder 0, %v3436
    %v3438 = vsel %vm3437, 0, %v3436
    %v3439 = vsub.s32 32, %v3438
    %v3440 = vshll.u32 %v3431, %v3438
    %v3441 = vshrl.u32 %v3423, %v3439
    %v3442 = vor.u32 %v3440, %v3441
    %v3443 = vsub.s32 4294967266, %v3438
    %v3444 = vadd.s32 %v3443, 127
    %v3445 = vshll.u32 %v3444, 23
    %v3446 = vor.u32 4788187, %v3445
    %v3447 = vand.u32 2147483647, %v3446
    %v3449 = vcvt.s32.f32 %v3442
    %v3450 = vmul.f32 %v3449, %v3447
    %v3451 = vxor.u32 %v3450, 2147483648
    %v3452 = vsel %vm3369, %v3451, %v3450
    %v3453 = vsub.s32 4, %v3429
    %v3454 = vsel %vm3369, %v3453, %v3429
    %v3455 = vsel %vm3368, %v3041, %v3452
    %v3456 = vsel %vm3368, 0, %v3454
    %v3457 = vcosq.f32.pop %v3455
    %v3458 = vsinq.f32.pop %v3455
    %vm3459 = vweird.f32 %v3041
    %v3460 = vadd.s32 %v3456, 3
    %v3461 = vand.u32 %v3460, 3
    %vm3462 = vcmp.lt.s32.totalorder %v3461, 2
    %vm3463 = vcmp.eq.s32.totalorder %v3461, 0
    %v3464 = vxor.u32 %v3458, 2147483648
    %v3465 = vsel %vm3463, %v3457, %v3464
    %vm3466 = vcmp.eq.s32.totalorder %v3461, 2
    %v3467 = vxor.u32 %v3457, 2147483648
    %v3468 = vsel %vm3466, %v3467, %v3458
    %v3469 = vsel %vm3462, %v3465, %v3468
    %v3470 = vsel %vm3459, nan, %v3469
    %v3471 = vand.u32 2147483647, %v3045
    %vm3472 = vcmp.le.f32.partialorder %v3471, 0.7853982
    %vm3473 = vcmp.lt.s32.totalorder %v3045, 0
    %v3474 = vand.u32 %v3045, 2139095040
    %v3475 = vshrl.u32 %v3474, 23
    %v3476 = vsub.s32 %v3475, 127
    %v3477 = vand.u32 2147483647, %v3045
    %v3478 = vand.u32 %v3477, 8388607
    %v3479 = vor.u32 %v3478, 8388608
    %v3480 = vsub.s32 0, %v3479
    %v3481 = vadd.s32 %v3476, 1
    %vm3482 = vcmp.gt.s32.totalorder %v3481, 0
    %v3483 = vsel %vm3482, %v3481, 0
    %v3484 = vshrl.u32 %v3483, 5
    %v3485 = vand.u32 %v3483, 31
    %v3486 = vsub.s32 32, %v3485
    %v3487 = vshrl.u32 683565275, %v3486
    %v3488 = vshll.u32 683565275, %v3485
    %v3489 = vshrl.u32 2475754826, %v3486
    %v3490 = vor.u32 %v3488, %v3489
    %v3491 = vshll.u32 2475754826, %v3485
    %v3492 = vshrl.u32 2131351028, %v3486
    %v3493 = vor.u32 %v3491, %v3492
    %v3494 = vshll.u32 2131351028, %v3485
    %v3495 = vshrl.u32 2102212464, %v3486
    %v3496 = vor.u32 %v3494, %v3495
    %v3497 = vshll.u32 2102212464, %v3485
    %v3498 = vshrl.u32 920167782, %v3486
    %v3499 = vor.u32 %v3497, %v3498
    %v3500 = vshll.u32 920167782, %v3485
    %v3501 = vshrl.u32 1326507024, %v3486
    %v3502 = vor.u32 %v3500, %v3501
    %vm3503 = vcmp.lt.s32.totalorder %v3484, 1
    %vm3504 = vcmp.lt.s32.totalorder %v3484, 2
    %vm3505 = vcmp.lt.s32.totalorder %v3484, 3
    %vm3506 = vcmp.lt.s32.totalorder %v3484, 4
    %v3507 = vsel %vm3503, %v3487, %v3490
    %v3508 = vsel %vm3506, %v3496, 2102212464
    %v3509 = vsel %vm3505, %v3493, %v3508
    %v3510 = vsel %vm3504, %v3507, %v3509
    %v3511 = vsel %vm3503, %v3490, %v3493
    %v3512 = vsel %vm3506, %v3499, 920167782
    %v3513 = vsel %vm3505, %v3496, %v3512
    %v3514 = vsel %vm3504, %v3511, %v3513
    %v3515 = vsel %vm3503, %v3493, %v3496
    %v3516 = vsel %vm3506, %v3502, 1326507024
    %v3517 = vsel %vm3505, %v3499, %v3516
    %v3518 = vsel %vm3504, %v3515, %v3517
    %v3519 = vshll.u32 %v3479, 8
    %v3520 = vmul.u32.u64.compose %v3519, %v3518
    %v3521 = vextract.low.u32 %v3520
    %v3522 = vextract.high.u32 %v3520
    %v3523 = vmul.u32.u64.compose %v3519, %v3514
    %v3524 = vextract.low.u32 %v3523
    %v3525 = vextract.high.u32 %v3523
    %v3526 = vmul.u32 %v3519, %v3510
    %v3527 = vadd.s32 %v3522, %v3524
    %vm3528 = vc.u32 %v3522, %v3524
    %v3529 = vadd.s32 %v3525, 1
    %v3530 = vsel %vm3528, %v3529, %v3525
    %v3531 = vadd.s32 %v3526, %v3530
    %v3532 = vadd.s32 %v3531, 536870912
    %v3533 = vshrl.u32 %v3532, 30
    %v3534 = vshll.u32 %v3533, 30
    %v3535 = vsub.s32 %v3531, %v3534
    %vm3536 = vcmp.lt.s32.totalorder %v3535, 0
    %v3537 = vsub.s32 0, %v3535
    %v3538 = vsel %vm3536, %v3537, %v3535
    %v3539 = vclz %v3538
    %v3540 = vsub.s32 %v3539, 2
    %vm3541 = vcmp.gt.s32.totalorder 0, %v3540
    %v3542 = vsel %vm3541, 0, %v3540
    %v3543 = vsub.s32 32, %v3542
    %v3544 = vshll.u32 %v3535, %v3542
    %v3545 = vshrl.u32 %v3527, %v3543
    %v3546 = vor.u32 %v3544, %v3545
    %v3547 = vsub.s32 4294967266, %v3542
    %v3548 = vadd.s32 %v3547, 127
    %v3549 = vshll.u32 %v3548, 23
    %v3550 = vor.u32 4788187, %v3549
    %v3551 = vand.u32 2147483647, %v3550
    %v3553 = vcvt.s32.f32 %v3546
    %v3554 = vmul.f32 %v3553, %v3551
    %v3555 = vxor.u32 %v3554, 2147483648
    %v3556 = vsel %vm3473, %v3555, %v3554
    %v3557 = vsub.s32 4, %v3533
    %v3558 = vsel %vm3473, %v3557, %v3533
    %v3559 = vsel %vm3472, %v3045, %v3556
    %v3560 = vsel %vm3472, 0, %v3558
    %v3561 = vcosq.f32.pop %v3559
    %v3562 = vsinq.f32.pop %v3559
    %vm3563 = vweird.f32 %v3045
    %v3564 = vadd.s32 %v3560, 3
    %v3565 = vand.u32 %v3564, 3
    %vm3566 = vcmp.lt.s32.totalorder %v3565, 2
    %vm3567 = vcmp.eq.s32.totalorder %v3565, 0
    %v3568 = vxor.u32 %v3562, 2147483648
    %v3569 = vsel %vm3567, %v3561, %v3568
    %vm3570 = vcmp.eq.s32.totalorder %v3565, 2
    %v3571 = vxor.u32 %v3561, 2147483648
    %v3572 = vsel %vm3570, %v3571, %v3562
    %v3573 = vsel %vm3566, %v3569, %v3572
    %v3574 = vsel %vm3563, nan, %v3573
    %v3575 = vand.u32 2147483647, %v3047
    %vm3576 = vcmp.le.f32.partialorder %v3575, 0.7853982
    %vm3577 = vcmp.lt.s32.totalorder %v3047, 0
    %v3578 = vand.u32 %v3047, 2139095040
    %v3579 = vshrl.u32 %v3578, 23
    %v3580 = vsub.s32 %v3579, 127
    %v3581 = vand.u32 2147483647, %v3047
    %v3582 = vand.u32 %v3581, 8388607
    %v3583 = vor.u32 %v3582, 8388608
    %v3584 = vsub.s32 0, %v3583
    %v3585 = vadd.s32 %v3580, 1
    %vm3586 = vcmp.gt.s32.totalorder %v3585, 0
    %v3587 = vsel %vm3586, %v3585, 0
    %v3588 = vshrl.u32 %v3587, 5
    %v3589 = vand.u32 %v3587, 31
    %v3590 = vsub.s32 32, %v3589
    %v3591 = vshrl.u32 683565275, %v3590
    %v3592 = vshll.u32 683565275, %v3589
    %v3593 = vshrl.u32 2475754826, %v3590
    %v3594 = vor.u32 %v3592, %v3593
    %v3595 = vshll.u32 2475754826, %v3589
    %v3596 = vshrl.u32 2131351028, %v3590
    %v3597 = vor.u32 %v3595, %v3596
    %v3598 = vshll.u32 2131351028, %v3589
    %v3599 = vshrl.u32 2102212464, %v3590
    %v3600 = vor.u32 %v3598, %v3599
    %v3601 = vshll.u32 2102212464, %v3589
    %v3602 = vshrl.u32 920167782, %v3590
    %v3603 = vor.u32 %v3601, %v3602
    %v3604 = vshll.u32 920167782, %v3589
    %v3605 = vshrl.u32 1326507024, %v3590
    %v3606 = vor.u32 %v3604, %v3605
    %vm3607 = vcmp.lt.s32.totalorder %v3588, 1
    %vm3608 = vcmp.lt.s32.totalorder %v3588, 2
    %vm3609 = vcmp.lt.s32.totalorder %v3588, 3
    %vm3610 = vcmp.lt.s32.totalorder %v3588, 4
    %v3611 = vsel %vm3607, %v3591, %v3594
    %v3612 = vsel %vm3610, %v3600, 2102212464
    %v3613 = vsel %vm3609, %v3597, %v3612
    %v3614 = vsel %vm3608, %v3611, %v3613
    %v3615 = vsel %vm3607, %v3594, %v3597
    %v3616 = vsel %vm3610, %v3603, 920167782
    %v3617 = vsel %vm3609, %v3600, %v3616
    %v3618 = vsel %vm3608, %v3615, %v3617
    %v3619 = vsel %vm3607, %v3597, %v3600
    %v3620 = vsel %vm3610, %v3606, 1326507024
    %v3621 = vsel %vm3609, %v3603, %v3620
    %v3622 = vsel %vm3608, %v3619, %v3621
    %v3623 = vshll.u32 %v3583, 8
    %v3624 = vmul.u32.u64.compose %v3623, %v3622
    %v3625 = vextract.low.u32 %v3624
    %v3626 = vextract.high.u32 %v3624
    %v3627 = vmul.u32.u64.compose %v3623, %v3618
    %v3628 = vextract.low.u32 %v3627
    %v3629 = vextract.high.u32 %v3627
    %v3630 = vmul.u32 %v3623, %v3614
    %v3631 = vadd.s32 %v3626, %v3628
    %vm3632 = vc.u32 %v3626, %v3628
    %v3633 = vadd.s32 %v3629, 1
    %v3634 = vsel %vm3632, %v3633, %v3629
    %v3635 = vadd.s32 %v3630, %v3634
    %v3636 = vadd.s32 %v3635, 536870912
    %v3637 = vshrl.u32 %v3636, 30
    %v3638 = vshll.u32 %v3637, 30
    %v3639 = vsub.s32 %v3635, %v3638
    %vm3640 = vcmp.lt.s32.totalorder %v3639, 0
    %v3641 = vsub.s32 0, %v3639
    %v3642 = vsel %vm3640, %v3641, %v3639
    %v3643 = vclz %v3642
    %v3644 = vsub.s32 %v3643, 2
    %vm3645 = vcmp.gt.s32.totalorder 0, %v3644
    %v3646 = vsel %vm3645, 0, %v3644
    %v3647 = vsub.s32 32, %v3646
    %v3648 = vshll.u32 %v3639, %v3646
    %v3649 = vshrl.u32 %v3631, %v3647
    %v3650 = vor.u32 %v3648, %v3649
    %v3651 = vsub.s32 4294967266, %v3646
    %v3652 = vadd.s32 %v3651, 127
    %v3653 = vshll.u32 %v3652, 23
    %v3654 = vor.u32 4788187, %v3653
    %v3655 = vand.u32 2147483647, %v3654
    %v3657 = vcvt.s32.f32 %v3650
    %v3658 = vmul.f32 %v3657, %v3655
    %v3659 = vxor.u32 %v3658, 2147483648
    %v3660 = vsel %vm3577, %v3659, %v3658
    %v3661 = vsub.s32 4, %v3637
    %v3662 = vsel %vm3577, %v3661, %v3637
    %v3663 = vsel %vm3576, %v3047, %v3660
    %v3664 = vsel %vm3576, 0, %v3662
    %v3665 = vcosq.f32.pop %v3663
    %v3666 = vsinq.f32.pop %v3663
    %vm3667 = vweird.f32 %v3047
    %v3668 = vadd.s32 %v3664, 3
    %v3669 = vand.u32 %v3668, 3
    %vm3670 = vcmp.lt.s32.totalorder %v3669, 2
    %vm3671 = vcmp.eq.s32.totalorder %v3669, 0
    %v3672 = vxor.u32 %v3666, 2147483648
    %v3673 = vsel %vm3671, %v3665, %v3672
    %vm3674 = vcmp.eq.s32.totalorder %v3669, 2
    %v3675 = vxor.u32 %v3665, 2147483648
    %v3676 = vsel %vm3674, %v3675, %v3666
    %v3677 = vsel %vm3670, %v3673, %v3676
    %v3678 = vsel %vm3667, nan, %v3677
    %v3679 = vand.u32 2147483647, %v3051
    %vm3680 = vcmp.le.f32.partialorder %v3679, 0.7853982
    %vm3681 = vcmp.lt.s32.totalorder %v3051, 0
    %v3682 = vand.u32 %v3051, 2139095040
    %v3683 = vshrl.u32 %v3682, 23
    %v3684 = vsub.s32 %v3683, 127
    %v3685 = vand.u32 2147483647, %v3051
    %v3686 = vand.u32 %v3685, 8388607
    %v3687 = vor.u32 %v3686, 8388608
    %v3688 = vsub.s32 0, %v3687
    %v3689 = vadd.s32 %v3684, 1
    %vm3690 = vcmp.gt.s32.totalorder %v3689, 0
    %v3691 = vsel %vm3690, %v3689, 0
    %v3692 = vshrl.u32 %v3691, 5
    %v3693 = vand.u32 %v3691, 31
    %v3694 = vsub.s32 32, %v3693
    %v3695 = vshrl.u32 683565275, %v3694
    %v3696 = vshll.u32 683565275, %v3693
    %v3697 = vshrl.u32 2475754826, %v3694
    %v3698 = vor.u32 %v3696, %v3697
    %v3699 = vshll.u32 2475754826, %v3693
    %v3700 = vshrl.u32 2131351028, %v3694
    %v3701 = vor.u32 %v3699, %v3700
    %v3702 = vshll.u32 2131351028, %v3693
    %v3703 = vshrl.u32 2102212464, %v3694
    %v3704 = vor.u32 %v3702, %v3703
    %v3705 = vshll.u32 2102212464, %v3693
    %v3706 = vshrl.u32 920167782, %v3694
    %v3707 = vor.u32 %v3705, %v3706
    %v3708 = vshll.u32 920167782, %v3693
    %v3709 = vshrl.u32 1326507024, %v3694
    %v3710 = vor.u32 %v3708, %v3709
    %vm3711 = vcmp.lt.s32.totalorder %v3692, 1
    %vm3712 = vcmp.lt.s32.totalorder %v3692, 2
    %vm3713 = vcmp.lt.s32.totalorder %v3692, 3
    %vm3714 = vcmp.lt.s32.totalorder %v3692, 4
    %v3715 = vsel %vm3711, %v3695, %v3698
    %v3716 = vsel %vm3714, %v3704, 2102212464
    %v3717 = vsel %vm3713, %v3701, %v3716
    %v3718 = vsel %vm3712, %v3715, %v3717
    %v3719 = vsel %vm3711, %v3698, %v3701
    %v3720 = vsel %vm3714, %v3707, 920167782
    %v3721 = vsel %vm3713, %v3704, %v3720
    %v3722 = vsel %vm3712, %v3719, %v3721
    %v3723 = vsel %vm3711, %v3701, %v3704
    %v3724 = vsel %vm3714, %v3710, 1326507024
    %v3725 = vsel %vm3713, %v3707, %v3724
    %v3726 = vsel %vm3712, %v3723, %v3725
    %v3727 = vshll.u32 %v3687, 8
    %v3728 = vmul.u32.u64.compose %v3727, %v3726
    %v3729 = vextract.low.u32 %v3728
    %v3730 = vextract.high.u32 %v3728
    %v3731 = vmul.u32.u64.compose %v3727, %v3722
    %v3732 = vextract.low.u32 %v3731
    %v3733 = vextract.high.u32 %v3731
    %v3734 = vmul.u32 %v3727, %v3718
    %v3735 = vadd.s32 %v3730, %v3732
    %vm3736 = vc.u32 %v3730, %v3732
    %v3737 = vadd.s32 %v3733, 1
    %v3738 = vsel %vm3736, %v3737, %v3733
    %v3739 = vadd.s32 %v3734, %v3738
    %v3740 = vadd.s32 %v3739, 536870912
    %v3741 = vshrl.u32 %v3740, 30
    %v3742 = vshll.u32 %v3741, 30
    %v3743 = vsub.s32 %v3739, %v3742
    %vm3744 = vcmp.lt.s32.totalorder %v3743, 0
    %v3745 = vsub.s32 0, %v3743
    %v3746 = vsel %vm3744, %v3745, %v3743
    %v3747 = vclz %v3746
    %v3748 = vsub.s32 %v3747, 2
    %vm3749 = vcmp.gt.s32.totalorder 0, %v3748
    %v3750 = vsel %vm3749, 0, %v3748
    %v3751 = vsub.s32 32, %v3750
    %v3752 = vshll.u32 %v3743, %v3750
    %v3753 = vshrl.u32 %v3735, %v3751
    %v3754 = vor.u32 %v3752, %v3753
    %v3755 = vsub.s32 4294967266, %v3750
    %v3756 = vadd.s32 %v3755, 127
    %v3757 = vshll.u32 %v3756, 23
    %v3758 = vor.u32 4788187, %v3757
    %v3759 = vand.u32 2147483647, %v3758
    %v3761 = vcvt.s32.f32 %v3754
    %v3762 = vmul.f32 %v3761, %v3759
    %v3763 = vxor.u32 %v3762, 2147483648
    %v3764 = vsel %vm3681, %v3763, %v3762
    %v3765 = vsub.s32 4, %v3741
    %v3766 = vsel %vm3681, %v3765, %v3741
    %v3767 = vsel %vm3680, %v3051, %v3764
    %v3768 = vsel %vm3680, 0, %v3766
    %v3769 = vcosq.f32.pop %v3767
    %v3770 = vsinq.f32.pop %v3767
    %vm3771 = vweird.f32 %v3051
    %v3772 = vadd.s32 %v3768, 3
    %v3773 = vand.u32 %v3772, 3
    %vm3774 = vcmp.lt.s32.totalorder %v3773, 2
    %vm3775 = vcmp.eq.s32.totalorder %v3773, 0
    %v3776 = vxor.u32 %v3770, 2147483648
    %v3777 = vsel %vm3775, %v3769, %v3776
    %vm3778 = vcmp.eq.s32.totalorder %v3773, 2
    %v3779 = vxor.u32 %v3769, 2147483648
    %v3780 = vsel %vm3778, %v3779, %v3770
    %v3781 = vsel %vm3774, %v3777, %v3780
    %v3782 = vsel %vm3771, nan, %v3781
    %v3783 = vand.u32 2147483647, %v3053
    %vm3784 = vcmp.le.f32.partialorder %v3783, 0.7853982
    %vm3785 = vcmp.lt.s32.totalorder %v3053, 0
    %v3786 = vand.u32 %v3053, 2139095040
    %v3787 = vshrl.u32 %v3786, 23
    %v3788 = vsub.s32 %v3787, 127
    %v3789 = vand.u32 2147483647, %v3053
    %v3790 = vand.u32 %v3789, 8388607
    %v3791 = vor.u32 %v3790, 8388608
    %v3792 = vsub.s32 0, %v3791
    %v3793 = vadd.s32 %v3788, 1
    %vm3794 = vcmp.gt.s32.totalorder %v3793, 0
    %v3795 = vsel %vm3794, %v3793, 0
    %v3796 = vshrl.u32 %v3795, 5
    %v3797 = vand.u32 %v3795, 31
    %v3798 = vsub.s32 32, %v3797
    %v3799 = vshrl.u32 683565275, %v3798
    %v3800 = vshll.u32 683565275, %v3797
    %v3801 = vshrl.u32 2475754826, %v3798
    %v3802 = vor.u32 %v3800, %v3801
    %v3803 = vshll.u32 2475754826, %v3797
    %v3804 = vshrl.u32 2131351028, %v3798
    %v3805 = vor.u32 %v3803, %v3804
    %v3806 = vshll.u32 2131351028, %v3797
    %v3807 = vshrl.u32 2102212464, %v3798
    %v3808 = vor.u32 %v3806, %v3807
    %v3809 = vshll.u32 2102212464, %v3797
    %v3810 = vshrl.u32 920167782, %v3798
    %v3811 = vor.u32 %v3809, %v3810
    %v3812 = vshll.u32 920167782, %v3797
    %v3813 = vshrl.u32 1326507024, %v3798
    %v3814 = vor.u32 %v3812, %v3813
    %vm3815 = vcmp.lt.s32.totalorder %v3796, 1
    %vm3816 = vcmp.lt.s32.totalorder %v3796, 2
    %vm3817 = vcmp.lt.s32.totalorder %v3796, 3
    %vm3818 = vcmp.lt.s32.totalorder %v3796, 4
    %v3819 = vsel %vm3815, %v3799, %v3802
    %v3820 = vsel %vm3818, %v3808, 2102212464
    %v3821 = vsel %vm3817, %v3805, %v3820
    %v3822 = vsel %vm3816, %v3819, %v3821
    %v3823 = vsel %vm3815, %v3802, %v3805
    %v3824 = vsel %vm3818, %v3811, 920167782
    %v3825 = vsel %vm3817, %v3808, %v3824
    %v3826 = vsel %vm3816, %v3823, %v3825
    %v3827 = vsel %vm3815, %v3805, %v3808
    %v3828 = vsel %vm3818, %v3814, 1326507024
    %v3829 = vsel %vm3817, %v3811, %v3828
    %v3830 = vsel %vm3816, %v3827, %v3829
    %v3831 = vshll.u32 %v3791, 8
    %v3832 = vmul.u32.u64.compose %v3831, %v3830
    %v3833 = vextract.low.u32 %v3832
    %v3834 = vextract.high.u32 %v3832
    %v3835 = vmul.u32.u64.compose %v3831, %v3826
    %v3836 = vextract.low.u32 %v3835
    %v3837 = vextract.high.u32 %v3835
    %v3838 = vmul.u32 %v3831, %v3822
    %v3839 = vadd.s32 %v3834, %v3836
    %vm3840 = vc.u32 %v3834, %v3836
    %v3841 = vadd.s32 %v3837, 1
    %v3842 = vsel %vm3840, %v3841, %v3837
    %v3843 = vadd.s32 %v3838, %v3842
    %v3844 = vadd.s32 %v3843, 536870912
    %v3845 = vshrl.u32 %v3844, 30
    %v3846 = vshll.u32 %v3845, 30
    %v3847 = vsub.s32 %v3843, %v3846
    %vm3848 = vcmp.lt.s32.totalorder %v3847, 0
    %v3849 = vsub.s32 0, %v3847
    %v3850 = vsel %vm3848, %v3849, %v3847
    %v3851 = vclz %v3850
    %v3852 = vsub.s32 %v3851, 2
    %vm3853 = vcmp.gt.s32.totalorder 0, %v3852
    %v3854 = vsel %vm3853, 0, %v3852
    %v3855 = vsub.s32 32, %v3854
    %v3856 = vshll.u32 %v3847, %v3854
    %v3857 = vshrl.u32 %v3839, %v3855
    %v3858 = vor.u32 %v3856, %v3857
    %v3859 = vsub.s32 4294967266, %v3854
    %v3860 = vadd.s32 %v3859, 127
    %v3861 = vshll.u32 %v3860, 23
    %v3862 = vor.u32 4788187, %v3861
    %v3863 = vand.u32 2147483647, %v3862
    %v3865 = vcvt.s32.f32 %v3858
    %v3866 = vmul.f32 %v3865, %v3863
    %v3867 = vxor.u32 %v3866, 2147483648
    %v3868 = vsel %vm3785, %v3867, %v3866
    %v3869 = vsub.s32 4, %v3845
    %v3870 = vsel %vm3785, %v3869, %v3845
    %v3871 = vsel %vm3784, %v3053, %v3868
    %v3872 = vsel %vm3784, 0, %v3870
    %v3873 = vcosq.f32.pop %v3871
    %v3874 = vsinq.f32.pop %v3871
    %vm3875 = vweird.f32 %v3053
    %v3876 = vadd.s32 %v3872, 3
    %v3877 = vand.u32 %v3876, 3
    %vm3878 = vcmp.lt.s32.totalorder %v3877, 2
    %vm3879 = vcmp.eq.s32.totalorder %v3877, 0
    %v3880 = vxor.u32 %v3874, 2147483648
    %v3881 = vsel %vm3879, %v3873, %v3880
    %vm3882 = vcmp.eq.s32.totalorder %v3877, 2
    %v3883 = vxor.u32 %v3873, 2147483648
    %v3884 = vsel %vm3882, %v3883, %v3874
    %v3885 = vsel %vm3878, %v3881, %v3884
    %v3886 = vsel %vm3875, nan, %v3885
    %v3887 = vadd.f32 %v3158, %v1953
    %v3888 = vadd.f32 %v3262, %v1954
    %v3889 = vadd.f32 %v3366, %v1955
    %v3890 = vadd.f32 %v3470, %v1956
    %v3891 = vadd.f32 %v3574, %v1957
    %v3892 = vadd.f32 %v3678, %v1958
    %v3893 = vadd.f32 %v3782, %v1959
    %v3894 = vadd.f32 %v3886, %v1960
    %v3895 = vld [vmem:[%s3] sm:$0xff]
    %v3896 = vld [vmem:[%s4] sm:$0xff]
    %3898 = vset.pattern.permute.xlu0 0
    %3899 = vperm.xlu0 %3898, %v3896
    %v3900 = vpop.permute.xlu0 %3899
    %v3903 = vsel %vm66, %v3895, 0
    %3905 = vmatprep.subr.mxu0 0.0
    %3906 = vmatpush1.msra.mxu0 0.0
    %3907 = vmatprep.subr.mxu0 0.0
    %3908 = vmatpush1.msra.mxu0 0.0
    %3909 = vmatprep.subr.mxu0 0.0
    %3910 = vmatpush1.msra.mxu0 0.0
    %3911 = vmatprep.subr.mxu0 0.0
    %3912 = vmatpush1.msra.mxu0 0.0
    %3913 = vmatprep.subr.mxu0 0.0
    %3914 = vmatpush1.msra.mxu0 0.0
    %3915 = vmatprep.subr.mxu0 0.0
    %3916 = vmatpush1.msra.mxu0 0.0
    %3917 = vmatprep.subr.mxu0 0.0
    %3918 = vmatpush1.msra.mxu0 0.0
    %3919 = vmatprep.subr.mxu0 0.0
    %3920 = vmatpush1.msra.mxu0 0.0
    %3921 = vmatprep.subr.mxu0 0.0
    %3922 = vmatpush1.msra.mxu0 0.0
    %3923 = vmatprep.subr.mxu0 0.0
    %3924 = vmatpush1.msra.mxu0 0.0
    %3925 = vmatprep.subr.mxu0 0.0
    %3926 = vmatpush1.msra.mxu0 0.0
    %3927 = vmatprep.subr.mxu0 0.0
    %3928 = vmatpush1.msra.mxu0 0.0
    %3929 = vmatprep.subr.mxu0 %v3894
    %3930 = vmatpush1.msra.mxu0 %v3893
    %3931 = vmatprep.subr.mxu0 %v3892
    %3932 = vmatpush1.msra.mxu0 %v3891
    %3933 = vmatprep.subr.mxu0 %v3890
    %3934 = vmatpush1.msra.mxu0 %v3889
    %3935 = vmatprep.subr.mxu0 %v3888
    %3936 = vmatpush1.msra.mxu0 %v3887
    %3937 = vmatprep.subr.mxu0 0.0
    %3938 = vmatpush2.msra.mxu0 0.0
    %3939 = vmatprep.subr.mxu0 0.0
    %3940 = vmatpush2.msra.mxu0 0.0
    %3941 = vmatprep.subr.mxu0 0.0
    %3942 = vmatpush2.msra.mxu0 0.0
    %3943 = vmatprep.subr.mxu0 0.0
    %3944 = vmatpush2.msra.mxu0 0.0
    %3945 = vmatprep.subr.mxu0 0.0
    %3946 = vmatpush2.msra.mxu0 0.0
    %3947 = vmatprep.subr.mxu0 0.0
    %3948 = vmatpush2.msra.mxu0 0.0
    %3949 = vmatprep.subr.mxu0 0.0
    %3950 = vmatpush2.msra.mxu0 0.0
    %3951 = vmatprep.subr.mxu0 0.0
    %3952 = vmatpush2.msra.mxu0 0.0
    %3953 = vmatprep.subr.mxu0 0.0
    %3954 = vmatpush2.msra.mxu0 0.0
    %3955 = vmatprep.subr.mxu0 0.0
    %3956 = vmatpush2.msra.mxu0 0.0
    %3957 = vmatprep.subr.mxu0 0.0
    %3958 = vmatpush2.msra.mxu0 0.0
    %3959 = vmatprep.subr.mxu0 0.0
    %3960 = vmatpush2.msra.mxu0 0.0
    %3961 = vmatprep.subr.mxu0 0.0
    %3962 = vmatpush2.msra.mxu0 0.0
    %3963 = vmatprep.subr.mxu0 0.0
    %3964 = vmatpush2.msra.mxu0 0.0
    %3965 = vmatprep.subr.mxu0 0.0
    %3966 = vmatpush2.msra.mxu0 0.0
    %3967 = vmatprep.subr.mxu0 0.0
    %3968 = vmatpush2.msra.mxu0 0.0
    %3969 = vmatprep.mubr.f32.mxu0 0.0
    %3970 = vmatmul.mubr.f32.gmra.mxu0 %v3903
    %v3971 = vpop.f32.mrf.mxu0
    %v3972 = vadd.f32 %v3900, %v3971
    %v3973 = vpop.f32.mrf.mxu0
    %v3974 = vadd.f32 %v3900, %v3973
    %3975 = vdwg.mxu0
    %3976 = vst [vmem:[#allocation2] sm:$0xff] %v3972
    %3977 = vst [vmem:[#allocation2 + $0x8] sm:$0xff] %v3974
    // Predicated region
    $region22: #{tpu_custom_call.1} parent=1 // pred_check
      _
    $region23: #{tpu_custom_call.1} parent=1 // pred_check_branch
      %3979 = sbr.rel (0) target = $region25
    $region24: #{tpu_custom_call.1} parent=1 // pred_region
      %s3981 = ssub.s32 256, 256
      %3982 = vsyncadd [#allocation3], %s3981
      %s3984 = sshll.u32 [#allocation2], 4
      %s3985 = int_to_ptr.vmem [resolvable:$true] %s3984
      %3987 = dma.vmem_to_hbm [thread:$0]  %s3985, 256, %s5, [#allocation3]
    $region25: #{tpu_custom_call.1} parent=1 // pred_fallthru
      _
    // Predicated region
    $region26: #{tpu_custom_call.1} parent=1 // pred_check
      _
    $region27: #{tpu_custom_call.1} parent=1 // pred_check_branch
      %3989 = sbr.rel (0) target = $region29
    $region28: #{tpu_custom_call.1} parent=1 // pred_region
      %3990 = dma.done [#allocation3], 256
    $region29: #{tpu_custom_call.1} parent=1 // pred_fallthru
      _
    %3991 = vsyncpa [#allocation3], 1

</llo_original>
